<compile_context>
chip_gen: v7x
topology: tpu7x:2x2x1
jax: 0.10.0
libtpu: 0.0.40
codegen_flags: <defaults>
</compile_context>

<pallas_src>
import functools

import numpy as np
import jax
import jax.numpy as jnp
from jax.experimental import pallas as pl
from jax.experimental.pallas import tpu as pltpu


def _cnn_kernel(col1_ref, w1_ref, b1_ref, s_ref, m2_ref, w2_ref, b2_ref,
                o_ref, col2_ref, *, C1, C2, K, W, W2, L1, L2):
    P = K // 2

    # ---- conv11: ONE MXU matmul over the full K*K*Cin contraction ------------
    a1 = jnp.dot(w1_ref[...], col1_ref[...],
                 preferred_element_type=jnp.float32)              # (C1, L1)
    a1 = jnp.maximum(a1 + b1_ref[...], 0.0)                       # bias + ReLU11

    # ---- pool1: MaxPool2d(2,2) = roll+max (XLU) + one-hot compaction (MXU) ---
    m = jnp.maximum(a1, pltpu.roll(a1, shift=L1 - 1, axis=1))     # right neighbour
    m = jnp.maximum(m, pltpu.roll(m, shift=L1 - W, axis=1))       # row below
    pooled = jnp.dot(m, s_ref[...],
                     preferred_element_type=jnp.float32)          # (C1, L2)

    # ---- conv22: build im2col slab in VMEM scratch, then ONE matmul ----------
    for kh in range(K):
        dy = kh - P
        for kw in range(K):
            dx = kw - P
            t = kh * K + kw
            sh = (-(dy * W2 + dx)) % L2
            shifted = pltpu.roll(pooled, shift=sh, axis=1) if sh != 0 else pooled
            col2_ref[pl.ds(t * C1, C1), :] = shifted * m2_ref[pl.ds(t, 1), :]

    acc2 = jnp.dot(w2_ref[...], col2_ref[...],
                   preferred_element_type=jnp.float32)            # (C2, L2)
    o_ref[...] = jnp.maximum(acc2 + b2_ref[...], 0.0)             # bias + ReLU22


def _pad_masks(nb, H, W, K):
    """(K*K, nb*H*W) f32: 1 where a tap reads a real pixel, 0 where it reads padding."""
    P = K // 2
    h = np.arange(H)
    w = np.arange(W)
    out = np.zeros((K * K, nb, H, W), np.float32)
    for kh in range(K):
        for kw in range(K):
            mh = ((h + kh - P >= 0) & (h + kh - P < H)).astype(np.float32)
            mw = ((w + kw - P >= 0) & (w + kw - P < W)).astype(np.float32)
            out[kh * K + kw] = mh[:, None] * mw[None, :]
    return jnp.asarray(out.reshape(K * K, nb * H * W))


def _pool_selector(nb, H, W):
    """(nb*H*W, nb*(H//2)*(W//2)) one-hot: top-left corner of every 2x2 pool window."""
    H2, W2 = H // 2, W // 2
    S = np.zeros((nb * H * W, nb * H2 * W2), np.float32)
    for n in range(nb):
        for oh in range(H2):
            for ow in range(W2):
                S[n * H * W + 2 * oh * W + 2 * ow,
                  n * H2 * W2 + oh * W2 + ow] = 1.0
    return jnp.asarray(S)


def _pick_batch_tile(N, H2, W2, max_lanes=8192):
    """Smallest batch tile whose pooled lane width is a multiple of 128 (VMEM-capped)."""
    for nb in range(1, N + 1):
        if N % nb == 0 and (nb * H2 * W2) % 128 == 0 and nb * 4 * H2 * W2 <= max_lanes:
            return nb
    return N


@jax.jit
def cifar10_cnn_forward(x, w1, b1, w2, b2):
    """x: (N, Cin, H, W); w1: (C1, Cin, 5, 5); b1: (C1,); w2: (C2, C1, 5, 5); b2: (C2,)."""
    N, Cin, H, W = x.shape
    C1, _, K, _ = w1.shape
    C2 = w2.shape[0]
    P = K // 2
    assert H % 2 == 0 and W % 2 == 0, "floor-mode MaxPool2d(2,2) path assumes even H, W"
    H2, W2 = H // 2, W // 2

    nb = _pick_batch_tile(N, H2, W2)
    n_tiles = N // nb
    L1t, L2t = nb * H * W, nb * H2 * W2

    f32 = jnp.float32
    x32 = x.astype(f32)

    # conv11 im2col slab (true zero padding), built once in the wrapper.
    xpad = jnp.pad(x32, ((0, 0), (0, 0), (P, P), (P, P)))
    taps = [xpad[:, :, kh:kh + H, kw:kw + W] for kh in range(K) for kw in range(K)]
    col1 = jnp.stack(taps, axis=2)                                   # (N, Cin, K*K, H, W)
    col1 = col1.transpose(1, 2, 0, 3, 4).reshape(Cin * K * K, N * H * W)

    w1_mat = w1.astype(f32).reshape(C1, Cin * K * K)                 # lane-dense (C1, 100)
    w2_mat = w2.astype(f32).transpose(0, 2, 3, 1).reshape(C2, K * K * C1)
    b1_col = b1.astype(f32).reshape(C1, 1)
    b2_col = b2.astype(f32).reshape(C2, 1)
    sel = _pool_selector(nb, H, W)                                   # per batch tile
    m2 = _pad_masks(nb, H2, W2, K)                                   # per batch tile

    kernel = functools.partial(_cnn_kernel, C1=C1, C2=C2, K=K, W=W, W2=W2,
                               L1=L1t, L2=L2t)

    out_slab = pl.pallas_call(
        kernel,
        out_shape=jax.ShapeDtypeStruct((C2, N * H2 * W2), f32),
        grid=(n_tiles,),
        in_specs=[
            pl.BlockSpec((Cin * K * K, L1t), lambda i: (0, i)),      # im2col of x (tiled)
            pl.BlockSpec((C1, Cin * K * K), lambda i: (0, 0)),       # w1 (resident)
            pl.BlockSpec((C1, 1), lambda i: (0, 0)),                 # b1
            pl.BlockSpec((L1t, L2t), lambda i: (0, 0)),              # pool selector
            pl.BlockSpec((K * K, L2t), lambda i: (0, 0)),            # conv2 pad masks
            pl.BlockSpec((C2, K * K * C1), lambda i: (0, 0)),        # w2 (resident)
            pl.BlockSpec((C2, 1), lambda i: (0, 0)),                 # b2
        ],
        out_specs=pl.BlockSpec((C2, L2t), lambda i: (0, i)),
        scratch_shapes=[pltpu.VMEM((K * K * C1, L2t), f32)],         # conv2 im2col slab
        compiler_params=pltpu.CompilerParams(
            dimension_semantics=("parallel",)),
    )(col1, w1_mat, b1_col, sel, m2, w2_mat, b2_col)

    # lane-dense (C2, N*H2*W2) slab -> NCHW (layout plumbing in the wrapper)
    return out_slab.reshape(C2, N, H2, W2).transpose(1, 0, 2, 3)


if __name__ == "__main__":
    key = jax.random.PRNGKey(0)
    kx, kw1, kb1, kw2, kb2 = jax.random.split(key, 5)

    # Small shapes consistent with the module: NChannels=4, 16x16 input, batch=2;
    # conv channel counts (64, 128) are fixed by the module definition.
    N, Cin, H, W = 2, 4, 16, 16
    C1, C2, K = 64, 128, 5

    x = jax.random.normal(kx, (N, Cin, H, W), jnp.float32)
    bnd1 = 1.0 / (Cin * K * K) ** 0.5
    w1 = jax.random.uniform(kw1, (C1, Cin, K, K), jnp.float32, -bnd1, bnd1)
    b1 = jax.random.uniform(kb1, (C1,), jnp.float32, -bnd1, bnd1)
    bnd2 = 1.0 / (C1 * K * K) ** 0.5
    w2 = jax.random.uniform(kw2, (C2, C1, K, K), jnp.float32, -bnd2, bnd2)
    b2 = jax.random.uniform(kb2, (C2,), jnp.float32, -bnd2, bnd2)

    out = jax.block_until_ready(cifar10_cnn_forward(x, w1, b1, w2, b2))

    # Pure-JAX reference: conv(pad=2) -> ReLU -> MaxPool(2,2) -> conv(pad=2) -> ReLU.
    dn = ("NCHW", "OIHW", "NCHW")
    hp = jax.lax.Precision.HIGHEST
    c1 = jax.lax.conv_general_dilated(x, w1, (1, 1), ((2, 2), (2, 2)),
                                      dimension_numbers=dn, precision=hp)
    r1 = jnp.maximum(c1 + b1.reshape(1, C1, 1, 1), 0.0)
    p1 = jax.lax.reduce_window(r1, -jnp.inf, jax.lax.max,
                               (1, 1, 2, 2), (1, 1, 2, 2), "VALID")
    c2 = jax.lax.conv_general_dilated(p1, w2, (1, 1), ((2, 2), (2, 2)),
                                      dimension_numbers=dn, precision=hp)
    ref = jnp.maximum(c2 + b2.reshape(1, C2, 1, 1), 0.0)

    assert out.shape == ref.shape == (N, C2, H // 2, W // 2)
    err = float(jnp.max(jnp.abs(out - ref)))
    # Tolerance covers possible reduced-precision MXU passes for f32 operands.
    assert err < 2e-2, f"max abs error {err}"
    print("KERNEL_OK")
</pallas_src>

<mosaic_0001>
module attributes {stable_mosaic.version = 11 : i64} {
  func.func @_cnn_kernel(%arg0: i32, %arg1: memref<100x512xf32, #tpu.memory_space<vmem>>, %arg2: memref<64x100xf32, #tpu.memory_space<vmem>>, %arg3: memref<64x1xf32, #tpu.memory_space<vmem>>, %arg4: memref<512x128xf32, #tpu.memory_space<vmem>>, %arg5: memref<25x128xf32, #tpu.memory_space<vmem>>, %arg6: memref<128x1600xf32, #tpu.memory_space<vmem>>, %arg7: memref<128x1xf32, #tpu.memory_space<vmem>>, %arg8: memref<128x128xf32, #tpu.memory_space<vmem>>, %arg9: memref<1600x128xf32, #tpu.memory_space<vmem>>) attributes {dimension_semantics = [#tpu.dimension_semantics<parallel>], iteration_bounds = array<i64: 1>, scalar_prefetch = 0 : i64, scratch_operands = 1 : i64, tpu.core_type = #tpu.core_type<tc>, window_params = [{transform_indices = @transform_0, window_bounds = array<i64: 100, 512>}, {pipeline_mode = #tpu.pipeline_mode<synchronous>, transform_indices = @transform_1, window_bounds = array<i64: 64, 100>}, {pipeline_mode = #tpu.pipeline_mode<synchronous>, transform_indices = @transform_2, window_bounds = array<i64: 64, 1>}, {pipeline_mode = #tpu.pipeline_mode<synchronous>, transform_indices = @transform_3, window_bounds = array<i64: 512, 128>}, {pipeline_mode = #tpu.pipeline_mode<synchronous>, transform_indices = @transform_4, window_bounds = array<i64: 25, 128>}, {pipeline_mode = #tpu.pipeline_mode<synchronous>, transform_indices = @transform_5, window_bounds = array<i64: 128, 1600>}, {pipeline_mode = #tpu.pipeline_mode<synchronous>, transform_indices = @transform_6, window_bounds = array<i64: 128, 1>}, {transform_indices = @transform_7, window_bounds = array<i64: 128, 128>}]} {
    %c0 = arith.constant 0 : index
    %c0_0 = arith.constant 0 : index
    %0 = vector.load %arg2[%c0, %c0_0] : memref<64x100xf32, #tpu.memory_space<vmem>>, vector<64x100xf32>
    %c0_1 = arith.constant 0 : index
    %c0_2 = arith.constant 0 : index
    %1 = vector.load %arg1[%c0_1, %c0_2] : memref<100x512xf32, #tpu.memory_space<vmem>>, vector<100x512xf32>
    %cst = arith.constant dense<0.000000e+00> : vector<64x512xf32>
    %2 = tpu.matmul %0, %1, %cst {dimension_numbers = #tpu.dot_dimension_numbers<[1], [0], [0], [1], [0, 0, 1, 1], [], []>} : vector<64x100xf32>, vector<100x512xf32>, vector<64x512xf32> -> vector<64x512xf32>
    %c0_3 = arith.constant 0 : index
    %c0_4 = arith.constant 0 : index
    %3 = vector.load %arg3[%c0_3, %c0_4] : memref<64x1xf32, #tpu.memory_space<vmem>>, vector<64x1xf32>
    %4 = vector.broadcast %3 : vector<64x1xf32> to vector<64x512xf32>
    %5 = arith.addf %2, %4 : vector<64x512xf32>
    %cst_5 = arith.constant 0.000000e+00 : f32
    %6 = vector.broadcast %cst_5 : f32 to vector<64x512xf32>
    %7 = arith.maximumf %5, %6 : vector<64x512xf32>
    %c511_i32 = arith.constant 511 : i32
    %8 = tpu.dynamic_rotate %7 by %c511_i32 dim 1 : vector<64x512xf32>, i32 -> vector<64x512xf32>
    %9 = arith.maximumf %7, %8 : vector<64x512xf32>
    %c496_i32 = arith.constant 496 : i32
    %10 = tpu.dynamic_rotate %9 by %c496_i32 dim 1 : vector<64x512xf32>, i32 -> vector<64x512xf32>
    %11 = arith.maximumf %9, %10 : vector<64x512xf32>
    %c0_6 = arith.constant 0 : index
    %c0_7 = arith.constant 0 : index
    %12 = vector.load %arg4[%c0_6, %c0_7] : memref<512x128xf32, #tpu.memory_space<vmem>>, vector<512x128xf32>
    %cst_8 = arith.constant dense<0.000000e+00> : vector<64x128xf32>
    %13 = tpu.matmul %11, %12, %cst_8 {dimension_numbers = #tpu.dot_dimension_numbers<[1], [0], [0], [1], [0, 0, 1, 1], [], []>} : vector<64x512xf32>, vector<512x128xf32>, vector<64x128xf32> -> vector<64x128xf32>
    %c18_i32 = arith.constant 18 : i32
    %14 = tpu.dynamic_rotate %13 by %c18_i32 dim 1 : vector<64x128xf32>, i32 -> vector<64x128xf32>
    %c0_9 = arith.constant 0 : index
    %c0_10 = arith.constant 0 : index
    %15 = vector.load %arg5[%c0_9, %c0_10] : memref<25x128xf32, #tpu.memory_space<vmem>>, vector<1x128xf32>
    %16 = vector.broadcast %15 : vector<1x128xf32> to vector<64x128xf32>
    %17 = arith.mulf %14, %16 : vector<64x128xf32>
    %c0_11 = arith.constant 0 : index
    %c0_12 = arith.constant 0 : index
    %18 = vector.load %arg9[%c0_11, %c0_12] : memref<1600x128xf32, #tpu.memory_space<vmem>>, vector<64x128xf32>
    tpu.vector_store %arg9[%c0_11, %c0_12], %17 {strides = array<i32>} : memref<1600x128xf32, #tpu.memory_space<vmem>>, vector<64x128xf32>,
    %c17_i32 = arith.constant 17 : i32
    %19 = tpu.dynamic_rotate %13 by %c17_i32 dim 1 : vector<64x128xf32>, i32 -> vector<64x128xf32>
    %c1 = arith.constant 1 : index
    %c0_13 = arith.constant 0 : index
    %20 = vector.load %arg5[%c1, %c0_13] : memref<25x128xf32, #tpu.memory_space<vmem>>, vector<1x128xf32>
    %21 = vector.broadcast %20 : vector<1x128xf32> to vector<64x128xf32>
    %22 = arith.mulf %19, %21 : vector<64x128xf32>
    %c64 = arith.constant 64 : index
    %c0_14 = arith.constant 0 : index
    %23 = vector.load %arg9[%c64, %c0_14] : memref<1600x128xf32, #tpu.memory_space<vmem>>, vector<64x128xf32>
    tpu.vector_store %arg9[%c64, %c0_14], %22 {strides = array<i32>} : memref<1600x128xf32, #tpu.memory_space<vmem>>, vector<64x128xf32>,
    %c16_i32 = arith.constant 16 : i32
    %24 = tpu.dynamic_rotate %13 by %c16_i32 dim 1 : vector<64x128xf32>, i32 -> vector<64x128xf32>
    %c2 = arith.constant 2 : index
    %c0_15 = arith.constant 0 : index
    %25 = vector.load %arg5[%c2, %c0_15] : memref<25x128xf32, #tpu.memory_space<vmem>>, vector<1x128xf32>
    %26 = vector.broadcast %25 : vector<1x128xf32> to vector<64x128xf32>
    %27 = arith.mulf %24, %26 : vector<64x128xf32>
    %c128 = arith.constant 128 : index
    %c0_16 = arith.constant 0 : index
    %28 = vector.load %arg9[%c128, %c0_16] : memref<1600x128xf32, #tpu.memory_space<vmem>>, vector<64x128xf32>
    tpu.vector_store %arg9[%c128, %c0_16], %27 {strides = array<i32>} : memref<1600x128xf32, #tpu.memory_space<vmem>>, vector<64x128xf32>,
    %c15_i32 = arith.constant 15 : i32
    %29 = tpu.dynamic_rotate %13 by %c15_i32 dim 1 : vector<64x128xf32>, i32 -> vector<64x128xf32>
    %c3 = arith.constant 3 : index
    %c0_17 = arith.constant 0 : index
    %30 = vector.load %arg5[%c3, %c0_17] : memref<25x128xf32, #tpu.memory_space<vmem>>, vector<1x128xf32>
    %31 = vector.broadcast %30 : vector<1x128xf32> to vector<64x128xf32>
    %32 = arith.mulf %29, %31 : vector<64x128xf32>
    %c192 = arith.constant 192 : index
    %c0_18 = arith.constant 0 : index
    %33 = vector.load %arg9[%c192, %c0_18] : memref<1600x128xf32, #tpu.memory_space<vmem>>, vector<64x128xf32>
    tpu.vector_store %arg9[%c192, %c0_18], %32 {strides = array<i32>} : memref<1600x128xf32, #tpu.memory_space<vmem>>, vector<64x128xf32>,
    %c14_i32 = arith.constant 14 : i32
    %34 = tpu.dynamic_rotate %13 by %c14_i32 dim 1 : vector<64x128xf32>, i32 -> vector<64x128xf32>
    %c4 = arith.constant 4 : index
    %c0_19 = arith.constant 0 : index
    %35 = vector.load %arg5[%c4, %c0_19] : memref<25x128xf32, #tpu.memory_space<vmem>>, vector<1x128xf32>
    %36 = vector.broadcast %35 : vector<1x128xf32> to vector<64x128xf32>
    %37 = arith.mulf %34, %36 : vector<64x128xf32>
    %c256 = arith.constant 256 : index
    %c0_20 = arith.constant 0 : index
    %38 = vector.load %arg9[%c256, %c0_20] : memref<1600x128xf32, #tpu.memory_space<vmem>>, vector<64x128xf32>
    tpu.vector_store %arg9[%c256, %c0_20], %37 {strides = array<i32>} : memref<1600x128xf32, #tpu.memory_space<vmem>>, vector<64x128xf32>,
    %c10_i32 = arith.constant 10 : i32
    %39 = tpu.dynamic_rotate %13 by %c10_i32 dim 1 : vector<64x128xf32>, i32 -> vector<64x128xf32>
    %c5 = arith.constant 5 : index
    %c0_21 = arith.constant 0 : index
    %40 = vector.load %arg5[%c5, %c0_21] : memref<25x128xf32, #tpu.memory_space<vmem>>, vector<1x128xf32>
    %41 = vector.broadcast %40 : vector<1x128xf32> to vector<64x128xf32>
    %42 = arith.mulf %39, %41 : vector<64x128xf32>
    %c320 = arith.constant 320 : index
    %c0_22 = arith.constant 0 : index
    %43 = vector.load %arg9[%c320, %c0_22] : memref<1600x128xf32, #tpu.memory_space<vmem>>, vector<64x128xf32>
    tpu.vector_store %arg9[%c320, %c0_22], %42 {strides = array<i32>} : memref<1600x128xf32, #tpu.memory_space<vmem>>, vector<64x128xf32>,
    %c9_i32 = arith.constant 9 : i32
    %44 = tpu.dynamic_rotate %13 by %c9_i32 dim 1 : vector<64x128xf32>, i32 -> vector<64x128xf32>
    %c6 = arith.constant 6 : index
    %c0_23 = arith.constant 0 : index
    %45 = vector.load %arg5[%c6, %c0_23] : memref<25x128xf32, #tpu.memory_space<vmem>>, vector<1x128xf32>
    %46 = vector.broadcast %45 : vector<1x128xf32> to vector<64x128xf32>
    %47 = arith.mulf %44, %46 : vector<64x128xf32>
    %c384 = arith.constant 384 : index
    %c0_24 = arith.constant 0 : index
    %48 = vector.load %arg9[%c384, %c0_24] : memref<1600x128xf32, #tpu.memory_space<vmem>>, vector<64x128xf32>
    tpu.vector_store %arg9[%c384, %c0_24], %47 {strides = array<i32>} : memref<1600x128xf32, #tpu.memory_space<vmem>>, vector<64x128xf32>,
    %c8_i32 = arith.constant 8 : i32
    %49 = tpu.dynamic_rotate %13 by %c8_i32 dim 1 : vector<64x128xf32>, i32 -> vector<64x128xf32>
    %c7 = arith.constant 7 : index
    %c0_25 = arith.constant 0 : index
    %50 = vector.load %arg5[%c7, %c0_25] : memref<25x128xf32, #tpu.memory_space<vmem>>, vector<1x128xf32>
    %51 = vector.broadcast %50 : vector<1x128xf32> to vector<64x128xf32>
    %52 = arith.mulf %49, %51 : vector<64x128xf32>
    %c448 = arith.constant 448 : index
    %c0_26 = arith.constant 0 : index
    %53 = vector.load %arg9[%c448, %c0_26] : memref<1600x128xf32, #tpu.memory_space<vmem>>, vector<64x128xf32>
    tpu.vector_store %arg9[%c448, %c0_26], %52 {strides = array<i32>} : memref<1600x128xf32, #tpu.memory_space<vmem>>, vector<64x128xf32>,
    %c7_i32 = arith.constant 7 : i32
    %54 = tpu.dynamic_rotate %13 by %c7_i32 dim 1 : vector<64x128xf32>, i32 -> vector<64x128xf32>
    %c8 = arith.constant 8 : index
    %c0_27 = arith.constant 0 : index
    %55 = vector.load %arg5[%c8, %c0_27] : memref<25x128xf32, #tpu.memory_space<vmem>>, vector<1x128xf32>
    %56 = vector.broadcast %55 : vector<1x128xf32> to vector<64x128xf32>
    %57 = arith.mulf %54, %56 : vector<64x128xf32>
    %c512 = arith.constant 512 : index
    %c0_28 = arith.constant 0 : index
    %58 = vector.load %arg9[%c512, %c0_28] : memref<1600x128xf32, #tpu.memory_space<vmem>>, vector<64x128xf32>
    tpu.vector_store %arg9[%c512, %c0_28], %57 {strides = array<i32>} : memref<1600x128xf32, #tpu.memory_space<vmem>>, vector<64x128xf32>,
    %c6_i32 = arith.constant 6 : i32
    %59 = tpu.dynamic_rotate %13 by %c6_i32 dim 1 : vector<64x128xf32>, i32 -> vector<64x128xf32>
    %c9 = arith.constant 9 : index
    %c0_29 = arith.constant 0 : index
    %60 = vector.load %arg5[%c9, %c0_29] : memref<25x128xf32, #tpu.memory_space<vmem>>, vector<1x128xf32>
    %61 = vector.broadcast %60 : vector<1x128xf32> to vector<64x128xf32>
    %62 = arith.mulf %59, %61 : vector<64x128xf32>
    %c576 = arith.constant 576 : index
    %c0_30 = arith.constant 0 : index
    %63 = vector.load %arg9[%c576, %c0_30] : memref<1600x128xf32, #tpu.memory_space<vmem>>, vector<64x128xf32>
    tpu.vector_store %arg9[%c576, %c0_30], %62 {strides = array<i32>} : memref<1600x128xf32, #tpu.memory_space<vmem>>, vector<64x128xf32>,
    %c2_i32 = arith.constant 2 : i32
    %64 = tpu.dynamic_rotate %13 by %c2_i32 dim 1 : vector<64x128xf32>, i32 -> vector<64x128xf32>
    %c10 = arith.constant 10 : index
    %c0_31 = arith.constant 0 : index
    %65 = vector.load %arg5[%c10, %c0_31] : memref<25x128xf32, #tpu.memory_space<vmem>>, vector<1x128xf32>
    %66 = vector.broadcast %65 : vector<1x128xf32> to vector<64x128xf32>
    %67 = arith.mulf %64, %66 : vector<64x128xf32>
    %c640 = arith.constant 640 : index
    %c0_32 = arith.constant 0 : index
    %68 = vector.load %arg9[%c640, %c0_32] : memref<1600x128xf32, #tpu.memory_space<vmem>>, vector<64x128xf32>
    tpu.vector_store %arg9[%c640, %c0_32], %67 {strides = array<i32>} : memref<1600x128xf32, #tpu.memory_space<vmem>>, vector<64x128xf32>,
    %c1_i32 = arith.constant 1 : i32
    %69 = tpu.dynamic_rotate %13 by %c1_i32 dim 1 : vector<64x128xf32>, i32 -> vector<64x128xf32>
    %c11 = arith.constant 11 : index
    %c0_33 = arith.constant 0 : index
    %70 = vector.load %arg5[%c11, %c0_33] : memref<25x128xf32, #tpu.memory_space<vmem>>, vector<1x128xf32>
    %71 = vector.broadcast %70 : vector<1x128xf32> to vector<64x128xf32>
    %72 = arith.mulf %69, %71 : vector<64x128xf32>
    %c704 = arith.constant 704 : index
    %c0_34 = arith.constant 0 : index
    %73 = vector.load %arg9[%c704, %c0_34] : memref<1600x128xf32, #tpu.memory_space<vmem>>, vector<64x128xf32>
    tpu.vector_store %arg9[%c704, %c0_34], %72 {strides = array<i32>} : memref<1600x128xf32, #tpu.memory_space<vmem>>, vector<64x128xf32>,
    %c12 = arith.constant 12 : index
    %c0_35 = arith.constant 0 : index
    %74 = vector.load %arg5[%c12, %c0_35] : memref<25x128xf32, #tpu.memory_space<vmem>>, vector<1x128xf32>
    %75 = vector.broadcast %74 : vector<1x128xf32> to vector<64x128xf32>
    %76 = arith.mulf %13, %75 : vector<64x128xf32>
    %c768 = arith.constant 768 : index
    %c0_36 = arith.constant 0 : index
    %77 = vector.load %arg9[%c768, %c0_36] : memref<1600x128xf32, #tpu.memory_space<vmem>>, vector<64x128xf32>
    tpu.vector_store %arg9[%c768, %c0_36], %76 {strides = array<i32>} : memref<1600x128xf32, #tpu.memory_space<vmem>>, vector<64x128xf32>,
    %c127_i32 = arith.constant 127 : i32
    %78 = tpu.dynamic_rotate %13 by %c127_i32 dim 1 : vector<64x128xf32>, i32 -> vector<64x128xf32>
    %c13 = arith.constant 13 : index
    %c0_37 = arith.constant 0 : index
    %79 = vector.load %arg5[%c13, %c0_37] : memref<25x128xf32, #tpu.memory_space<vmem>>, vector<1x128xf32>
    %80 = vector.broadcast %79 : vector<1x128xf32> to vector<64x128xf32>
    %81 = arith.mulf %78, %80 : vector<64x128xf32>
    %c832 = arith.constant 832 : index
    %c0_38 = arith.constant 0 : index
    %82 = vector.load %arg9[%c832, %c0_38] : memref<1600x128xf32, #tpu.memory_space<vmem>>, vector<64x128xf32>
    tpu.vector_store %arg9[%c832, %c0_38], %81 {strides = array<i32>} : memref<1600x128xf32, #tpu.memory_space<vmem>>, vector<64x128xf32>,
    %c126_i32 = arith.constant 126 : i32
    %83 = tpu.dynamic_rotate %13 by %c126_i32 dim 1 : vector<64x128xf32>, i32 -> vector<64x128xf32>
    %c14 = arith.constant 14 : index
    %c0_39 = arith.constant 0 : index
    %84 = vector.load %arg5[%c14, %c0_39] : memref<25x128xf32, #tpu.memory_space<vmem>>, vector<1x128xf32>
    %85 = vector.broadcast %84 : vector<1x128xf32> to vector<64x128xf32>
    %86 = arith.mulf %83, %85 : vector<64x128xf32>
    %c896 = arith.constant 896 : index
    %c0_40 = arith.constant 0 : index
    %87 = vector.load %arg9[%c896, %c0_40] : memref<1600x128xf32, #tpu.memory_space<vmem>>, vector<64x128xf32>
    tpu.vector_store %arg9[%c896, %c0_40], %86 {strides = array<i32>} : memref<1600x128xf32, #tpu.memory_space<vmem>>, vector<64x128xf32>,
    %c122_i32 = arith.constant 122 : i32
    %88 = tpu.dynamic_rotate %13 by %c122_i32 dim 1 : vector<64x128xf32>, i32 -> vector<64x128xf32>
    %c15 = arith.constant 15 : index
    %c0_41 = arith.constant 0 : index
    %89 = vector.load %arg5[%c15, %c0_41] : memref<25x128xf32, #tpu.memory_space<vmem>>, vector<1x128xf32>
    %90 = vector.broadcast %89 : vector<1x128xf32> to vector<64x128xf32>
    %91 = arith.mulf %88, %90 : vector<64x128xf32>
    %c960 = arith.constant 960 : index
    %c0_42 = arith.constant 0 : index
    %92 = vector.load %arg9[%c960, %c0_42] : memref<1600x128xf32, #tpu.memory_space<vmem>>, vector<64x128xf32>
    tpu.vector_store %arg9[%c960, %c0_42], %91 {strides = array<i32>} : memref<1600x128xf32, #tpu.memory_space<vmem>>, vector<64x128xf32>,
    %c121_i32 = arith.constant 121 : i32
    %93 = tpu.dynamic_rotate %13 by %c121_i32 dim 1 : vector<64x128xf32>, i32 -> vector<64x128xf32>
    %c16 = arith.constant 16 : index
    %c0_43 = arith.constant 0 : index
    %94 = vector.load %arg5[%c16, %c0_43] : memref<25x128xf32, #tpu.memory_space<vmem>>, vector<1x128xf32>
    %95 = vector.broadcast %94 : vector<1x128xf32> to vector<64x128xf32>
    %96 = arith.mulf %93, %95 : vector<64x128xf32>
    %c1024 = arith.constant 1024 : index
    %c0_44 = arith.constant 0 : index
    %97 = vector.load %arg9[%c1024, %c0_44] : memref<1600x128xf32, #tpu.memory_space<vmem>>, vector<64x128xf32>
    tpu.vector_store %arg9[%c1024, %c0_44], %96 {strides = array<i32>} : memref<1600x128xf32, #tpu.memory_space<vmem>>, vector<64x128xf32>,
    %c120_i32 = arith.constant 120 : i32
    %98 = tpu.dynamic_rotate %13 by %c120_i32 dim 1 : vector<64x128xf32>, i32 -> vector<64x128xf32>
    %c17 = arith.constant 17 : index
    %c0_45 = arith.constant 0 : index
    %99 = vector.load %arg5[%c17, %c0_45] : memref<25x128xf32, #tpu.memory_space<vmem>>, vector<1x128xf32>
    %100 = vector.broadcast %99 : vector<1x128xf32> to vector<64x128xf32>
    %101 = arith.mulf %98, %100 : vector<64x128xf32>
    %c1088 = arith.constant 1088 : index
    %c0_46 = arith.constant 0 : index
    %102 = vector.load %arg9[%c1088, %c0_46] : memref<1600x128xf32, #tpu.memory_space<vmem>>, vector<64x128xf32>
    tpu.vector_store %arg9[%c1088, %c0_46], %101 {strides = array<i32>} : memref<1600x128xf32, #tpu.memory_space<vmem>>, vector<64x128xf32>,
    %c119_i32 = arith.constant 119 : i32
    %103 = tpu.dynamic_rotate %13 by %c119_i32 dim 1 : vector<64x128xf32>, i32 -> vector<64x128xf32>
    %c18 = arith.constant 18 : index
    %c0_47 = arith.constant 0 : index
    %104 = vector.load %arg5[%c18, %c0_47] : memref<25x128xf32, #tpu.memory_space<vmem>>, vector<1x128xf32>
    %105 = vector.broadcast %104 : vector<1x128xf32> to vector<64x128xf32>
    %106 = arith.mulf %103, %105 : vector<64x128xf32>
    %c1152 = arith.constant 1152 : index
    %c0_48 = arith.constant 0 : index
    %107 = vector.load %arg9[%c1152, %c0_48] : memref<1600x128xf32, #tpu.memory_space<vmem>>, vector<64x128xf32>
    tpu.vector_store %arg9[%c1152, %c0_48], %106 {strides = array<i32>} : memref<1600x128xf32, #tpu.memory_space<vmem>>, vector<64x128xf32>,
    %c118_i32 = arith.constant 118 : i32
    %108 = tpu.dynamic_rotate %13 by %c118_i32 dim 1 : vector<64x128xf32>, i32 -> vector<64x128xf32>
    %c19 = arith.constant 19 : index
    %c0_49 = arith.constant 0 : index
    %109 = vector.load %arg5[%c19, %c0_49] : memref<25x128xf32, #tpu.memory_space<vmem>>, vector<1x128xf32>
    %110 = vector.broadcast %109 : vector<1x128xf32> to vector<64x128xf32>
    %111 = arith.mulf %108, %110 : vector<64x128xf32>
    %c1216 = arith.constant 1216 : index
    %c0_50 = arith.constant 0 : index
    %112 = vector.load %arg9[%c1216, %c0_50] : memref<1600x128xf32, #tpu.memory_space<vmem>>, vector<64x128xf32>
    tpu.vector_store %arg9[%c1216, %c0_50], %111 {strides = array<i32>} : memref<1600x128xf32, #tpu.memory_space<vmem>>, vector<64x128xf32>,
    %c114_i32 = arith.constant 114 : i32
    %113 = tpu.dynamic_rotate %13 by %c114_i32 dim 1 : vector<64x128xf32>, i32 -> vector<64x128xf32>
    %c20 = arith.constant 20 : index
    %c0_51 = arith.constant 0 : index
    %114 = vector.load %arg5[%c20, %c0_51] : memref<25x128xf32, #tpu.memory_space<vmem>>, vector<1x128xf32>
    %115 = vector.broadcast %114 : vector<1x128xf32> to vector<64x128xf32>
    %116 = arith.mulf %113, %115 : vector<64x128xf32>
    %c1280 = arith.constant 1280 : index
    %c0_52 = arith.constant 0 : index
    %117 = vector.load %arg9[%c1280, %c0_52] : memref<1600x128xf32, #tpu.memory_space<vmem>>, vector<64x128xf32>
    tpu.vector_store %arg9[%c1280, %c0_52], %116 {strides = array<i32>} : memref<1600x128xf32, #tpu.memory_space<vmem>>, vector<64x128xf32>,
    %c113_i32 = arith.constant 113 : i32
    %118 = tpu.dynamic_rotate %13 by %c113_i32 dim 1 : vector<64x128xf32>, i32 -> vector<64x128xf32>
    %c21 = arith.constant 21 : index
    %c0_53 = arith.constant 0 : index
    %119 = vector.load %arg5[%c21, %c0_53] : memref<25x128xf32, #tpu.memory_space<vmem>>, vector<1x128xf32>
    %120 = vector.broadcast %119 : vector<1x128xf32> to vector<64x128xf32>
    %121 = arith.mulf %118, %120 : vector<64x128xf32>
    %c1344 = arith.constant 1344 : index
    %c0_54 = arith.constant 0 : index
    %122 = vector.load %arg9[%c1344, %c0_54] : memref<1600x128xf32, #tpu.memory_space<vmem>>, vector<64x128xf32>
    tpu.vector_store %arg9[%c1344, %c0_54], %121 {strides = array<i32>} : memref<1600x128xf32, #tpu.memory_space<vmem>>, vector<64x128xf32>,
    %c112_i32 = arith.constant 112 : i32
    %123 = tpu.dynamic_rotate %13 by %c112_i32 dim 1 : vector<64x128xf32>, i32 -> vector<64x128xf32>
    %c22 = arith.constant 22 : index
    %c0_55 = arith.constant 0 : index
    %124 = vector.load %arg5[%c22, %c0_55] : memref<25x128xf32, #tpu.memory_space<vmem>>, vector<1x128xf32>
    %125 = vector.broadcast %124 : vector<1x128xf32> to vector<64x128xf32>
    %126 = arith.mulf %123, %125 : vector<64x128xf32>
    %c1408 = arith.constant 1408 : index
    %c0_56 = arith.constant 0 : index
    %127 = vector.load %arg9[%c1408, %c0_56] : memref<1600x128xf32, #tpu.memory_space<vmem>>, vector<64x128xf32>
    tpu.vector_store %arg9[%c1408, %c0_56], %126 {strides = array<i32>} : memref<1600x128xf32, #tpu.memory_space<vmem>>, vector<64x128xf32>,
    %c111_i32 = arith.constant 111 : i32
    %128 = tpu.dynamic_rotate %13 by %c111_i32 dim 1 : vector<64x128xf32>, i32 -> vector<64x128xf32>
    %c23 = arith.constant 23 : index
    %c0_57 = arith.constant 0 : index
    %129 = vector.load %arg5[%c23, %c0_57] : memref<25x128xf32, #tpu.memory_space<vmem>>, vector<1x128xf32>
    %130 = vector.broadcast %129 : vector<1x128xf32> to vector<64x128xf32>
    %131 = arith.mulf %128, %130 : vector<64x128xf32>
    %c1472 = arith.constant 1472 : index
    %c0_58 = arith.constant 0 : index
    %132 = vector.load %arg9[%c1472, %c0_58] : memref<1600x128xf32, #tpu.memory_space<vmem>>, vector<64x128xf32>
    tpu.vector_store %arg9[%c1472, %c0_58], %131 {strides = array<i32>} : memref<1600x128xf32, #tpu.memory_space<vmem>>, vector<64x128xf32>,
    %c110_i32 = arith.constant 110 : i32
    %133 = tpu.dynamic_rotate %13 by %c110_i32 dim 1 : vector<64x128xf32>, i32 -> vector<64x128xf32>
    %c24 = arith.constant 24 : index
    %c0_59 = arith.constant 0 : index
    %134 = vector.load %arg5[%c24, %c0_59] : memref<25x128xf32, #tpu.memory_space<vmem>>, vector<1x128xf32>
    %135 = vector.broadcast %134 : vector<1x128xf32> to vector<64x128xf32>
    %136 = arith.mulf %133, %135 : vector<64x128xf32>
    %c1536 = arith.constant 1536 : index
    %c0_60 = arith.constant 0 : index
    %137 = vector.load %arg9[%c1536, %c0_60] : memref<1600x128xf32, #tpu.memory_space<vmem>>, vector<64x128xf32>
    tpu.vector_store %arg9[%c1536, %c0_60], %136 {strides = array<i32>} : memref<1600x128xf32, #tpu.memory_space<vmem>>, vector<64x128xf32>,
    %c0_61 = arith.constant 0 : index
    %c0_62 = arith.constant 0 : index
    %138 = vector.load %arg6[%c0_61, %c0_62] : memref<128x1600xf32, #tpu.memory_space<vmem>>, vector<128x1600xf32>
    %c0_63 = arith.constant 0 : index
    %c0_64 = arith.constant 0 : index
    %139 = vector.load %arg9[%c0_63, %c0_64] : memref<1600x128xf32, #tpu.memory_space<vmem>>, vector<1600x128xf32>
    %cst_65 = arith.constant dense<0.000000e+00> : vector<128x128xf32>
    %140 = tpu.matmul %138, %139, %cst_65 {dimension_numbers = #tpu.dot_dimension_numbers<[1], [0], [0], [1], [0, 0, 1, 1], [], []>} : vector<128x1600xf32>, vector<1600x128xf32>, vector<128x128xf32> -> vector<128x128xf32>
    %c0_66 = arith.constant 0 : index
    %c0_67 = arith.constant 0 : index
    %141 = vector.load %arg7[%c0_66, %c0_67] : memref<128x1xf32, #tpu.memory_space<vmem>>, vector<128x1xf32>
    %142 = vector.broadcast %141 : vector<128x1xf32> to vector<128x128xf32>
    %143 = arith.addf %140, %142 : vector<128x128xf32>
    %cst_68 = arith.constant 0.000000e+00 : f32
    %144 = vector.broadcast %cst_68 : f32 to vector<128x128xf32>
    %145 = arith.maximumf %143, %144 : vector<128x128xf32>
    %c0_69 = arith.constant 0 : index
    %c0_70 = arith.constant 0 : index
    %146 = vector.load %arg8[%c0_69, %c0_70] : memref<128x128xf32, #tpu.memory_space<vmem>>, vector<128x128xf32>
    tpu.vector_store %arg8[%c0_69, %c0_70], %145 {strides = array<i32>} : memref<128x128xf32, #tpu.memory_space<vmem>>, vector<128x128xf32>,
    return
  }
  func.func @transform_0(%arg0: i32) -> (i32, i32) {
    %c0_i32 = arith.constant 0 : i32
    %c0_i32_0 = arith.constant 0 : i32
    return %c0_i32, %arg0 : i32, i32
  }
  func.func @transform_1(%arg0: i32) -> (i32, i32) {
    %c0_i32 = arith.constant 0 : i32
    %c0_i32_0 = arith.constant 0 : i32
    %c0_i32_1 = arith.constant 0 : i32
    return %c0_i32, %c0_i32_0 : i32, i32
  }
  func.func @transform_2(%arg0: i32) -> (i32, i32) {
    %c0_i32 = arith.constant 0 : i32
    %c0_i32_0 = arith.constant 0 : i32
    %c0_i32_1 = arith.constant 0 : i32
    return %c0_i32, %c0_i32_0 : i32, i32
  }
  func.func @transform_3(%arg0: i32) -> (i32, i32) {
    %c0_i32 = arith.constant 0 : i32
    %c0_i32_0 = arith.constant 0 : i32
    %c0_i32_1 = arith.constant 0 : i32
    return %c0_i32, %c0_i32_0 : i32, i32
  }
  func.func @transform_4(%arg0: i32) -> (i32, i32) {
    %c0_i32 = arith.constant 0 : i32
    %c0_i32_0 = arith.constant 0 : i32
    %c0_i32_1 = arith.constant 0 : i32
    return %c0_i32, %c0_i32_0 : i32, i32
  }
  func.func @transform_5(%arg0: i32) -> (i32, i32) {
    %c0_i32 = arith.constant 0 : i32
    %c0_i32_0 = arith.constant 0 : i32
    %c0_i32_1 = arith.constant 0 : i32
    return %c0_i32, %c0_i32_0 : i32, i32
  }
  func.func @transform_6(%arg0: i32) -> (i32, i32) {
    %c0_i32 = arith.constant 0 : i32
    %c0_i32_0 = arith.constant 0 : i32
    %c0_i32_1 = arith.constant 0 : i32
    return %c0_i32, %c0_i32_0 : i32, i32
  }
  func.func @transform_7(%arg0: i32) -> (i32, i32) {
    %c0_i32 = arith.constant 0 : i32
    %c0_i32_0 = arith.constant 0 : i32
    return %c0_i32, %arg0 : i32, i32
  }
}

</mosaic_0001>

<llo_original>
// kernel: cifar10_cnn_forward.1
$region0: #{cifar10_cnn_forward.1}
  #allocation0 [shape = 'u32[]', space=smem, size = 0x4, offset = 0x4, fixed_abs, tag = 'smem constant byte address 0x4 - core index']
  #allocation1 [shape = 'u32[144,128]{1,0:T(1,128)}', space=vmem, size = 0x12000, scoped, tag = 'internal scratch']
  #allocation2 [shape = 'f32[1600,128]{1,0:T(8,128)}', space=vmem, size = 0xc8000, scoped, tag = 'scratch operand']
  %s0 = inlined_call_operand.vmem [shape: f32[100,512], index: 0, kind: input, shape index: {}]
  %s1 = inlined_call_operand.vmem [shape: f32[64,100], index: 1, kind: input, shape index: {}]
  %s2 = inlined_call_operand.vmem [shape: f32[64,1], index: 2, kind: input, shape index: {}]
  %s3 = inlined_call_operand.vmem [shape: f32[512,128], index: 3, kind: input, shape index: {}]
  %s4 = inlined_call_operand.vmem [shape: f32[25,128], index: 4, kind: input, shape index: {}]
  %s5 = inlined_call_operand.vmem [shape: f32[128,1600], index: 5, kind: input, shape index: {}]
  %s6 = inlined_call_operand.vmem [shape: f32[128,1], index: 6, kind: input, shape index: {}]
  %s7 = inlined_call_operand.vmem [shape: f32[128,128], index: 7, kind: output, shape index: {}]
  %s8 = sld [smem:[#allocation0]]
  $region38: #{cifar10_cnn_forward.1} parent=0
    _
  %s10 = ssub.s32 1, %s8
  %s11 = scalar_select 0, %s10, %s8
  // Predicated region
  $region2: #{cifar10_cnn_forward.1} parent=0 // pred_check
    _
  $region3: #{cifar10_cnn_forward.1} parent=0 // pred_check_branch
    %13 = sbr.rel (0) target = $region5
  $region4: #{cifar10_cnn_forward.1} parent=0 // pred_region
    _
  $region5: #{cifar10_cnn_forward.1} parent=0 // pred_fallthru
    _
  // Predicated region
  $region6: #{cifar10_cnn_forward.1} parent=0 // pred_check
    _
  $region7: #{cifar10_cnn_forward.1} parent=0 // pred_check_branch
    %15 = sbr.rel (0) target = $region9
  $region8: #{cifar10_cnn_forward.1} parent=0 // pred_region
    _
  $region9: #{cifar10_cnn_forward.1} parent=0 // pred_fallthru
    _
  // Predicated region
  $region10: #{cifar10_cnn_forward.1} parent=0 // pred_check
    _
  $region11: #{cifar10_cnn_forward.1} parent=0 // pred_check_branch
    %17 = sbr.rel (0) target = $region13
  $region12: #{cifar10_cnn_forward.1} parent=0 // pred_region
    _
  $region13: #{cifar10_cnn_forward.1} parent=0 // pred_fallthru
    _
  // Predicated region
  $region14: #{cifar10_cnn_forward.1} parent=0 // pred_check
    _
  $region15: #{cifar10_cnn_forward.1} parent=0 // pred_check_branch
    %19 = sbr.rel (0) target = $region17
  $region16: #{cifar10_cnn_forward.1} parent=0 // pred_region
    _
  $region17: #{cifar10_cnn_forward.1} parent=0 // pred_fallthru
    _
  // Predicated region
  $region18: #{cifar10_cnn_forward.1} parent=0 // pred_check
    _
  $region19: #{cifar10_cnn_forward.1} parent=0 // pred_check_branch
    %21 = sbr.rel (0) target = $region21
  $region20: #{cifar10_cnn_forward.1} parent=0 // pred_region
    _
  $region21: #{cifar10_cnn_forward.1} parent=0 // pred_fallthru
    _
  // Predicated region
  $region22: #{cifar10_cnn_forward.1} parent=0 // pred_check
    _
  $region23: #{cifar10_cnn_forward.1} parent=0 // pred_check_branch
    %23 = sbr.rel (0) target = $region25
  $region24: #{cifar10_cnn_forward.1} parent=0 // pred_region
    _
  $region25: #{cifar10_cnn_forward.1} parent=0 // pred_fallthru
    _
  // Predicated region
  $region26: #{cifar10_cnn_forward.1} parent=0 // pred_check
    _
  $region27: #{cifar10_cnn_forward.1} parent=0 // pred_check_branch
    %25 = sbr.rel (0) target = $region29
  $region28: #{cifar10_cnn_forward.1} parent=0 // pred_region
    _
  $region29: #{cifar10_cnn_forward.1} parent=0 // pred_fallthru
    _
  %v26 = vld [vmem:[%s1] sm:$0xff]
  %v27 = vld [vmem:[%s1 + $0x8] sm:$0xff]
  %v28 = vld [vmem:[%s1 + $0x10] sm:$0xff]
  %v29 = vld [vmem:[%s1 + $0x18] sm:$0xff]
  %v30 = vld [vmem:[%s1 + $0x20] sm:$0xff]
  %v31 = vld [vmem:[%s1 + $0x28] sm:$0xff]
  %v32 = vld [vmem:[%s1 + $0x30] sm:$0xff]
  %v33 = vld [vmem:[%s1 + $0x38] sm:$0xff]
  %v34 = vld [vmem:[%s0] sm:$0xff]
  %v35 = vld [vmem:[%s0 + $0x8] sm:$0xff]
  %v36 = vld [vmem:[%s0 + $0x10] sm:$0xff]
  %v37 = vld [vmem:[%s0 + $0x18] sm:$0xff]
  %v38 = vld [vmem:[%s0 + $0x20] sm:$0xff]
  %v39 = vld [vmem:[%s0 + $0x28] sm:$0xff]
  %v40 = vld [vmem:[%s0 + $0x30] sm:$0xff]
  %v41 = vld [vmem:[%s0 + $0x38] sm:$0xff]
  %v42 = vld [vmem:[%s0 + $0x40] sm:$0xff]
  %v43 = vld [vmem:[%s0 + $0x48] sm:$0xff]
  %v44 = vld [vmem:[%s0 + $0x50] sm:$0xff]
  %v45 = vld [vmem:[%s0 + $0x58] sm:$0xff]
  %v46 = vld [vmem:[%s0 + $0x60] sm:$0xff]
  %v47 = vld [vmem:[%s0 + $0x68] sm:$0xff]
  %v48 = vld [vmem:[%s0 + $0x70] sm:$0xff]
  %v49 = vld [vmem:[%s0 + $0x78] sm:$0xff]
  %v50 = vld [vmem:[%s0 + $0x80] sm:$0xff]
  %v51 = vld [vmem:[%s0 + $0x88] sm:$0xff]
  %v52 = vld [vmem:[%s0 + $0x90] sm:$0xff]
  %v53 = vld [vmem:[%s0 + $0x98] sm:$0xff]
  %v54 = vld [vmem:[%s0 + $0xa0] sm:$0xff]
  %v55 = vld [vmem:[%s0 + $0xa8] sm:$0xff]
  %v56 = vld [vmem:[%s0 + $0xb0] sm:$0xff]
  %v57 = vld [vmem:[%s0 + $0xb8] sm:$0xff]
  %v58 = vld [vmem:[%s0 + $0xc0] sm:$0xff]
  %v59 = vld [vmem:[%s0 + $0xc8] sm:$0xff]
  %v60 = vld [vmem:[%s0 + $0xd0] sm:$0xff]
  %v61 = vld [vmem:[%s0 + $0xd8] sm:$0xff]
  %v62 = vld [vmem:[%s0 + $0xe0] sm:$0xff]
  %v63 = vld [vmem:[%s0 + $0xe8] sm:$0xff]
  %v64 = vld [vmem:[%s0 + $0xf0] sm:$0xff]
  %v65 = vld [vmem:[%s0 + $0xf8] sm:$0xff]
  %v66 = vld [vmem:[%s0 + $0x100] sm:$0xff]
  %v67 = vld [vmem:[%s0 + $0x108] sm:$0xff]
  %v68 = vld [vmem:[%s0 + $0x110] sm:$0xff]
  %v69 = vld [vmem:[%s0 + $0x118] sm:$0xff]
  %v70 = vld [vmem:[%s0 + $0x120] sm:$0xff]
  %v71 = vld [vmem:[%s0 + $0x128] sm:$0xff]
  %v72 = vld [vmem:[%s0 + $0x130] sm:$0xff]
  %v73 = vld [vmem:[%s0 + $0x138] sm:$0xff]
  %v74 = vld [vmem:[%s0 + $0x140] sm:$0xff]
  %v75 = vld [vmem:[%s0 + $0x148] sm:$0xff]
  %v76 = vld [vmem:[%s0 + $0x150] sm:$0xff]
  %v77 = vld [vmem:[%s0 + $0x158] sm:$0xff]
  %v78 = vld [vmem:[%s0 + $0x160] sm:$0xff]
  %v79 = vld [vmem:[%s0 + $0x168] sm:$0xff]
  %v80 = vld [vmem:[%s0 + $0x170] sm:$0xff]
  %v81 = vld [vmem:[%s0 + $0x178] sm:$0xff]
  %v82 = vld [vmem:[%s0 + $0x180] sm:$0xf]
  %v83 = vld [vmem:[%s0 + $0x188] sm:$0xf]
  %v84 = vld [vmem:[%s0 + $0x190] sm:$0xf]
  %v85 = vld [vmem:[%s0 + $0x198] sm:$0xf]
  %v86 = vld [vmem:[%s2] sm:$0xff]
  %v87 = vld [vmem:[%s2 + $0x8] sm:$0xff]
  %v88 = vld [vmem:[%s2 + $0x10] sm:$0xff]
  %v89 = vld [vmem:[%s2 + $0x18] sm:$0xff]
  %v90 = vld [vmem:[%s2 + $0x20] sm:$0xff]
  %v91 = vld [vmem:[%s2 + $0x28] sm:$0xff]
  %v92 = vld [vmem:[%s2 + $0x30] sm:$0xff]
  %v93 = vld [vmem:[%s2 + $0x38] sm:$0xff]
  %95 = vset.pattern.permute.xlu0 0
  %96 = vperm.xlu0 %95, %v86
  %v97 = vpop.permute.xlu0 %96
  %100 = vset.pattern.permute.xlu0 0
  %101 = vperm.xlu0 %100, %v87
  %v102 = vpop.permute.xlu0 %101
  %105 = vset.pattern.permute.xlu0 0
  %106 = vperm.xlu0 %105, %v88
  %v107 = vpop.permute.xlu0 %106
  %110 = vset.pattern.permute.xlu0 0
  %111 = vperm.xlu0 %110, %v89
  %v112 = vpop.permute.xlu0 %111
  %115 = vset.pattern.permute.xlu0 0
  %116 = vperm.xlu0 %115, %v90
  %v117 = vpop.permute.xlu0 %116
  %120 = vset.pattern.permute.xlu0 0
  %121 = vperm.xlu0 %120, %v91
  %v122 = vpop.permute.xlu0 %121
  %125 = vset.pattern.permute.xlu0 0
  %126 = vperm.xlu0 %125, %v92
  %v127 = vpop.permute.xlu0 %126
  %130 = vset.pattern.permute.xlu0 0
  %131 = vperm.xlu0 %130, %v93
  %v132 = vpop.permute.xlu0 %131
  %vm134 = vcmask 818176
  %v136 = vsel %vm134, %v26, 0
  %v139 = vsel %vm134, %v27, 0
  %v142 = vsel %vm134, %v28, 0
  %v145 = vsel %vm134, %v29, 0
  %v148 = vsel %vm134, %v30, 0
  %v151 = vsel %vm134, %v31, 0
  %v154 = vsel %vm134, %v32, 0
  %v157 = vsel %vm134, %v33, 0
  %vm159 = vcmask 1043456
  %v161 = vsel %vm159, %v82, 0
  %v164 = vsel %vm159, %v83, 0
  %v167 = vsel %vm159, %v84, 0
  %v170 = vsel %vm159, %v85, 0
  %172 = vmatprep.subr.mxu0 %v35
  %173 = vmatpush1.msra.mxu0 %v34
  %174 = vmatprep.subr.mxu0 %v39
  %175 = vmatpush1.msra.mxu0 %v38
  %176 = vmatprep.subr.mxu0 %v43
  %177 = vmatpush1.msra.mxu0 %v42
  %178 = vmatprep.subr.mxu0 %v47
  %179 = vmatpush1.msra.mxu0 %v46
  %180 = vmatprep.subr.mxu0 %v51
  %181 = vmatpush1.msra.mxu0 %v50
  %182 = vmatprep.subr.mxu0 %v55
  %183 = vmatpush1.msra.mxu0 %v54
  %184 = vmatprep.subr.mxu0 %v59
  %185 = vmatpush1.msra.mxu0 %v58
  %186 = vmatprep.subr.mxu0 %v63
  %187 = vmatpush1.msra.mxu0 %v62
  %188 = vmatprep.subr.mxu0 %v67
  %189 = vmatpush1.msra.mxu0 %v66
  %190 = vmatprep.subr.mxu0 %v71
  %191 = vmatpush1.msra.mxu0 %v70
  %192 = vmatprep.subr.mxu0 %v75
  %193 = vmatpush1.msra.mxu0 %v74
  %194 = vmatprep.subr.mxu0 %v79
  %195 = vmatpush1.msra.mxu0 %v78
  %196 = vmatprep.subr.mxu0 %v164
  %197 = vmatpush1.msra.mxu0 %v161
  %198 = vmatprep.subr.mxu0 0.0
  %199 = vmatpush1.msra.mxu0 0.0
  %200 = vmatprep.subr.mxu0 0.0
  %201 = vmatpush1.msra.mxu0 0.0
  %202 = vmatprep.subr.mxu0 0.0
  %203 = vmatpush1.msra.mxu0 0.0
  %204 = vmatprep.subr.mxu0 0.0
  %205 = vmatpush1.msra.mxu0 0.0
  %206 = vmatprep.subr.mxu0 0.0
  %207 = vmatpush1.msra.mxu0 0.0
  %208 = vmatprep.subr.mxu0 0.0
  %209 = vmatpush1.msra.mxu0 0.0
  %210 = vmatprep.subr.mxu0 0.0
  %211 = vmatpush1.msra.mxu0 0.0
  %212 = vmatprep.subr.mxu0 0.0
  %213 = vmatpush1.msra.mxu0 0.0
  %214 = vmatprep.subr.mxu0 0.0
  %215 = vmatpush1.msra.mxu0 0.0
  %216 = vmatprep.subr.mxu0 0.0
  %217 = vmatpush1.msra.mxu0 0.0
  %218 = vmatprep.subr.mxu0 0.0
  %219 = vmatpush1.msra.mxu0 0.0
  %220 = vmatprep.subr.mxu0 0.0
  %221 = vmatpush1.msra.mxu0 0.0
  %222 = vmatprep.subr.mxu0 0.0
  %223 = vmatpush1.msra.mxu0 0.0
  %224 = vmatprep.subr.mxu0 0.0
  %225 = vmatpush1.msra.mxu0 0.0
  %226 = vmatprep.subr.mxu0 0.0
  %227 = vmatpush1.msra.mxu0 0.0
  %228 = vmatprep.subr.mxu0 0.0
  %229 = vmatpush1.msra.mxu0 0.0
  %230 = vmatprep.subr.mxu0 0.0
  %231 = vmatpush1.msra.mxu0 0.0
  %232 = vmatprep.subr.mxu0 0.0
  %233 = vmatpush1.msra.mxu0 0.0
  %234 = vmatprep.subr.mxu0 0.0
  %235 = vmatpush1.msra.mxu0 0.0
  %236 = vmatprep.mubr.f32.mxu0 0.0
  %237 = vmatmul.mubr.f32.gmra.mrb[0].mxu0 %v136
  %v238 = vpop.f32.mrb[0].mxu0
  %v239 = vadd.f32 %v97, %v238
  %v240 = vpop.f32.mrb[0].mxu0
  %v241 = vadd.f32 %v97, %v240
  %242 = vmatprep.mubr.f32.mxu0 0.0
  %243 = vmatmul.mubr.f32.gmra.mrb[0].mxu0 %v139
  %v244 = vpop.f32.mrb[0].mxu0
  %v245 = vadd.f32 %v102, %v244
  %v246 = vpop.f32.mrb[0].mxu0
  %v247 = vadd.f32 %v102, %v246
  %248 = vmatprep.mubr.f32.mxu0 0.0
  %249 = vmatmul.mubr.f32.gmra.mrb[0].mxu0 %v142
  %v250 = vpop.f32.mrb[0].mxu0
  %v251 = vadd.f32 %v107, %v250
  %v252 = vpop.f32.mrb[0].mxu0
  %v253 = vadd.f32 %v107, %v252
  %254 = vmatprep.mubr.f32.mxu0 0.0
  %255 = vmatmul.mubr.f32.gmra.mrb[0].mxu0 %v145
  %v256 = vpop.f32.mrb[0].mxu0
  %v257 = vadd.f32 %v112, %v256
  %v258 = vpop.f32.mrb[0].mxu0
  %v259 = vadd.f32 %v112, %v258
  %260 = vmatprep.mubr.f32.mxu0 0.0
  %261 = vmatmul.mubr.f32.gmra.mrb[0].mxu0 %v148
  %v262 = vpop.f32.mrb[0].mxu0
  %v263 = vadd.f32 %v117, %v262
  %v264 = vpop.f32.mrb[0].mxu0
  %v265 = vadd.f32 %v117, %v264
  %266 = vmatprep.mubr.f32.mxu0 0.0
  %267 = vmatmul.mubr.f32.gmra.mrb[0].mxu0 %v151
  %v268 = vpop.f32.mrb[0].mxu0
  %v269 = vadd.f32 %v122, %v268
  %v270 = vpop.f32.mrb[0].mxu0
  %v271 = vadd.f32 %v122, %v270
  %272 = vmatprep.mubr.f32.mxu0 0.0
  %273 = vmatmul.mubr.f32.gmra.mrb[0].mxu0 %v154
  %v274 = vpop.f32.mrb[0].mxu0
  %v275 = vadd.f32 %v127, %v274
  %v276 = vpop.f32.mrb[0].mxu0
  %v277 = vadd.f32 %v127, %v276
  %278 = vmatprep.mubr.f32.mxu0 0.0
  %279 = vmatmul.mubr.f32.gmra.mrb[0].mxu0 %v157
  %v280 = vpop.f32.mrb[0].mxu0
  %v281 = vadd.f32 %v132, %v280
  %v282 = vpop.f32.mrb[0].mxu0
  %v283 = vadd.f32 %v132, %v282
  %284 = vdwg.mxu0
  %285 = vmatprep.subr.mxu0 %v37
  %286 = vmatpush1.msra.mxu0 %v36
  %287 = vmatprep.subr.mxu0 %v41
  %288 = vmatpush1.msra.mxu0 %v40
  %289 = vmatprep.subr.mxu0 %v45
  %290 = vmatpush1.msra.mxu0 %v44
  %291 = vmatprep.subr.mxu0 %v49
  %292 = vmatpush1.msra.mxu0 %v48
  %293 = vmatprep.subr.mxu0 %v53
  %294 = vmatpush1.msra.mxu0 %v52
  %295 = vmatprep.subr.mxu0 %v57
  %296 = vmatpush1.msra.mxu0 %v56
  %297 = vmatprep.subr.mxu0 %v61
  %298 = vmatpush1.msra.mxu0 %v60
  %299 = vmatprep.subr.mxu0 %v65
  %300 = vmatpush1.msra.mxu0 %v64
  %301 = vmatprep.subr.mxu0 %v69
  %302 = vmatpush1.msra.mxu0 %v68
  %303 = vmatprep.subr.mxu0 %v73
  %304 = vmatpush1.msra.mxu0 %v72
  %305 = vmatprep.subr.mxu0 %v77
  %306 = vmatpush1.msra.mxu0 %v76
  %307 = vmatprep.subr.mxu0 %v81
  %308 = vmatpush1.msra.mxu0 %v80
  %309 = vmatprep.subr.mxu0 %v170
  %310 = vmatpush1.msra.mxu0 %v167
  %311 = vmatprep.subr.mxu0 0.0
  %312 = vmatpush1.msra.mxu0 0.0
  %313 = vmatprep.subr.mxu0 0.0
  %314 = vmatpush1.msra.mxu0 0.0
  %315 = vmatprep.subr.mxu0 0.0
  %316 = vmatpush1.msra.mxu0 0.0
  %317 = vmatprep.subr.mxu0 0.0
  %318 = vmatpush1.msra.mxu0 0.0
  %319 = vmatprep.subr.mxu0 0.0
  %320 = vmatpush1.msra.mxu0 0.0
  %321 = vmatprep.subr.mxu0 0.0
  %322 = vmatpush1.msra.mxu0 0.0
  %323 = vmatprep.subr.mxu0 0.0
  %324 = vmatpush1.msra.mxu0 0.0
  %325 = vmatprep.subr.mxu0 0.0
  %326 = vmatpush1.msra.mxu0 0.0
  %327 = vmatprep.subr.mxu0 0.0
  %328 = vmatpush1.msra.mxu0 0.0
  %329 = vmatprep.subr.mxu0 0.0
  %330 = vmatpush1.msra.mxu0 0.0
  %331 = vmatprep.subr.mxu0 0.0
  %332 = vmatpush1.msra.mxu0 0.0
  %333 = vmatprep.subr.mxu0 0.0
  %334 = vmatpush1.msra.mxu0 0.0
  %335 = vmatprep.subr.mxu0 0.0
  %336 = vmatpush1.msra.mxu0 0.0
  %337 = vmatprep.subr.mxu0 0.0
  %338 = vmatpush1.msra.mxu0 0.0
  %339 = vmatprep.subr.mxu0 0.0
  %340 = vmatpush1.msra.mxu0 0.0
  %341 = vmatprep.subr.mxu0 0.0
  %342 = vmatpush1.msra.mxu0 0.0
  %343 = vmatprep.subr.mxu0 0.0
  %344 = vmatpush1.msra.mxu0 0.0
  %345 = vmatprep.subr.mxu0 0.0
  %346 = vmatpush1.msra.mxu0 0.0
  %347 = vmatprep.subr.mxu0 0.0
  %348 = vmatpush1.msra.mxu0 0.0
  %349 = vmatprep.mubr.f32.mxu0 0.0
  %350 = vmatmul.mubr.f32.gmra.mrb[0].mxu0 %v136
  %v351 = vpop.f32.mrb[0].mxu0
  %v352 = vadd.f32 %v97, %v351
  %v353 = vpop.f32.mrb[0].mxu0
  %v354 = vadd.f32 %v97, %v353
  %355 = vmatprep.mubr.f32.mxu0 0.0
  %356 = vmatmul.mubr.f32.gmra.mrb[0].mxu0 %v139
  %v357 = vpop.f32.mrb[0].mxu0
  %v358 = vadd.f32 %v102, %v357
  %v359 = vpop.f32.mrb[0].mxu0
  %v360 = vadd.f32 %v102, %v359
  %361 = vmatprep.mubr.f32.mxu0 0.0
  %362 = vmatmul.mubr.f32.gmra.mrb[0].mxu0 %v142
  %v363 = vpop.f32.mrb[0].mxu0
  %v364 = vadd.f32 %v107, %v363
  %v365 = vpop.f32.mrb[0].mxu0
  %v366 = vadd.f32 %v107, %v365
  %367 = vmatprep.mubr.f32.mxu0 0.0
  %368 = vmatmul.mubr.f32.gmra.mrb[0].mxu0 %v145
  %v369 = vpop.f32.mrb[0].mxu0
  %v370 = vadd.f32 %v112, %v369
  %v371 = vpop.f32.mrb[0].mxu0
  %v372 = vadd.f32 %v112, %v371
  %373 = vmatprep.mubr.f32.mxu0 0.0
  %374 = vmatmul.mubr.f32.gmra.mrb[0].mxu0 %v148
  %v375 = vpop.f32.mrb[0].mxu0
  %v376 = vadd.f32 %v117, %v375
  %v377 = vpop.f32.mrb[0].mxu0
  %v378 = vadd.f32 %v117, %v377
  %379 = vmatprep.mubr.f32.mxu0 0.0
  %380 = vmatmul.mubr.f32.gmra.mrb[0].mxu0 %v151
  %v381 = vpop.f32.mrb[0].mxu0
  %v382 = vadd.f32 %v122, %v381
  %v383 = vpop.f32.mrb[0].mxu0
  %v384 = vadd.f32 %v122, %v383
  %385 = vmatprep.mubr.f32.mxu0 0.0
  %386 = vmatmul.mubr.f32.gmra.mrb[0].mxu0 %v154
  %v387 = vpop.f32.mrb[0].mxu0
  %v388 = vadd.f32 %v127, %v387
  %v389 = vpop.f32.mrb[0].mxu0
  %v390 = vadd.f32 %v127, %v389
  %391 = vmatprep.mubr.f32.mxu0 0.0
  %392 = vmatmul.mubr.f32.gmra.mrb[0].mxu0 %v157
  %v393 = vpop.f32.mrb[0].mxu0
  %v394 = vadd.f32 %v132, %v393
  %v395 = vpop.f32.mrb[0].mxu0
  %v396 = vadd.f32 %v132, %v395
  %397 = vdwg.mxu0
  %v398 = vmax.f32 %v239, 0.0
  %v399 = vmax.f32 %v241, 0.0
  %v400 = vmax.f32 %v352, 0.0
  %v401 = vmax.f32 %v354, 0.0
  %v402 = vmax.f32 %v245, 0.0
  %v403 = vmax.f32 %v247, 0.0
  %v404 = vmax.f32 %v358, 0.0
  %v405 = vmax.f32 %v360, 0.0
  %v406 = vmax.f32 %v251, 0.0
  %v407 = vmax.f32 %v253, 0.0
  %v408 = vmax.f32 %v364, 0.0
  %v409 = vmax.f32 %v366, 0.0
  %v410 = vmax.f32 %v257, 0.0
  %v411 = vmax.f32 %v259, 0.0
  %v412 = vmax.f32 %v370, 0.0
  %v413 = vmax.f32 %v372, 0.0
  %v414 = vmax.f32 %v263, 0.0
  %v415 = vmax.f32 %v265, 0.0
  %v416 = vmax.f32 %v376, 0.0
  %v417 = vmax.f32 %v378, 0.0
  %v418 = vmax.f32 %v269, 0.0
  %v419 = vmax.f32 %v271, 0.0
  %v420 = vmax.f32 %v382, 0.0
  %v421 = vmax.f32 %v384, 0.0
  %v422 = vmax.f32 %v275, 0.0
  %v423 = vmax.f32 %v277, 0.0
  %v424 = vmax.f32 %v388, 0.0
  %v425 = vmax.f32 %v390, 0.0
  %v426 = vmax.f32 %v281, 0.0
  %v427 = vmax.f32 %v283, 0.0
  %v428 = vmax.f32 %v394, 0.0
  %v429 = vmax.f32 %v396, 0.0
  %430 = vrot.lane.b32.xlu0 %v398, 127
  %v431 = vpop.permute.xlu0 %430
  %432 = vrot.lane.b32.xlu0 %v402, 127
  %v433 = vpop.permute.xlu0 %432
  %434 = vrot.lane.b32.xlu0 %v406, 127
  %v435 = vpop.permute.xlu0 %434
  %436 = vrot.lane.b32.xlu0 %v410, 127
  %v437 = vpop.permute.xlu0 %436
  %438 = vrot.lane.b32.xlu0 %v414, 127
  %v439 = vpop.permute.xlu0 %438
  %440 = vrot.lane.b32.xlu0 %v418, 127
  %v441 = vpop.permute.xlu0 %440
  %442 = vrot.lane.b32.xlu0 %v422, 127
  %v443 = vpop.permute.xlu0 %442
  %444 = vrot.lane.b32.xlu0 %v426, 127
  %v445 = vpop.permute.xlu0 %444
  %446 = vrot.lane.b32.xlu0 %v399, 127
  %v447 = vpop.permute.xlu0 %446
  %448 = vrot.lane.b32.xlu0 %v403, 127
  %v449 = vpop.permute.xlu0 %448
  %450 = vrot.lane.b32.xlu0 %v407, 127
  %v451 = vpop.permute.xlu0 %450
  %452 = vrot.lane.b32.xlu0 %v411, 127
  %v453 = vpop.permute.xlu0 %452
  %454 = vrot.lane.b32.xlu0 %v415, 127
  %v455 = vpop.permute.xlu0 %454
  %456 = vrot.lane.b32.xlu0 %v419, 127
  %v457 = vpop.permute.xlu0 %456
  %458 = vrot.lane.b32.xlu0 %v423, 127
  %v459 = vpop.permute.xlu0 %458
  %460 = vrot.lane.b32.xlu0 %v427, 127
  %v461 = vpop.permute.xlu0 %460
  %462 = vrot.lane.b32.xlu0 %v400, 127
  %v463 = vpop.permute.xlu0 %462
  %464 = vrot.lane.b32.xlu0 %v404, 127
  %v465 = vpop.permute.xlu0 %464
  %466 = vrot.lane.b32.xlu0 %v408, 127
  %v467 = vpop.permute.xlu0 %466
  %468 = vrot.lane.b32.xlu0 %v412, 127
  %v469 = vpop.permute.xlu0 %468
  %470 = vrot.lane.b32.xlu0 %v416, 127
  %v471 = vpop.permute.xlu0 %470
  %472 = vrot.lane.b32.xlu0 %v420, 127
  %v473 = vpop.permute.xlu0 %472
  %474 = vrot.lane.b32.xlu0 %v424, 127
  %v475 = vpop.permute.xlu0 %474
  %476 = vrot.lane.b32.xlu0 %v428, 127
  %v477 = vpop.permute.xlu0 %476
  %478 = vrot.lane.b32.xlu0 %v401, 127
  %v479 = vpop.permute.xlu0 %478
  %480 = vrot.lane.b32.xlu0 %v405, 127
  %v481 = vpop.permute.xlu0 %480
  %482 = vrot.lane.b32.xlu0 %v409, 127
  %v483 = vpop.permute.xlu0 %482
  %484 = vrot.lane.b32.xlu0 %v413, 127
  %v485 = vpop.permute.xlu0 %484
  %486 = vrot.lane.b32.xlu0 %v417, 127
  %v487 = vpop.permute.xlu0 %486
  %488 = vrot.lane.b32.xlu0 %v421, 127
  %v489 = vpop.permute.xlu0 %488
  %490 = vrot.lane.b32.xlu0 %v425, 127
  %v491 = vpop.permute.xlu0 %490
  %492 = vrot.lane.b32.xlu0 %v429, 127
  %v493 = vpop.permute.xlu0 %492
  %v494 = vlaneseq
  %v495 = vand.u32 %v494, 127
  %vm496 = vcmp.lt.s32.totalorder %v495, 127
  %v497 = vsel %vm496, %v463, %v479
  %v498 = vsel %vm496, %v465, %v481
  %v499 = vsel %vm496, %v467, %v483
  %v500 = vsel %vm496, %v469, %v485
  %v501 = vsel %vm496, %v471, %v487
  %v502 = vsel %vm496, %v473, %v489
  %v503 = vsel %vm496, %v475, %v491
  %v504 = vsel %vm496, %v477, %v493
  %v505 = vsel %vm496, %v447, %v463
  %v506 = vsel %vm496, %v449, %v465
  %v507 = vsel %vm496, %v451, %v467
  %v508 = vsel %vm496, %v453, %v469
  %v509 = vsel %vm496, %v455, %v471
  %v510 = vsel %vm496, %v457, %v473
  %v511 = vsel %vm496, %v459, %v475
  %v512 = vsel %vm496, %v461, %v477
  %v513 = vsel %vm496, %v431, %v447
  %v514 = vsel %vm496, %v433, %v449
  %v515 = vsel %vm496, %v435, %v451
  %v516 = vsel %vm496, %v437, %v453
  %v517 = vsel %vm496, %v439, %v455
  %v518 = vsel %vm496, %v441, %v457
  %v519 = vsel %vm496, %v443, %v459
  %v520 = vsel %vm496, %v445, %v461
  %v521 = vsel %vm496, %v479, %v431
  %v522 = vsel %vm496, %v481, %v433
  %v523 = vsel %vm496, %v483, %v435
  %v524 = vsel %vm496, %v485, %v437
  %v525 = vsel %vm496, %v487, %v439
  %v526 = vsel %vm496, %v489, %v441
  %v527 = vsel %vm496, %v491, %v443
  %v528 = vsel %vm496, %v493, %v445
  %v529 = vmax.f32 %v398, %v513
  %v530 = vmax.f32 %v399, %v505
  %v531 = vmax.f32 %v400, %v497
  %v532 = vmax.f32 %v401, %v521
  %v533 = vmax.f32 %v402, %v514
  %v534 = vmax.f32 %v403, %v506
  %v535 = vmax.f32 %v404, %v498
  %v536 = vmax.f32 %v405, %v522
  %v537 = vmax.f32 %v406, %v515
  %v538 = vmax.f32 %v407, %v507
  %v539 = vmax.f32 %v408, %v499
  %v540 = vmax.f32 %v409, %v523
  %v541 = vmax.f32 %v410, %v516
  %v542 = vmax.f32 %v411, %v508
  %v543 = vmax.f32 %v412, %v500
  %v544 = vmax.f32 %v413, %v524
  %v545 = vmax.f32 %v414, %v517
  %v546 = vmax.f32 %v415, %v509
  %v547 = vmax.f32 %v416, %v501
  %v548 = vmax.f32 %v417, %v525
  %v549 = vmax.f32 %v418, %v518
  %v550 = vmax.f32 %v419, %v510
  %v551 = vmax.f32 %v420, %v502
  %v552 = vmax.f32 %v421, %v526
  %v553 = vmax.f32 %v422, %v519
  %v554 = vmax.f32 %v423, %v511
  %v555 = vmax.f32 %v424, %v503
  %v556 = vmax.f32 %v425, %v527
  %v557 = vmax.f32 %v426, %v520
  %v558 = vmax.f32 %v427, %v512
  %v559 = vmax.f32 %v428, %v504
  %v560 = vmax.f32 %v429, %v528
  %561 = vrot.lane.b32.xlu0 %v529, 112
  %v562 = vpop.permute.xlu0 %561
  %563 = vrot.lane.b32.xlu0 %v533, 112
  %v564 = vpop.permute.xlu0 %563
  %565 = vrot.lane.b32.xlu0 %v537, 112
  %v566 = vpop.permute.xlu0 %565
  %567 = vrot.lane.b32.xlu0 %v541, 112
  %v568 = vpop.permute.xlu0 %567
  %569 = vrot.lane.b32.xlu0 %v545, 112
  %v570 = vpop.permute.xlu0 %569
  %571 = vrot.lane.b32.xlu0 %v549, 112
  %v572 = vpop.permute.xlu0 %571
  %573 = vrot.lane.b32.xlu0 %v553, 112
  %v574 = vpop.permute.xlu0 %573
  %575 = vrot.lane.b32.xlu0 %v557, 112
  %v576 = vpop.permute.xlu0 %575
  %577 = vrot.lane.b32.xlu0 %v530, 112
  %v578 = vpop.permute.xlu0 %577
  %579 = vrot.lane.b32.xlu0 %v534, 112
  %v580 = vpop.permute.xlu0 %579
  %581 = vrot.lane.b32.xlu0 %v538, 112
  %v582 = vpop.permute.xlu0 %581
  %583 = vrot.lane.b32.xlu0 %v542, 112
  %v584 = vpop.permute.xlu0 %583
  %585 = vrot.lane.b32.xlu0 %v546, 112
  %v586 = vpop.permute.xlu0 %585
  %587 = vrot.lane.b32.xlu0 %v550, 112
  %v588 = vpop.permute.xlu0 %587
  %589 = vrot.lane.b32.xlu0 %v554, 112
  %v590 = vpop.permute.xlu0 %589
  %591 = vrot.lane.b32.xlu0 %v558, 112
  %v592 = vpop.permute.xlu0 %591
  %593 = vrot.lane.b32.xlu0 %v531, 112
  %v594 = vpop.permute.xlu0 %593
  %595 = vrot.lane.b32.xlu0 %v535, 112
  %v596 = vpop.permute.xlu0 %595
  %597 = vrot.lane.b32.xlu0 %v539, 112
  %v598 = vpop.permute.xlu0 %597
  %599 = vrot.lane.b32.xlu0 %v543, 112
  %v600 = vpop.permute.xlu0 %599
  %601 = vrot.lane.b32.xlu0 %v547, 112
  %v602 = vpop.permute.xlu0 %601
  %603 = vrot.lane.b32.xlu0 %v551, 112
  %v604 = vpop.permute.xlu0 %603
  %605 = vrot.lane.b32.xlu0 %v555, 112
  %v606 = vpop.permute.xlu0 %605
  %607 = vrot.lane.b32.xlu0 %v559, 112
  %v608 = vpop.permute.xlu0 %607
  %609 = vrot.lane.b32.xlu0 %v532, 112
  %v610 = vpop.permute.xlu0 %609
  %611 = vrot.lane.b32.xlu0 %v536, 112
  %v612 = vpop.permute.xlu0 %611
  %613 = vrot.lane.b32.xlu0 %v540, 112
  %v614 = vpop.permute.xlu0 %613
  %615 = vrot.lane.b32.xlu0 %v544, 112
  %v616 = vpop.permute.xlu0 %615
  %617 = vrot.lane.b32.xlu0 %v548, 112
  %v618 = vpop.permute.xlu0 %617
  %619 = vrot.lane.b32.xlu0 %v552, 112
  %v620 = vpop.permute.xlu0 %619
  %621 = vrot.lane.b32.xlu0 %v556, 112
  %v622 = vpop.permute.xlu0 %621
  %623 = vrot.lane.b32.xlu0 %v560, 112
  %v624 = vpop.permute.xlu0 %623
  %vm625 = vcmp.lt.s32.totalorder %v495, 112
  %v626 = vsel %vm625, %v594, %v610
  %v627 = vsel %vm625, %v596, %v612
  %v628 = vsel %vm625, %v598, %v614
  %v629 = vsel %vm625, %v600, %v616
  %v630 = vsel %vm625, %v602, %v618
  %v631 = vsel %vm625, %v604, %v620
  %v632 = vsel %vm625, %v606, %v622
  %v633 = vsel %vm625, %v608, %v624
  %v634 = vsel %vm625, %v578, %v594
  %v635 = vsel %vm625, %v580, %v596
  %v636 = vsel %vm625, %v582, %v598
  %v637 = vsel %vm625, %v584, %v600
  %v638 = vsel %vm625, %v586, %v602
  %v639 = vsel %vm625, %v588, %v604
  %v640 = vsel %vm625, %v590, %v606
  %v641 = vsel %vm625, %v592, %v608
  %v642 = vsel %vm625, %v562, %v578
  %v643 = vsel %vm625, %v564, %v580
  %v644 = vsel %vm625, %v566, %v582
  %v645 = vsel %vm625, %v568, %v584
  %v646 = vsel %vm625, %v570, %v586
  %v647 = vsel %vm625, %v572, %v588
  %v648 = vsel %vm625, %v574, %v590
  %v649 = vsel %vm625, %v576, %v592
  %v650 = vsel %vm625, %v610, %v562
  %v651 = vsel %vm625, %v612, %v564
  %v652 = vsel %vm625, %v614, %v566
  %v653 = vsel %vm625, %v616, %v568
  %v654 = vsel %vm625, %v618, %v570
  %v655 = vsel %vm625, %v620, %v572
  %v656 = vsel %vm625, %v622, %v574
  %v657 = vsel %vm625, %v624, %v576
  %v658 = vmax.f32 %v529, %v642
  %v659 = vmax.f32 %v530, %v634
  %v660 = vmax.f32 %v531, %v626
  %v661 = vmax.f32 %v532, %v650
  %v662 = vmax.f32 %v533, %v643
  %v663 = vmax.f32 %v534, %v635
  %v664 = vmax.f32 %v535, %v627
  %v665 = vmax.f32 %v536, %v651
  %v666 = vmax.f32 %v537, %v644
  %v667 = vmax.f32 %v538, %v636
  %v668 = vmax.f32 %v539, %v628
  %v669 = vmax.f32 %v540, %v652
  %v670 = vmax.f32 %v541, %v645
  %v671 = vmax.f32 %v542, %v637
  %v672 = vmax.f32 %v543, %v629
  %v673 = vmax.f32 %v544, %v653
  %v674 = vmax.f32 %v545, %v646
  %v675 = vmax.f32 %v546, %v638
  %v676 = vmax.f32 %v547, %v630
  %v677 = vmax.f32 %v548, %v654
  %v678 = vmax.f32 %v549, %v647
  %v679 = vmax.f32 %v550, %v639
  %v680 = vmax.f32 %v551, %v631
  %v681 = vmax.f32 %v552, %v655
  %v682 = vmax.f32 %v553, %v648
  %v683 = vmax.f32 %v554, %v640
  %v684 = vmax.f32 %v555, %v632
  %v685 = vmax.f32 %v556, %v656
  %v686 = vmax.f32 %v557, %v649
  %v687 = vmax.f32 %v558, %v641
  %v688 = vmax.f32 %v559, %v633
  %v689 = vmax.f32 %v560, %v657
  %v690 = vld [vmem:[%s3] sm:$0xff]
  %v691 = vld [vmem:[%s3 + $0x8] sm:$0xff]
  %v692 = vld [vmem:[%s3 + $0x10] sm:$0xff]
  %v693 = vld [vmem:[%s3 + $0x18] sm:$0xff]
  %v694 = vld [vmem:[%s3 + $0x20] sm:$0xff]
  %v695 = vld [vmem:[%s3 + $0x28] sm:$0xff]
  %v696 = vld [vmem:[%s3 + $0x30] sm:$0xff]
  %v697 = vld [vmem:[%s3 + $0x38] sm:$0xff]
  %v698 = vld [vmem:[%s3 + $0x40] sm:$0xff]
  %v699 = vld [vmem:[%s3 + $0x48] sm:$0xff]
  %v700 = vld [vmem:[%s3 + $0x50] sm:$0xff]
  %v701 = vld [vmem:[%s3 + $0x58] sm:$0xff]
  %v702 = vld [vmem:[%s3 + $0x60] sm:$0xff]
  %v703 = vld [vmem:[%s3 + $0x68] sm:$0xff]
  %v704 = vld [vmem:[%s3 + $0x70] sm:$0xff]
  %v705 = vld [vmem:[%s3 + $0x78] sm:$0xff]
  %v706 = vld [vmem:[%s3 + $0x80] sm:$0xff]
  %v707 = vld [vmem:[%s3 + $0x88] sm:$0xff]
  %v708 = vld [vmem:[%s3 + $0x90] sm:$0xff]
  %v709 = vld [vmem:[%s3 + $0x98] sm:$0xff]
  %v710 = vld [vmem:[%s3 + $0xa0] sm:$0xff]
  %v711 = vld [vmem:[%s3 + $0xa8] sm:$0xff]
  %v712 = vld [vmem:[%s3 + $0xb0] sm:$0xff]
  %v713 = vld [vmem:[%s3 + $0xb8] sm:$0xff]
  %v714 = vld [vmem:[%s3 + $0xc0] sm:$0xff]
  %v715 = vld [vmem:[%s3 + $0xc8] sm:$0xff]
  %v716 = vld [vmem:[%s3 + $0xd0] sm:$0xff]
  %v717 = vld [vmem:[%s3 + $0xd8] sm:$0xff]
  %v718 = vld [vmem:[%s3 + $0xe0] sm:$0xff]
  %v719 = vld [vmem:[%s3 + $0xe8] sm:$0xff]
  %v720 = vld [vmem:[%s3 + $0xf0] sm:$0xff]
  %v721 = vld [vmem:[%s3 + $0xf8] sm:$0xff]
  %v722 = vld [vmem:[%s3 + $0x100] sm:$0xff]
  %v723 = vld [vmem:[%s3 + $0x108] sm:$0xff]
  %v724 = vld [vmem:[%s3 + $0x110] sm:$0xff]
  %v725 = vld [vmem:[%s3 + $0x118] sm:$0xff]
  %v726 = vld [vmem:[%s3 + $0x120] sm:$0xff]
  %v727 = vld [vmem:[%s3 + $0x128] sm:$0xff]
  %v728 = vld [vmem:[%s3 + $0x130] sm:$0xff]
  %v729 = vld [vmem:[%s3 + $0x138] sm:$0xff]
  %v730 = vld [vmem:[%s3 + $0x140] sm:$0xff]
  %v731 = vld [vmem:[%s3 + $0x148] sm:$0xff]
  %v732 = vld [vmem:[%s3 + $0x150] sm:$0xff]
  %v733 = vld [vmem:[%s3 + $0x158] sm:$0xff]
  %v734 = vld [vmem:[%s3 + $0x160] sm:$0xff]
  %v735 = vld [vmem:[%s3 + $0x168] sm:$0xff]
  %v736 = vld [vmem:[%s3 + $0x170] sm:$0xff]
  %v737 = vld [vmem:[%s3 + $0x178] sm:$0xff]
  %v738 = vld [vmem:[%s3 + $0x180] sm:$0xff]
  %v739 = vld [vmem:[%s3 + $0x188] sm:$0xff]
  %v740 = vld [vmem:[%s3 + $0x190] sm:$0xff]
  %v741 = vld [vmem:[%s3 + $0x198] sm:$0xff]
  %v742 = vld [vmem:[%s3 + $0x1a0] sm:$0xff]
  %v743 = vld [vmem:[%s3 + $0x1a8] sm:$0xff]
  %v744 = vld [vmem:[%s3 + $0x1b0] sm:$0xff]
  %v745 = vld [vmem:[%s3 + $0x1b8] sm:$0xff]
  %v746 = vld [vmem:[%s3 + $0x1c0] sm:$0xff]
  %v747 = vld [vmem:[%s3 + $0x1c8] sm:$0xff]
  %v748 = vld [vmem:[%s3 + $0x1d0] sm:$0xff]
  %v749 = vld [vmem:[%s3 + $0x1d8] sm:$0xff]
  %v750 = vld [vmem:[%s3 + $0x1e0] sm:$0xff]
  %v751 = vld [vmem:[%s3 + $0x1e8] sm:$0xff]
  %v752 = vld [vmem:[%s3 + $0x1f0] sm:$0xff]
  %v753 = vld [vmem:[%s3 + $0x1f8] sm:$0xff]
  %754 = vmatprep.subr.mxu0 0.0
  %755 = vmatpush1.msra.mxu0 %v690
  %756 = vmatprep.subr.mxu0 0.0
  %757 = vmatpush1.msra.mxu0 %v691
  %758 = vmatprep.subr.mxu0 0.0
  %759 = vmatpush1.msra.mxu0 %v692
  %760 = vmatprep.subr.mxu0 0.0
  %761 = vmatpush1.msra.mxu0 %v693
  %762 = vmatprep.subr.mxu0 0.0
  %763 = vmatpush1.msra.mxu0 %v694
  %764 = vmatprep.subr.mxu0 0.0
  %765 = vmatpush1.msra.mxu0 %v695
  %766 = vmatprep.subr.mxu0 0.0
  %767 = vmatpush1.msra.mxu0 %v696
  %768 = vmatprep.subr.mxu0 0.0
  %769 = vmatpush1.msra.mxu0 %v697
  %770 = vmatprep.subr.mxu0 0.0
  %771 = vmatpush1.msra.mxu0 %v698
  %772 = vmatprep.subr.mxu0 0.0
  %773 = vmatpush1.msra.mxu0 %v699
  %774 = vmatprep.subr.mxu0 0.0
  %775 = vmatpush1.msra.mxu0 %v700
  %776 = vmatprep.subr.mxu0 0.0
  %777 = vmatpush1.msra.mxu0 %v701
  %778 = vmatprep.subr.mxu0 0.0
  %779 = vmatpush1.msra.mxu0 %v702
  %780 = vmatprep.subr.mxu0 0.0
  %781 = vmatpush1.msra.mxu0 %v703
  %782 = vmatprep.subr.mxu0 0.0
  %783 = vmatpush1.msra.mxu0 %v704
  %784 = vmatprep.subr.mxu0 0.0
  %785 = vmatpush1.msra.mxu0 %v705
  %786 = vmatprep.subr.mxu0 0.0
  %787 = vmatpush1.msra.mxu0 %v706
  %788 = vmatprep.subr.mxu0 0.0
  %789 = vmatpush1.msra.mxu0 %v707
  %790 = vmatprep.subr.mxu0 0.0
  %791 = vmatpush1.msra.mxu0 %v708
  %792 = vmatprep.subr.mxu0 0.0
  %793 = vmatpush1.msra.mxu0 %v709
  %794 = vmatprep.subr.mxu0 0.0
  %795 = vmatpush1.msra.mxu0 %v710
  %796 = vmatprep.subr.mxu0 0.0
  %797 = vmatpush1.msra.mxu0 %v711
  %798 = vmatprep.subr.mxu0 0.0
  %799 = vmatpush1.msra.mxu0 %v712
  %800 = vmatprep.subr.mxu0 0.0
  %801 = vmatpush1.msra.mxu0 %v713
  %802 = vmatprep.subr.mxu0 0.0
  %803 = vmatpush1.msra.mxu0 %v714
  %804 = vmatprep.subr.mxu0 0.0
  %805 = vmatpush1.msra.mxu0 %v715
  %806 = vmatprep.subr.mxu0 0.0
  %807 = vmatpush1.msra.mxu0 %v716
  %808 = vmatprep.subr.mxu0 0.0
  %809 = vmatpush1.msra.mxu0 %v717
  %810 = vmatprep.subr.mxu0 0.0
  %811 = vmatpush1.msra.mxu0 %v718
  %812 = vmatprep.subr.mxu0 0.0
  %813 = vmatpush1.msra.mxu0 %v719
  %814 = vmatprep.subr.mxu0 0.0
  %815 = vmatpush1.msra.mxu0 %v720
  %816 = vmatprep.subr.mxu0 0.0
  %817 = vmatpush1.msra.mxu0 %v721
  %818 = vmatprep.mubr.f32.mxu0 %v659
  %819 = vmatmul.mubr.f32.gmra.mrb[0].mxu0 %v658
  %v820 = vpop.f32.mrb[0].mxu0
  %v821 = vadd.f32 0.0, %v820
  %v822 = vpop.f32.mrb[0].mxu0
  %823 = vmatprep.mubr.f32.mxu0 %v663
  %824 = vmatmul.mubr.f32.gmra.mrb[0].mxu0 %v662
  %v825 = vpop.f32.mrb[0].mxu0
  %v826 = vadd.f32 0.0, %v825
  %v827 = vpop.f32.mrb[0].mxu0
  %828 = vmatprep.mubr.f32.mxu0 %v667
  %829 = vmatmul.mubr.f32.gmra.mrb[0].mxu0 %v666
  %v830 = vpop.f32.mrb[0].mxu0
  %v831 = vadd.f32 0.0, %v830
  %v832 = vpop.f32.mrb[0].mxu0
  %833 = vmatprep.mubr.f32.mxu0 %v671
  %834 = vmatmul.mubr.f32.gmra.mrb[0].mxu0 %v670
  %v835 = vpop.f32.mrb[0].mxu0
  %v836 = vadd.f32 0.0, %v835
  %v837 = vpop.f32.mrb[0].mxu0
  %838 = vmatprep.mubr.f32.mxu0 %v675
  %839 = vmatmul.mubr.f32.gmra.mrb[0].mxu0 %v674
  %v840 = vpop.f32.mrb[0].mxu0
  %v841 = vadd.f32 0.0, %v840
  %v842 = vpop.f32.mrb[0].mxu0
  %843 = vmatprep.mubr.f32.mxu0 %v679
  %844 = vmatmul.mubr.f32.gmra.mrb[0].mxu0 %v678
  %v845 = vpop.f32.mrb[0].mxu0
  %v846 = vadd.f32 0.0, %v845
  %v847 = vpop.f32.mrb[0].mxu0
  %848 = vmatprep.mubr.f32.mxu0 %v683
  %849 = vmatmul.mubr.f32.gmra.mrb[0].mxu0 %v682
  %v850 = vpop.f32.mrb[0].mxu0
  %v851 = vadd.f32 0.0, %v850
  %v852 = vpop.f32.mrb[0].mxu0
  %853 = vmatprep.mubr.f32.mxu0 %v687
  %854 = vmatmul.mubr.f32.gmra.mrb[0].mxu0 %v686
  %v855 = vpop.f32.mrb[0].mxu0
  %v856 = vadd.f32 0.0, %v855
  %v857 = vpop.f32.mrb[0].mxu0
  %858 = vdwg.mxu0
  %859 = vmatprep.subr.mxu0 0.0
  %860 = vmatpush1.msra.mxu0 %v722
  %861 = vmatprep.subr.mxu0 0.0
  %862 = vmatpush1.msra.mxu0 %v723
  %863 = vmatprep.subr.mxu0 0.0
  %864 = vmatpush1.msra.mxu0 %v724
  %865 = vmatprep.subr.mxu0 0.0
  %866 = vmatpush1.msra.mxu0 %v725
  %867 = vmatprep.subr.mxu0 0.0
  %868 = vmatpush1.msra.mxu0 %v726
  %869 = vmatprep.subr.mxu0 0.0
  %870 = vmatpush1.msra.mxu0 %v727
  %871 = vmatprep.subr.mxu0 0.0
  %872 = vmatpush1.msra.mxu0 %v728
  %873 = vmatprep.subr.mxu0 0.0
  %874 = vmatpush1.msra.mxu0 %v729
  %875 = vmatprep.subr.mxu0 0.0
  %876 = vmatpush1.msra.mxu0 %v730
  %877 = vmatprep.subr.mxu0 0.0
  %878 = vmatpush1.msra.mxu0 %v731
  %879 = vmatprep.subr.mxu0 0.0
  %880 = vmatpush1.msra.mxu0 %v732
  %881 = vmatprep.subr.mxu0 0.0
  %882 = vmatpush1.msra.mxu0 %v733
  %883 = vmatprep.subr.mxu0 0.0
  %884 = vmatpush1.msra.mxu0 %v734
  %885 = vmatprep.subr.mxu0 0.0
  %886 = vmatpush1.msra.mxu0 %v735
  %887 = vmatprep.subr.mxu0 0.0
  %888 = vmatpush1.msra.mxu0 %v736
  %889 = vmatprep.subr.mxu0 0.0
  %890 = vmatpush1.msra.mxu0 %v737
  %891 = vmatprep.subr.mxu0 0.0
  %892 = vmatpush1.msra.mxu0 %v738
  %893 = vmatprep.subr.mxu0 0.0
  %894 = vmatpush1.msra.mxu0 %v739
  %895 = vmatprep.subr.mxu0 0.0
  %896 = vmatpush1.msra.mxu0 %v740
  %897 = vmatprep.subr.mxu0 0.0
  %898 = vmatpush1.msra.mxu0 %v741
  %899 = vmatprep.subr.mxu0 0.0
  %900 = vmatpush1.msra.mxu0 %v742
  %901 = vmatprep.subr.mxu0 0.0
  %902 = vmatpush1.msra.mxu0 %v743
  %903 = vmatprep.subr.mxu0 0.0
  %904 = vmatpush1.msra.mxu0 %v744
  %905 = vmatprep.subr.mxu0 0.0
  %906 = vmatpush1.msra.mxu0 %v745
  %907 = vmatprep.subr.mxu0 0.0
  %908 = vmatpush1.msra.mxu0 %v746
  %909 = vmatprep.subr.mxu0 0.0
  %910 = vmatpush1.msra.mxu0 %v747
  %911 = vmatprep.subr.mxu0 0.0
  %912 = vmatpush1.msra.mxu0 %v748
  %913 = vmatprep.subr.mxu0 0.0
  %914 = vmatpush1.msra.mxu0 %v749
  %915 = vmatprep.subr.mxu0 0.0
  %916 = vmatpush1.msra.mxu0 %v750
  %917 = vmatprep.subr.mxu0 0.0
  %918 = vmatpush1.msra.mxu0 %v751
  %919 = vmatprep.subr.mxu0 0.0
  %920 = vmatpush1.msra.mxu0 %v752
  %921 = vmatprep.subr.mxu0 0.0
  %922 = vmatpush1.msra.mxu0 %v753
  %923 = vmatprep.mubr.f32.mxu0 %v661
  %924 = vmatmul.mubr.f32.gmra.mrb[0].mxu0 %v660
  %v925 = vpop.f32.mrb[0].mxu0
  %v926 = vadd.f32 %v821, %v925
  %v927 = vpop.f32.mrb[0].mxu0
  %928 = vmatprep.mubr.f32.mxu0 %v665
  %929 = vmatmul.mubr.f32.gmra.mrb[0].mxu0 %v664
  %v930 = vpop.f32.mrb[0].mxu0
  %v931 = vadd.f32 %v826, %v930
  %v932 = vpop.f32.mrb[0].mxu0
  %933 = vmatprep.mubr.f32.mxu0 %v669
  %934 = vmatmul.mubr.f32.gmra.mrb[0].mxu0 %v668
  %v935 = vpop.f32.mrb[0].mxu0
  %v936 = vadd.f32 %v831, %v935
  %v937 = vpop.f32.mrb[0].mxu0
  %938 = vmatprep.mubr.f32.mxu0 %v673
  %939 = vmatmul.mubr.f32.gmra.mrb[0].mxu0 %v672
  %v940 = vpop.f32.mrb[0].mxu0
  %v941 = vadd.f32 %v836, %v940
  %v942 = vpop.f32.mrb[0].mxu0
  %943 = vmatprep.mubr.f32.mxu0 %v677
  %944 = vmatmul.mubr.f32.gmra.mrb[0].mxu0 %v676
  %v945 = vpop.f32.mrb[0].mxu0
  %v946 = vadd.f32 %v841, %v945
  %v947 = vpop.f32.mrb[0].mxu0
  %948 = vmatprep.mubr.f32.mxu0 %v681
  %949 = vmatmul.mubr.f32.gmra.mrb[0].mxu0 %v680
  %v950 = vpop.f32.mrb[0].mxu0
  %v951 = vadd.f32 %v846, %v950
  %v952 = vpop.f32.mrb[0].mxu0
  %953 = vmatprep.mubr.f32.mxu0 %v685
  %954 = vmatmul.mubr.f32.gmra.mrb[0].mxu0 %v684
  %v955 = vpop.f32.mrb[0].mxu0
  %v956 = vadd.f32 %v851, %v955
  %v957 = vpop.f32.mrb[0].mxu0
  %958 = vmatprep.mubr.f32.mxu0 %v689
  %959 = vmatmul.mubr.f32.gmra.mrb[0].mxu0 %v688
  %v960 = vpop.f32.mrb[0].mxu0
  %v961 = vadd.f32 %v856, %v960
  %v962 = vpop.f32.mrb[0].mxu0
  %963 = vdwg.mxu0
  %964 = vrot.lane.b32.xlu0 %v926, 18
  %v965 = vpop.permute.xlu0 %964
  %966 = vrot.lane.b32.xlu0 %v931, 18
  %v967 = vpop.permute.xlu0 %966
  %968 = vrot.lane.b32.xlu0 %v936, 18
  %v969 = vpop.permute.xlu0 %968
  %970 = vrot.lane.b32.xlu0 %v941, 18
  %v971 = vpop.permute.xlu0 %970
  %972 = vrot.lane.b32.xlu0 %v946, 18
  %v973 = vpop.permute.xlu0 %972
  %974 = vrot.lane.b32.xlu0 %v951, 18
  %v975 = vpop.permute.xlu0 %974
  %976 = vrot.lane.b32.xlu0 %v956, 18
  %v977 = vpop.permute.xlu0 %976
  %978 = vrot.lane.b32.xlu0 %v961, 18
  %v979 = vpop.permute.xlu0 %978
  %v980 = vld [vmem:[%s4] sm:$0x1]
  %v981 = vlaneseq
  %v982 = vshrl.u32 %v981, 7
  %v983 = vsub.s32 0, %v982
  %v984 = vrot.slane %v980, %v983
  %v985 = vmul.f32 %v965, %v984
  %v986 = vmul.f32 %v967, %v984
  %v987 = vmul.f32 %v969, %v984
  %v988 = vmul.f32 %v971, %v984
  %v989 = vmul.f32 %v973, %v984
  %v990 = vmul.f32 %v975, %v984
  %v991 = vmul.f32 %v977, %v984
  %v992 = vmul.f32 %v979, %v984
  %993 = vst [vmem:[#allocation2] sm:$0xff] %v985
  %994 = vst [vmem:[#allocation2 + $0x8] sm:$0xff] %v986
  %995 = vst [vmem:[#allocation2 + $0x10] sm:$0xff] %v987
  %996 = vst [vmem:[#allocation2 + $0x18] sm:$0xff] %v988
  %997 = vst [vmem:[#allocation2 + $0x20] sm:$0xff] %v989
  %998 = vst [vmem:[#allocation2 + $0x28] sm:$0xff] %v990
  %999 = vst [vmem:[#allocation2 + $0x30] sm:$0xff] %v991
  %1000 = vst [vmem:[#allocation2 + $0x38] sm:$0xff] %v992
  %1001 = vrot.lane.b32.xlu0 %v926, 17
  %v1002 = vpop.permute.xlu0 %1001
  %1003 = vrot.lane.b32.xlu0 %v931, 17
  %v1004 = vpop.permute.xlu0 %1003
  %1005 = vrot.lane.b32.xlu0 %v936, 17
  %v1006 = vpop.permute.xlu0 %1005
  %1007 = vrot.lane.b32.xlu0 %v941, 17
  %v1008 = vpop.permute.xlu0 %1007
  %1009 = vrot.lane.b32.xlu0 %v946, 17
  %v1010 = vpop.permute.xlu0 %1009
  %1011 = vrot.lane.b32.xlu0 %v951, 17
  %v1012 = vpop.permute.xlu0 %1011
  %1013 = vrot.lane.b32.xlu0 %v956, 17
  %v1014 = vpop.permute.xlu0 %1013
  %1015 = vrot.lane.b32.xlu0 %v961, 17
  %v1016 = vpop.permute.xlu0 %1015
  %v1017 = vld [vmem:[%s4 + $0x1] sm:$0x1]
  %v1018 = vlaneseq
  %v1019 = vshrl.u32 %v1018, 7
  %v1020 = vsub.s32 0, %v1019
  %v1021 = vrot.slane %v1017, %v1020
  %v1022 = vmul.f32 %v1002, %v1021
  %v1023 = vmul.f32 %v1004, %v1021
  %v1024 = vmul.f32 %v1006, %v1021
  %v1025 = vmul.f32 %v1008, %v1021
  %v1026 = vmul.f32 %v1010, %v1021
  %v1027 = vmul.f32 %v1012, %v1021
  %v1028 = vmul.f32 %v1014, %v1021
  %v1029 = vmul.f32 %v1016, %v1021
  %1030 = vst [vmem:[#allocation2 + $0x40] sm:$0xff] %v1022
  %1031 = vst [vmem:[#allocation2 + $0x48] sm:$0xff] %v1023
  %1032 = vst [vmem:[#allocation2 + $0x50] sm:$0xff] %v1024
  %1033 = vst [vmem:[#allocation2 + $0x58] sm:$0xff] %v1025
  %1034 = vst [vmem:[#allocation2 + $0x60] sm:$0xff] %v1026
  %1035 = vst [vmem:[#allocation2 + $0x68] sm:$0xff] %v1027
  %1036 = vst [vmem:[#allocation2 + $0x70] sm:$0xff] %v1028
  %1037 = vst [vmem:[#allocation2 + $0x78] sm:$0xff] %v1029
  %1038 = vrot.lane.b32.xlu0 %v926, 16
  %v1039 = vpop.permute.xlu0 %1038
  %1040 = vrot.lane.b32.xlu0 %v931, 16
  %v1041 = vpop.permute.xlu0 %1040
  %1042 = vrot.lane.b32.xlu0 %v936, 16
  %v1043 = vpop.permute.xlu0 %1042
  %1044 = vrot.lane.b32.xlu0 %v941, 16
  %v1045 = vpop.permute.xlu0 %1044
  %1046 = vrot.lane.b32.xlu0 %v946, 16
  %v1047 = vpop.permute.xlu0 %1046
  %1048 = vrot.lane.b32.xlu0 %v951, 16
  %v1049 = vpop.permute.xlu0 %1048
  %1050 = vrot.lane.b32.xlu0 %v956, 16
  %v1051 = vpop.permute.xlu0 %1050
  %1052 = vrot.lane.b32.xlu0 %v961, 16
  %v1053 = vpop.permute.xlu0 %1052
  %v1054 = vld [vmem:[%s4 + $0x2] sm:$0x1]
  %v1055 = vlaneseq
  %v1056 = vshrl.u32 %v1055, 7
  %v1057 = vsub.s32 0, %v1056
  %v1058 = vrot.slane %v1054, %v1057
  %v1059 = vmul.f32 %v1039, %v1058
  %v1060 = vmul.f32 %v1041, %v1058
  %v1061 = vmul.f32 %v1043, %v1058
  %v1062 = vmul.f32 %v1045, %v1058
  %v1063 = vmul.f32 %v1047, %v1058
  %v1064 = vmul.f32 %v1049, %v1058
  %v1065 = vmul.f32 %v1051, %v1058
  %v1066 = vmul.f32 %v1053, %v1058
  %1067 = vst [vmem:[#allocation2 + $0x80] sm:$0xff] %v1059
  %1068 = vst [vmem:[#allocation2 + $0x88] sm:$0xff] %v1060
  %1069 = vst [vmem:[#allocation2 + $0x90] sm:$0xff] %v1061
  %1070 = vst [vmem:[#allocation2 + $0x98] sm:$0xff] %v1062
  %1071 = vst [vmem:[#allocation2 + $0xa0] sm:$0xff] %v1063
  %1072 = vst [vmem:[#allocation2 + $0xa8] sm:$0xff] %v1064
  %1073 = vst [vmem:[#allocation2 + $0xb0] sm:$0xff] %v1065
  %1074 = vst [vmem:[#allocation2 + $0xb8] sm:$0xff] %v1066
  %1075 = vrot.lane.b32.xlu0 %v926, 15
  %v1076 = vpop.permute.xlu0 %1075
  %1077 = vrot.lane.b32.xlu0 %v931, 15
  %v1078 = vpop.permute.xlu0 %1077
  %1079 = vrot.lane.b32.xlu0 %v936, 15
  %v1080 = vpop.permute.xlu0 %1079
  %1081 = vrot.lane.b32.xlu0 %v941, 15
  %v1082 = vpop.permute.xlu0 %1081
  %1083 = vrot.lane.b32.xlu0 %v946, 15
  %v1084 = vpop.permute.xlu0 %1083
  %1085 = vrot.lane.b32.xlu0 %v951, 15
  %v1086 = vpop.permute.xlu0 %1085
  %1087 = vrot.lane.b32.xlu0 %v956, 15
  %v1088 = vpop.permute.xlu0 %1087
  %1089 = vrot.lane.b32.xlu0 %v961, 15
  %v1090 = vpop.permute.xlu0 %1089
  %v1091 = vld [vmem:[%s4 + $0x3] sm:$0x1]
  %v1092 = vlaneseq
  %v1093 = vshrl.u32 %v1092, 7
  %v1094 = vsub.s32 0, %v1093
  %v1095 = vrot.slane %v1091, %v1094
  %v1096 = vmul.f32 %v1076, %v1095
  %v1097 = vmul.f32 %v1078, %v1095
  %v1098 = vmul.f32 %v1080, %v1095
  %v1099 = vmul.f32 %v1082, %v1095
  %v1100 = vmul.f32 %v1084, %v1095
  %v1101 = vmul.f32 %v1086, %v1095
  %v1102 = vmul.f32 %v1088, %v1095
  %v1103 = vmul.f32 %v1090, %v1095
  %1104 = vst [vmem:[#allocation2 + $0xc0] sm:$0xff] %v1096
  %1105 = vst [vmem:[#allocation2 + $0xc8] sm:$0xff] %v1097
  %1106 = vst [vmem:[#allocation2 + $0xd0] sm:$0xff] %v1098
  %1107 = vst [vmem:[#allocation2 + $0xd8] sm:$0xff] %v1099
  %1108 = vst [vmem:[#allocation2 + $0xe0] sm:$0xff] %v1100
  %1109 = vst [vmem:[#allocation2 + $0xe8] sm:$0xff] %v1101
  %1110 = vst [vmem:[#allocation2 + $0xf0] sm:$0xff] %v1102
  %1111 = vst [vmem:[#allocation2 + $0xf8] sm:$0xff] %v1103
  %1112 = vrot.lane.b32.xlu0 %v926, 14
  %v1113 = vpop.permute.xlu0 %1112
  %1114 = vrot.lane.b32.xlu0 %v931, 14
  %v1115 = vpop.permute.xlu0 %1114
  %1116 = vrot.lane.b32.xlu0 %v936, 14
  %v1117 = vpop.permute.xlu0 %1116
  %1118 = vrot.lane.b32.xlu0 %v941, 14
  %v1119 = vpop.permute.xlu0 %1118
  %1120 = vrot.lane.b32.xlu0 %v946, 14
  %v1121 = vpop.permute.xlu0 %1120
  %1122 = vrot.lane.b32.xlu0 %v951, 14
  %v1123 = vpop.permute.xlu0 %1122
  %1124 = vrot.lane.b32.xlu0 %v956, 14
  %v1125 = vpop.permute.xlu0 %1124
  %1126 = vrot.lane.b32.xlu0 %v961, 14
  %v1127 = vpop.permute.xlu0 %1126
  %v1128 = vld [vmem:[%s4 + $0x4] sm:$0x1]
  %v1129 = vlaneseq
  %v1130 = vshrl.u32 %v1129, 7
  %v1131 = vsub.s32 0, %v1130
  %v1132 = vrot.slane %v1128, %v1131
  %v1133 = vmul.f32 %v1113, %v1132
  %v1134 = vmul.f32 %v1115, %v1132
  %v1135 = vmul.f32 %v1117, %v1132
  %v1136 = vmul.f32 %v1119, %v1132
  %v1137 = vmul.f32 %v1121, %v1132
  %v1138 = vmul.f32 %v1123, %v1132
  %v1139 = vmul.f32 %v1125, %v1132
  %v1140 = vmul.f32 %v1127, %v1132
  %1141 = vst [vmem:[#allocation2 + $0x100] sm:$0xff] %v1133
  %1142 = vst [vmem:[#allocation2 + $0x108] sm:$0xff] %v1134
  %1143 = vst [vmem:[#allocation2 + $0x110] sm:$0xff] %v1135
  %1144 = vst [vmem:[#allocation2 + $0x118] sm:$0xff] %v1136
  %1145 = vst [vmem:[#allocation2 + $0x120] sm:$0xff] %v1137
  %1146 = vst [vmem:[#allocation2 + $0x128] sm:$0xff] %v1138
  %1147 = vst [vmem:[#allocation2 + $0x130] sm:$0xff] %v1139
  %1148 = vst [vmem:[#allocation2 + $0x138] sm:$0xff] %v1140
  %1149 = vrot.lane.b32.xlu0 %v926, 10
  %v1150 = vpop.permute.xlu0 %1149
  %1151 = vrot.lane.b32.xlu0 %v931, 10
  %v1152 = vpop.permute.xlu0 %1151
  %1153 = vrot.lane.b32.xlu0 %v936, 10
  %v1154 = vpop.permute.xlu0 %1153
  %1155 = vrot.lane.b32.xlu0 %v941, 10
  %v1156 = vpop.permute.xlu0 %1155
  %1157 = vrot.lane.b32.xlu0 %v946, 10
  %v1158 = vpop.permute.xlu0 %1157
  %1159 = vrot.lane.b32.xlu0 %v951, 10
  %v1160 = vpop.permute.xlu0 %1159
  %1161 = vrot.lane.b32.xlu0 %v956, 10
  %v1162 = vpop.permute.xlu0 %1161
  %1163 = vrot.lane.b32.xlu0 %v961, 10
  %v1164 = vpop.permute.xlu0 %1163
  %v1165 = vld [vmem:[%s4 + $0x5] sm:$0x1]
  %v1166 = vlaneseq
  %v1167 = vshrl.u32 %v1166, 7
  %v1168 = vsub.s32 0, %v1167
  %v1169 = vrot.slane %v1165, %v1168
  %v1170 = vmul.f32 %v1150, %v1169
  %v1171 = vmul.f32 %v1152, %v1169
  %v1172 = vmul.f32 %v1154, %v1169
  %v1173 = vmul.f32 %v1156, %v1169
  %v1174 = vmul.f32 %v1158, %v1169
  %v1175 = vmul.f32 %v1160, %v1169
  %v1176 = vmul.f32 %v1162, %v1169
  %v1177 = vmul.f32 %v1164, %v1169
  %1178 = vst [vmem:[#allocation2 + $0x140] sm:$0xff] %v1170
  %1179 = vst [vmem:[#allocation2 + $0x148] sm:$0xff] %v1171
  %1180 = vst [vmem:[#allocation2 + $0x150] sm:$0xff] %v1172
  %1181 = vst [vmem:[#allocation2 + $0x158] sm:$0xff] %v1173
  %1182 = vst [vmem:[#allocation2 + $0x160] sm:$0xff] %v1174
  %1183 = vst [vmem:[#allocation2 + $0x168] sm:$0xff] %v1175
  %1184 = vst [vmem:[#allocation2 + $0x170] sm:$0xff] %v1176
  %1185 = vst [vmem:[#allocation2 + $0x178] sm:$0xff] %v1177
  %1186 = vrot.lane.b32.xlu0 %v926, 9
  %v1187 = vpop.permute.xlu0 %1186
  %1188 = vrot.lane.b32.xlu0 %v931, 9
  %v1189 = vpop.permute.xlu0 %1188
  %1190 = vrot.lane.b32.xlu0 %v936, 9
  %v1191 = vpop.permute.xlu0 %1190
  %1192 = vrot.lane.b32.xlu0 %v941, 9
  %v1193 = vpop.permute.xlu0 %1192
  %1194 = vrot.lane.b32.xlu0 %v946, 9
  %v1195 = vpop.permute.xlu0 %1194
  %1196 = vrot.lane.b32.xlu0 %v951, 9
  %v1197 = vpop.permute.xlu0 %1196
  %1198 = vrot.lane.b32.xlu0 %v956, 9
  %v1199 = vpop.permute.xlu0 %1198
  %1200 = vrot.lane.b32.xlu0 %v961, 9
  %v1201 = vpop.permute.xlu0 %1200
  %v1202 = vld [vmem:[%s4 + $0x6] sm:$0x1]
  %v1203 = vlaneseq
  %v1204 = vshrl.u32 %v1203, 7
  %v1205 = vsub.s32 0, %v1204
  %v1206 = vrot.slane %v1202, %v1205
  %v1207 = vmul.f32 %v1187, %v1206
  %v1208 = vmul.f32 %v1189, %v1206
  %v1209 = vmul.f32 %v1191, %v1206
  %v1210 = vmul.f32 %v1193, %v1206
  %v1211 = vmul.f32 %v1195, %v1206
  %v1212 = vmul.f32 %v1197, %v1206
  %v1213 = vmul.f32 %v1199, %v1206
  %v1214 = vmul.f32 %v1201, %v1206
  %1215 = vst [vmem:[#allocation2 + $0x180] sm:$0xff] %v1207
  %1216 = vst [vmem:[#allocation2 + $0x188] sm:$0xff] %v1208
  %1217 = vst [vmem:[#allocation2 + $0x190] sm:$0xff] %v1209
  %1218 = vst [vmem:[#allocation2 + $0x198] sm:$0xff] %v1210
  %1219 = vst [vmem:[#allocation2 + $0x1a0] sm:$0xff] %v1211
  %1220 = vst [vmem:[#allocation2 + $0x1a8] sm:$0xff] %v1212
  %1221 = vst [vmem:[#allocation2 + $0x1b0] sm:$0xff] %v1213
  %1222 = vst [vmem:[#allocation2 + $0x1b8] sm:$0xff] %v1214
  %1223 = vrot.lane.b32.xlu0 %v926, 8
  %v1224 = vpop.permute.xlu0 %1223
  %1225 = vrot.lane.b32.xlu0 %v931, 8
  %v1226 = vpop.permute.xlu0 %1225
  %1227 = vrot.lane.b32.xlu0 %v936, 8
  %v1228 = vpop.permute.xlu0 %1227
  %1229 = vrot.lane.b32.xlu0 %v941, 8
  %v1230 = vpop.permute.xlu0 %1229
  %1231 = vrot.lane.b32.xlu0 %v946, 8
  %v1232 = vpop.permute.xlu0 %1231
  %1233 = vrot.lane.b32.xlu0 %v951, 8
  %v1234 = vpop.permute.xlu0 %1233
  %1235 = vrot.lane.b32.xlu0 %v956, 8
  %v1236 = vpop.permute.xlu0 %1235
  %1237 = vrot.lane.b32.xlu0 %v961, 8
  %v1238 = vpop.permute.xlu0 %1237
  %v1239 = vld [vmem:[%s4 + $0x7] sm:$0x1]
  %v1240 = vlaneseq
  %v1241 = vshrl.u32 %v1240, 7
  %v1242 = vsub.s32 0, %v1241
  %v1243 = vrot.slane %v1239, %v1242
  %v1244 = vmul.f32 %v1224, %v1243
  %v1245 = vmul.f32 %v1226, %v1243
  %v1246 = vmul.f32 %v1228, %v1243
  %v1247 = vmul.f32 %v1230, %v1243
  %v1248 = vmul.f32 %v1232, %v1243
  %v1249 = vmul.f32 %v1234, %v1243
  %v1250 = vmul.f32 %v1236, %v1243
  %v1251 = vmul.f32 %v1238, %v1243
  %1252 = vst [vmem:[#allocation2 + $0x1c0] sm:$0xff] %v1244
  %1253 = vst [vmem:[#allocation2 + $0x1c8] sm:$0xff] %v1245
  %1254 = vst [vmem:[#allocation2 + $0x1d0] sm:$0xff] %v1246
  %1255 = vst [vmem:[#allocation2 + $0x1d8] sm:$0xff] %v1247
  %1256 = vst [vmem:[#allocation2 + $0x1e0] sm:$0xff] %v1248
  %1257 = vst [vmem:[#allocation2 + $0x1e8] sm:$0xff] %v1249
  %1258 = vst [vmem:[#allocation2 + $0x1f0] sm:$0xff] %v1250
  %1259 = vst [vmem:[#allocation2 + $0x1f8] sm:$0xff] %v1251
  %1260 = vrot.lane.b32.xlu0 %v926, 7
  %v1261 = vpop.permute.xlu0 %1260
  %1262 = vrot.lane.b32.xlu0 %v931, 7
  %v1263 = vpop.permute.xlu0 %1262
  %1264 = vrot.lane.b32.xlu0 %v936, 7
  %v1265 = vpop.permute.xlu0 %1264
  %1266 = vrot.lane.b32.xlu0 %v941, 7
  %v1267 = vpop.permute.xlu0 %1266
  %1268 = vrot.lane.b32.xlu0 %v946, 7
  %v1269 = vpop.permute.xlu0 %1268
  %1270 = vrot.lane.b32.xlu0 %v951, 7
  %v1271 = vpop.permute.xlu0 %1270
  %1272 = vrot.lane.b32.xlu0 %v956, 7
  %v1273 = vpop.permute.xlu0 %1272
  %1274 = vrot.lane.b32.xlu0 %v961, 7
  %v1275 = vpop.permute.xlu0 %1274
  %v1276 = vld [vmem:[%s4 + $0x8] sm:$0x1]
  %v1277 = vlaneseq
  %v1278 = vshrl.u32 %v1277, 7
  %v1279 = vsub.s32 0, %v1278
  %v1280 = vrot.slane %v1276, %v1279
  %v1281 = vmul.f32 %v1261, %v1280
  %v1282 = vmul.f32 %v1263, %v1280
  %v1283 = vmul.f32 %v1265, %v1280
  %v1284 = vmul.f32 %v1267, %v1280
  %v1285 = vmul.f32 %v1269, %v1280
  %v1286 = vmul.f32 %v1271, %v1280
  %v1287 = vmul.f32 %v1273, %v1280
  %v1288 = vmul.f32 %v1275, %v1280
  %1289 = vst [vmem:[#allocation2 + $0x200] sm:$0xff] %v1281
  %1290 = vst [vmem:[#allocation2 + $0x208] sm:$0xff] %v1282
  %1291 = vst [vmem:[#allocation2 + $0x210] sm:$0xff] %v1283
  %1292 = vst [vmem:[#allocation2 + $0x218] sm:$0xff] %v1284
  %1293 = vst [vmem:[#allocation2 + $0x220] sm:$0xff] %v1285
  %1294 = vst [vmem:[#allocation2 + $0x228] sm:$0xff] %v1286
  %1295 = vst [vmem:[#allocation2 + $0x230] sm:$0xff] %v1287
  %1296 = vst [vmem:[#allocation2 + $0x238] sm:$0xff] %v1288
  %1297 = vrot.lane.b32.xlu0 %v926, 6
  %v1298 = vpop.permute.xlu0 %1297
  %1299 = vrot.lane.b32.xlu0 %v931, 6
  %v1300 = vpop.permute.xlu0 %1299
  %1301 = vrot.lane.b32.xlu0 %v936, 6
  %v1302 = vpop.permute.xlu0 %1301
  %1303 = vrot.lane.b32.xlu0 %v941, 6
  %v1304 = vpop.permute.xlu0 %1303
  %1305 = vrot.lane.b32.xlu0 %v946, 6
  %v1306 = vpop.permute.xlu0 %1305
  %1307 = vrot.lane.b32.xlu0 %v951, 6
  %v1308 = vpop.permute.xlu0 %1307
  %1309 = vrot.lane.b32.xlu0 %v956, 6
  %v1310 = vpop.permute.xlu0 %1309
  %1311 = vrot.lane.b32.xlu0 %v961, 6
  %v1312 = vpop.permute.xlu0 %1311
  %v1313 = vld [vmem:[%s4 + $0x9] sm:$0x1]
  %v1314 = vlaneseq
  %v1315 = vshrl.u32 %v1314, 7
  %v1316 = vsub.s32 0, %v1315
  %v1317 = vrot.slane %v1313, %v1316
  %v1318 = vmul.f32 %v1298, %v1317
  %v1319 = vmul.f32 %v1300, %v1317
  %v1320 = vmul.f32 %v1302, %v1317
  %v1321 = vmul.f32 %v1304, %v1317
  %v1322 = vmul.f32 %v1306, %v1317
  %v1323 = vmul.f32 %v1308, %v1317
  %v1324 = vmul.f32 %v1310, %v1317
  %v1325 = vmul.f32 %v1312, %v1317
  %1326 = vst [vmem:[#allocation2 + $0x240] sm:$0xff] %v1318
  %1327 = vst [vmem:[#allocation2 + $0x248] sm:$0xff] %v1319
  %1328 = vst [vmem:[#allocation2 + $0x250] sm:$0xff] %v1320
  %1329 = vst [vmem:[#allocation2 + $0x258] sm:$0xff] %v1321
  %1330 = vst [vmem:[#allocation2 + $0x260] sm:$0xff] %v1322
  %1331 = vst [vmem:[#allocation2 + $0x268] sm:$0xff] %v1323
  %1332 = vst [vmem:[#allocation2 + $0x270] sm:$0xff] %v1324
  %1333 = vst [vmem:[#allocation2 + $0x278] sm:$0xff] %v1325
  %1334 = vrot.lane.b32.xlu0 %v926, 2
  %v1335 = vpop.permute.xlu0 %1334
  %1336 = vrot.lane.b32.xlu0 %v931, 2
  %v1337 = vpop.permute.xlu0 %1336
  %1338 = vrot.lane.b32.xlu0 %v936, 2
  %v1339 = vpop.permute.xlu0 %1338
  %1340 = vrot.lane.b32.xlu0 %v941, 2
  %v1341 = vpop.permute.xlu0 %1340
  %1342 = vrot.lane.b32.xlu0 %v946, 2
  %v1343 = vpop.permute.xlu0 %1342
  %1344 = vrot.lane.b32.xlu0 %v951, 2
  %v1345 = vpop.permute.xlu0 %1344
  %1346 = vrot.lane.b32.xlu0 %v956, 2
  %v1347 = vpop.permute.xlu0 %1346
  %1348 = vrot.lane.b32.xlu0 %v961, 2
  %v1349 = vpop.permute.xlu0 %1348
  %v1350 = vld [vmem:[%s4 + $0xa] sm:$0x1]
  %v1351 = vlaneseq
  %v1352 = vshrl.u32 %v1351, 7
  %v1353 = vsub.s32 0, %v1352
  %v1354 = vrot.slane %v1350, %v1353
  %v1355 = vmul.f32 %v1335, %v1354
  %v1356 = vmul.f32 %v1337, %v1354
  %v1357 = vmul.f32 %v1339, %v1354
  %v1358 = vmul.f32 %v1341, %v1354
  %v1359 = vmul.f32 %v1343, %v1354
  %v1360 = vmul.f32 %v1345, %v1354
  %v1361 = vmul.f32 %v1347, %v1354
  %v1362 = vmul.f32 %v1349, %v1354
  %1363 = vst [vmem:[#allocation2 + $0x280] sm:$0xff] %v1355
  %1364 = vst [vmem:[#allocation2 + $0x288] sm:$0xff] %v1356
  %1365 = vst [vmem:[#allocation2 + $0x290] sm:$0xff] %v1357
  %1366 = vst [vmem:[#allocation2 + $0x298] sm:$0xff] %v1358
  %1367 = vst [vmem:[#allocation2 + $0x2a0] sm:$0xff] %v1359
  %1368 = vst [vmem:[#allocation2 + $0x2a8] sm:$0xff] %v1360
  %1369 = vst [vmem:[#allocation2 + $0x2b0] sm:$0xff] %v1361
  %1370 = vst [vmem:[#allocation2 + $0x2b8] sm:$0xff] %v1362
  %1371 = vrot.lane.b32.xlu0 %v926, 1
  %v1372 = vpop.permute.xlu0 %1371
  %1373 = vrot.lane.b32.xlu0 %v931, 1
  %v1374 = vpop.permute.xlu0 %1373
  %1375 = vrot.lane.b32.xlu0 %v936, 1
  %v1376 = vpop.permute.xlu0 %1375
  %1377 = vrot.lane.b32.xlu0 %v941, 1
  %v1378 = vpop.permute.xlu0 %1377
  %1379 = vrot.lane.b32.xlu0 %v946, 1
  %v1380 = vpop.permute.xlu0 %1379
  %1381 = vrot.lane.b32.xlu0 %v951, 1
  %v1382 = vpop.permute.xlu0 %1381
  %1383 = vrot.lane.b32.xlu0 %v956, 1
  %v1384 = vpop.permute.xlu0 %1383
  %1385 = vrot.lane.b32.xlu0 %v961, 1
  %v1386 = vpop.permute.xlu0 %1385
  %v1387 = vld [vmem:[%s4 + $0xb] sm:$0x1]
  %v1388 = vlaneseq
  %v1389 = vshrl.u32 %v1388, 7
  %v1390 = vsub.s32 0, %v1389
  %v1391 = vrot.slane %v1387, %v1390
  %v1392 = vmul.f32 %v1372, %v1391
  %v1393 = vmul.f32 %v1374, %v1391
  %v1394 = vmul.f32 %v1376, %v1391
  %v1395 = vmul.f32 %v1378, %v1391
  %v1396 = vmul.f32 %v1380, %v1391
  %v1397 = vmul.f32 %v1382, %v1391
  %v1398 = vmul.f32 %v1384, %v1391
  %v1399 = vmul.f32 %v1386, %v1391
  %1400 = vst [vmem:[#allocation2 + $0x2c0] sm:$0xff] %v1392
  %1401 = vst [vmem:[#allocation2 + $0x2c8] sm:$0xff] %v1393
  %1402 = vst [vmem:[#allocation2 + $0x2d0] sm:$0xff] %v1394
  %1403 = vst [vmem:[#allocation2 + $0x2d8] sm:$0xff] %v1395
  %1404 = vst [vmem:[#allocation2 + $0x2e0] sm:$0xff] %v1396
  %1405 = vst [vmem:[#allocation2 + $0x2e8] sm:$0xff] %v1397
  %1406 = vst [vmem:[#allocation2 + $0x2f0] sm:$0xff] %v1398
  %1407 = vst [vmem:[#allocation2 + $0x2f8] sm:$0xff] %v1399
  %v1408 = vld [vmem:[%s4 + $0xc] sm:$0x1]
  %v1409 = vlaneseq
  %v1410 = vshrl.u32 %v1409, 7
  %v1411 = vsub.s32 0, %v1410
  %v1412 = vrot.slane %v1408, %v1411
  %v1413 = vmul.f32 %v926, %v1412
  %v1414 = vmul.f32 %v931, %v1412
  %v1415 = vmul.f32 %v936, %v1412
  %v1416 = vmul.f32 %v941, %v1412
  %v1417 = vmul.f32 %v946, %v1412
  %v1418 = vmul.f32 %v951, %v1412
  %v1419 = vmul.f32 %v956, %v1412
  %v1420 = vmul.f32 %v961, %v1412
  %1421 = vst [vmem:[#allocation2 + $0x300] sm:$0xff] %v1413
  %1422 = vst [vmem:[#allocation2 + $0x308] sm:$0xff] %v1414
  %1423 = vst [vmem:[#allocation2 + $0x310] sm:$0xff] %v1415
  %1424 = vst [vmem:[#allocation2 + $0x318] sm:$0xff] %v1416
  %1425 = vst [vmem:[#allocation2 + $0x320] sm:$0xff] %v1417
  %1426 = vst [vmem:[#allocation2 + $0x328] sm:$0xff] %v1418
  %1427 = vst [vmem:[#allocation2 + $0x330] sm:$0xff] %v1419
  %1428 = vst [vmem:[#allocation2 + $0x338] sm:$0xff] %v1420
  %1429 = vrot.lane.b32.xlu0 %v926, 127
  %v1430 = vpop.permute.xlu0 %1429
  %1431 = vrot.lane.b32.xlu0 %v931, 127
  %v1432 = vpop.permute.xlu0 %1431
  %1433 = vrot.lane.b32.xlu0 %v936, 127
  %v1434 = vpop.permute.xlu0 %1433
  %1435 = vrot.lane.b32.xlu0 %v941, 127
  %v1436 = vpop.permute.xlu0 %1435
  %1437 = vrot.lane.b32.xlu0 %v946, 127
  %v1438 = vpop.permute.xlu0 %1437
  %1439 = vrot.lane.b32.xlu0 %v951, 127
  %v1440 = vpop.permute.xlu0 %1439
  %1441 = vrot.lane.b32.xlu0 %v956, 127
  %v1442 = vpop.permute.xlu0 %1441
  %1443 = vrot.lane.b32.xlu0 %v961, 127
  %v1444 = vpop.permute.xlu0 %1443
  %v1445 = vld [vmem:[%s4 + $0xd] sm:$0x1]
  %v1446 = vlaneseq
  %v1447 = vshrl.u32 %v1446, 7
  %v1448 = vsub.s32 0, %v1447
  %v1449 = vrot.slane %v1445, %v1448
  %v1450 = vmul.f32 %v1430, %v1449
  %v1451 = vmul.f32 %v1432, %v1449
  %v1452 = vmul.f32 %v1434, %v1449
  %v1453 = vmul.f32 %v1436, %v1449
  %v1454 = vmul.f32 %v1438, %v1449
  %v1455 = vmul.f32 %v1440, %v1449
  %v1456 = vmul.f32 %v1442, %v1449
  %v1457 = vmul.f32 %v1444, %v1449
  %1458 = vst [vmem:[#allocation2 + $0x340] sm:$0xff] %v1450
  %1459 = vst [vmem:[#allocation2 + $0x348] sm:$0xff] %v1451
  %1460 = vst [vmem:[#allocation2 + $0x350] sm:$0xff] %v1452
  %1461 = vst [vmem:[#allocation2 + $0x358] sm:$0xff] %v1453
  %1462 = vst [vmem:[#allocation2 + $0x360] sm:$0xff] %v1454
  %1463 = vst [vmem:[#allocation2 + $0x368] sm:$0xff] %v1455
  %1464 = vst [vmem:[#allocation2 + $0x370] sm:$0xff] %v1456
  %1465 = vst [vmem:[#allocation2 + $0x378] sm:$0xff] %v1457
  %1466 = vrot.lane.b32.xlu0 %v926, 126
  %v1467 = vpop.permute.xlu0 %1466
  %1468 = vrot.lane.b32.xlu0 %v931, 126
  %v1469 = vpop.permute.xlu0 %1468
  %1470 = vrot.lane.b32.xlu0 %v936, 126
  %v1471 = vpop.permute.xlu0 %1470
  %1472 = vrot.lane.b32.xlu0 %v941, 126
  %v1473 = vpop.permute.xlu0 %1472
  %1474 = vrot.lane.b32.xlu0 %v946, 126
  %v1475 = vpop.permute.xlu0 %1474
  %1476 = vrot.lane.b32.xlu0 %v951, 126
  %v1477 = vpop.permute.xlu0 %1476
  %1478 = vrot.lane.b32.xlu0 %v956, 126
  %v1479 = vpop.permute.xlu0 %1478
  %1480 = vrot.lane.b32.xlu0 %v961, 126
  %v1481 = vpop.permute.xlu0 %1480
  %v1482 = vld [vmem:[%s4 + $0xe] sm:$0x1]
  %v1483 = vlaneseq
  %v1484 = vshrl.u32 %v1483, 7
  %v1485 = vsub.s32 0, %v1484
  %v1486 = vrot.slane %v1482, %v1485
  %v1487 = vmul.f32 %v1467, %v1486
  %v1488 = vmul.f32 %v1469, %v1486
  %v1489 = vmul.f32 %v1471, %v1486
  %v1490 = vmul.f32 %v1473, %v1486
  %v1491 = vmul.f32 %v1475, %v1486
  %v1492 = vmul.f32 %v1477, %v1486
  %v1493 = vmul.f32 %v1479, %v1486
  %v1494 = vmul.f32 %v1481, %v1486
  %1495 = vst [vmem:[#allocation2 + $0x380] sm:$0xff] %v1487
  %1496 = vst [vmem:[#allocation2 + $0x388] sm:$0xff] %v1488
  %1497 = vst [vmem:[#allocation2 + $0x390] sm:$0xff] %v1489
  %1498 = vst [vmem:[#allocation2 + $0x398] sm:$0xff] %v1490
  %1499 = vst [vmem:[#allocation2 + $0x3a0] sm:$0xff] %v1491
  %1500 = vst [vmem:[#allocation2 + $0x3a8] sm:$0xff] %v1492
  %1501 = vst [vmem:[#allocation2 + $0x3b0] sm:$0xff] %v1493
  %1502 = vst [vmem:[#allocation2 + $0x3b8] sm:$0xff] %v1494
  %1503 = vrot.lane.b32.xlu0 %v926, 122
  %v1504 = vpop.permute.xlu0 %1503
  %1505 = vrot.lane.b32.xlu0 %v931, 122
  %v1506 = vpop.permute.xlu0 %1505
  %1507 = vrot.lane.b32.xlu0 %v936, 122
  %v1508 = vpop.permute.xlu0 %1507
  %1509 = vrot.lane.b32.xlu0 %v941, 122
  %v1510 = vpop.permute.xlu0 %1509
  %1511 = vrot.lane.b32.xlu0 %v946, 122
  %v1512 = vpop.permute.xlu0 %1511
  %1513 = vrot.lane.b32.xlu0 %v951, 122
  %v1514 = vpop.permute.xlu0 %1513
  %1515 = vrot.lane.b32.xlu0 %v956, 122
  %v1516 = vpop.permute.xlu0 %1515
  %1517 = vrot.lane.b32.xlu0 %v961, 122
  %v1518 = vpop.permute.xlu0 %1517
  %v1519 = vld [vmem:[%s4 + $0xf] sm:$0x1]
  %v1520 = vlaneseq
  %v1521 = vshrl.u32 %v1520, 7
  %v1522 = vsub.s32 0, %v1521
  %v1523 = vrot.slane %v1519, %v1522
  %v1524 = vmul.f32 %v1504, %v1523
  %v1525 = vmul.f32 %v1506, %v1523
  %v1526 = vmul.f32 %v1508, %v1523
  %v1527 = vmul.f32 %v1510, %v1523
  %v1528 = vmul.f32 %v1512, %v1523
  %v1529 = vmul.f32 %v1514, %v1523
  %v1530 = vmul.f32 %v1516, %v1523
  %v1531 = vmul.f32 %v1518, %v1523
  %1532 = vst [vmem:[#allocation2 + $0x3c0] sm:$0xff] %v1524
  %1533 = vst [vmem:[#allocation2 + $0x3c8] sm:$0xff] %v1525
  %1534 = vst [vmem:[#allocation2 + $0x3d0] sm:$0xff] %v1526
  %1535 = vst [vmem:[#allocation2 + $0x3d8] sm:$0xff] %v1527
  %1536 = vst [vmem:[#allocation2 + $0x3e0] sm:$0xff] %v1528
  %1537 = vst [vmem:[#allocation2 + $0x3e8] sm:$0xff] %v1529
  %1538 = vst [vmem:[#allocation2 + $0x3f0] sm:$0xff] %v1530
  %1539 = vst [vmem:[#allocation2 + $0x3f8] sm:$0xff] %v1531
  %1540 = vrot.lane.b32.xlu0 %v926, 121
  %v1541 = vpop.permute.xlu0 %1540
  %1542 = vrot.lane.b32.xlu0 %v931, 121
  %v1543 = vpop.permute.xlu0 %1542
  %1544 = vrot.lane.b32.xlu0 %v936, 121
  %v1545 = vpop.permute.xlu0 %1544
  %1546 = vrot.lane.b32.xlu0 %v941, 121
  %v1547 = vpop.permute.xlu0 %1546
  %1548 = vrot.lane.b32.xlu0 %v946, 121
  %v1549 = vpop.permute.xlu0 %1548
  %1550 = vrot.lane.b32.xlu0 %v951, 121
  %v1551 = vpop.permute.xlu0 %1550
  %1552 = vrot.lane.b32.xlu0 %v956, 121
  %v1553 = vpop.permute.xlu0 %1552
  %1554 = vrot.lane.b32.xlu0 %v961, 121
  %v1555 = vpop.permute.xlu0 %1554
  %v1556 = vld [vmem:[%s4 + $0x10] sm:$0x1]
  %v1557 = vlaneseq
  %v1558 = vshrl.u32 %v1557, 7
  %v1559 = vsub.s32 0, %v1558
  %v1560 = vrot.slane %v1556, %v1559
  %v1561 = vmul.f32 %v1541, %v1560
  %v1562 = vmul.f32 %v1543, %v1560
  %v1563 = vmul.f32 %v1545, %v1560
  %v1564 = vmul.f32 %v1547, %v1560
  %v1565 = vmul.f32 %v1549, %v1560
  %v1566 = vmul.f32 %v1551, %v1560
  %v1567 = vmul.f32 %v1553, %v1560
  %v1568 = vmul.f32 %v1555, %v1560
  %1569 = vst [vmem:[#allocation2 + $0x400] sm:$0xff] %v1561
  %1570 = vst [vmem:[#allocation2 + $0x408] sm:$0xff] %v1562
  %1571 = vst [vmem:[#allocation2 + $0x410] sm:$0xff] %v1563
  %1572 = vst [vmem:[#allocation2 + $0x418] sm:$0xff] %v1564
  %1573 = vst [vmem:[#allocation2 + $0x420] sm:$0xff] %v1565
  %1574 = vst [vmem:[#allocation2 + $0x428] sm:$0xff] %v1566
  %1575 = vst [vmem:[#allocation2 + $0x430] sm:$0xff] %v1567
  %1576 = vst [vmem:[#allocation2 + $0x438] sm:$0xff] %v1568
  %1577 = vrot.lane.b32.xlu0 %v926, 120
  %v1578 = vpop.permute.xlu0 %1577
  %1579 = vrot.lane.b32.xlu0 %v931, 120
  %v1580 = vpop.permute.xlu0 %1579
  %1581 = vrot.lane.b32.xlu0 %v936, 120
  %v1582 = vpop.permute.xlu0 %1581
  %1583 = vrot.lane.b32.xlu0 %v941, 120
  %v1584 = vpop.permute.xlu0 %1583
  %1585 = vrot.lane.b32.xlu0 %v946, 120
  %v1586 = vpop.permute.xlu0 %1585
  %1587 = vrot.lane.b32.xlu0 %v951, 120
  %v1588 = vpop.permute.xlu0 %1587
  %1589 = vrot.lane.b32.xlu0 %v956, 120
  %v1590 = vpop.permute.xlu0 %1589
  %1591 = vrot.lane.b32.xlu0 %v961, 120
  %v1592 = vpop.permute.xlu0 %1591
  %v1593 = vld [vmem:[%s4 + $0x11] sm:$0x1]
  %v1594 = vlaneseq
  %v1595 = vshrl.u32 %v1594, 7
  %v1596 = vsub.s32 0, %v1595
  %v1597 = vrot.slane %v1593, %v1596
  %v1598 = vmul.f32 %v1578, %v1597
  %v1599 = vmul.f32 %v1580, %v1597
  %v1600 = vmul.f32 %v1582, %v1597
  %v1601 = vmul.f32 %v1584, %v1597
  %v1602 = vmul.f32 %v1586, %v1597
  %v1603 = vmul.f32 %v1588, %v1597
  %v1604 = vmul.f32 %v1590, %v1597
  %v1605 = vmul.f32 %v1592, %v1597
  %1606 = vst [vmem:[#allocation2 + $0x440] sm:$0xff] %v1598
  %1607 = vst [vmem:[#allocation2 + $0x448] sm:$0xff] %v1599
  %1608 = vst [vmem:[#allocation2 + $0x450] sm:$0xff] %v1600
  %1609 = vst [vmem:[#allocation2 + $0x458] sm:$0xff] %v1601
  %1610 = vst [vmem:[#allocation2 + $0x460] sm:$0xff] %v1602
  %1611 = vst [vmem:[#allocation2 + $0x468] sm:$0xff] %v1603
  %1612 = vst [vmem:[#allocation2 + $0x470] sm:$0xff] %v1604
  %1613 = vst [vmem:[#allocation2 + $0x478] sm:$0xff] %v1605
  %1614 = vrot.lane.b32.xlu0 %v926, 119
  %v1615 = vpop.permute.xlu0 %1614
  %1616 = vrot.lane.b32.xlu0 %v931, 119
  %v1617 = vpop.permute.xlu0 %1616
  %1618 = vrot.lane.b32.xlu0 %v936, 119
  %v1619 = vpop.permute.xlu0 %1618
  %1620 = vrot.lane.b32.xlu0 %v941, 119
  %v1621 = vpop.permute.xlu0 %1620
  %1622 = vrot.lane.b32.xlu0 %v946, 119
  %v1623 = vpop.permute.xlu0 %1622
  %1624 = vrot.lane.b32.xlu0 %v951, 119
  %v1625 = vpop.permute.xlu0 %1624
  %1626 = vrot.lane.b32.xlu0 %v956, 119
  %v1627 = vpop.permute.xlu0 %1626
  %1628 = vrot.lane.b32.xlu0 %v961, 119
  %v1629 = vpop.permute.xlu0 %1628
  %v1630 = vld [vmem:[%s4 + $0x12] sm:$0x1]
  %v1631 = vlaneseq
  %v1632 = vshrl.u32 %v1631, 7
  %v1633 = vsub.s32 0, %v1632
  %v1634 = vrot.slane %v1630, %v1633
  %v1635 = vmul.f32 %v1615, %v1634
  %v1636 = vmul.f32 %v1617, %v1634
  %v1637 = vmul.f32 %v1619, %v1634
  %v1638 = vmul.f32 %v1621, %v1634
  %v1639 = vmul.f32 %v1623, %v1634
  %v1640 = vmul.f32 %v1625, %v1634
  %v1641 = vmul.f32 %v1627, %v1634
  %v1642 = vmul.f32 %v1629, %v1634
  %1643 = vst [vmem:[#allocation2 + $0x480] sm:$0xff] %v1635
  %1644 = vst [vmem:[#allocation2 + $0x488] sm:$0xff] %v1636
  %1645 = vst [vmem:[#allocation2 + $0x490] sm:$0xff] %v1637
  %1646 = vst [vmem:[#allocation2 + $0x498] sm:$0xff] %v1638
  %1647 = vst [vmem:[#allocation2 + $0x4a0] sm:$0xff] %v1639
  %1648 = vst [vmem:[#allocation2 + $0x4a8] sm:$0xff] %v1640
  %1649 = vst [vmem:[#allocation2 + $0x4b0] sm:$0xff] %v1641
  %1650 = vst [vmem:[#allocation2 + $0x4b8] sm:$0xff] %v1642
  %1651 = vrot.lane.b32.xlu0 %v926, 118
  %v1652 = vpop.permute.xlu0 %1651
  %1653 = vrot.lane.b32.xlu0 %v931, 118
  %v1654 = vpop.permute.xlu0 %1653
  %1655 = vrot.lane.b32.xlu0 %v936, 118
  %v1656 = vpop.permute.xlu0 %1655
  %1657 = vrot.lane.b32.xlu0 %v941, 118
  %v1658 = vpop.permute.xlu0 %1657
  %1659 = vrot.lane.b32.xlu0 %v946, 118
  %v1660 = vpop.permute.xlu0 %1659
  %1661 = vrot.lane.b32.xlu0 %v951, 118
  %v1662 = vpop.permute.xlu0 %1661
  %1663 = vrot.lane.b32.xlu0 %v956, 118
  %v1664 = vpop.permute.xlu0 %1663
  %1665 = vrot.lane.b32.xlu0 %v961, 118
  %v1666 = vpop.permute.xlu0 %1665
  %v1667 = vld [vmem:[%s4 + $0x13] sm:$0x1]
  %v1668 = vlaneseq
  %v1669 = vshrl.u32 %v1668, 7
  %v1670 = vsub.s32 0, %v1669
  %v1671 = vrot.slane %v1667, %v1670
  %v1672 = vmul.f32 %v1652, %v1671
  %v1673 = vmul.f32 %v1654, %v1671
  %v1674 = vmul.f32 %v1656, %v1671
  %v1675 = vmul.f32 %v1658, %v1671
  %v1676 = vmul.f32 %v1660, %v1671
  %v1677 = vmul.f32 %v1662, %v1671
  %v1678 = vmul.f32 %v1664, %v1671
  %v1679 = vmul.f32 %v1666, %v1671
  %1680 = vst [vmem:[#allocation2 + $0x4c0] sm:$0xff] %v1672
  %1681 = vst [vmem:[#allocation2 + $0x4c8] sm:$0xff] %v1673
  %1682 = vst [vmem:[#allocation2 + $0x4d0] sm:$0xff] %v1674
  %1683 = vst [vmem:[#allocation2 + $0x4d8] sm:$0xff] %v1675
  %1684 = vst [vmem:[#allocation2 + $0x4e0] sm:$0xff] %v1676
  %1685 = vst [vmem:[#allocation2 + $0x4e8] sm:$0xff] %v1677
  %1686 = vst [vmem:[#allocation2 + $0x4f0] sm:$0xff] %v1678
  %1687 = vst [vmem:[#allocation2 + $0x4f8] sm:$0xff] %v1679
  %1688 = vrot.lane.b32.xlu0 %v926, 114
  %v1689 = vpop.permute.xlu0 %1688
  %1690 = vrot.lane.b32.xlu0 %v931, 114
  %v1691 = vpop.permute.xlu0 %1690
  %1692 = vrot.lane.b32.xlu0 %v936, 114
  %v1693 = vpop.permute.xlu0 %1692
  %1694 = vrot.lane.b32.xlu0 %v941, 114
  %v1695 = vpop.permute.xlu0 %1694
  %1696 = vrot.lane.b32.xlu0 %v946, 114
  %v1697 = vpop.permute.xlu0 %1696
  %1698 = vrot.lane.b32.xlu0 %v951, 114
  %v1699 = vpop.permute.xlu0 %1698
  %1700 = vrot.lane.b32.xlu0 %v956, 114
  %v1701 = vpop.permute.xlu0 %1700
  %1702 = vrot.lane.b32.xlu0 %v961, 114
  %v1703 = vpop.permute.xlu0 %1702
  %v1704 = vld [vmem:[%s4 + $0x14] sm:$0x1]
  %v1705 = vlaneseq
  %v1706 = vshrl.u32 %v1705, 7
  %v1707 = vsub.s32 0, %v1706
  %v1708 = vrot.slane %v1704, %v1707
  %v1709 = vmul.f32 %v1689, %v1708
  %v1710 = vmul.f32 %v1691, %v1708
  %v1711 = vmul.f32 %v1693, %v1708
  %v1712 = vmul.f32 %v1695, %v1708
  %v1713 = vmul.f32 %v1697, %v1708
  %v1714 = vmul.f32 %v1699, %v1708
  %v1715 = vmul.f32 %v1701, %v1708
  %v1716 = vmul.f32 %v1703, %v1708
  %1717 = vst [vmem:[#allocation2 + $0x500] sm:$0xff] %v1709
  %1718 = vst [vmem:[#allocation2 + $0x508] sm:$0xff] %v1710
  %1719 = vst [vmem:[#allocation2 + $0x510] sm:$0xff] %v1711
  %1720 = vst [vmem:[#allocation2 + $0x518] sm:$0xff] %v1712
  %1721 = vst [vmem:[#allocation2 + $0x520] sm:$0xff] %v1713
  %1722 = vst [vmem:[#allocation2 + $0x528] sm:$0xff] %v1714
  %1723 = vst [vmem:[#allocation2 + $0x530] sm:$0xff] %v1715
  %1724 = vst [vmem:[#allocation2 + $0x538] sm:$0xff] %v1716
  %1725 = vrot.lane.b32.xlu0 %v926, 113
  %v1726 = vpop.permute.xlu0 %1725
  %1727 = vrot.lane.b32.xlu0 %v931, 113
  %v1728 = vpop.permute.xlu0 %1727
  %1729 = vrot.lane.b32.xlu0 %v936, 113
  %v1730 = vpop.permute.xlu0 %1729
  %1731 = vrot.lane.b32.xlu0 %v941, 113
  %v1732 = vpop.permute.xlu0 %1731
  %1733 = vrot.lane.b32.xlu0 %v946, 113
  %v1734 = vpop.permute.xlu0 %1733
  %1735 = vrot.lane.b32.xlu0 %v951, 113
  %v1736 = vpop.permute.xlu0 %1735
  %1737 = vrot.lane.b32.xlu0 %v956, 113
  %v1738 = vpop.permute.xlu0 %1737
  %1739 = vrot.lane.b32.xlu0 %v961, 113
  %v1740 = vpop.permute.xlu0 %1739
  %v1741 = vld [vmem:[%s4 + $0x15] sm:$0x1]
  %v1742 = vlaneseq
  %v1743 = vshrl.u32 %v1742, 7
  %v1744 = vsub.s32 0, %v1743
  %v1745 = vrot.slane %v1741, %v1744
  %v1746 = vmul.f32 %v1726, %v1745
  %v1747 = vmul.f32 %v1728, %v1745
  %v1748 = vmul.f32 %v1730, %v1745
  %v1749 = vmul.f32 %v1732, %v1745
  %v1750 = vmul.f32 %v1734, %v1745
  %v1751 = vmul.f32 %v1736, %v1745
  %v1752 = vmul.f32 %v1738, %v1745
  %v1753 = vmul.f32 %v1740, %v1745
  %1754 = vst [vmem:[#allocation2 + $0x540] sm:$0xff] %v1746
  %1755 = vst [vmem:[#allocation2 + $0x548] sm:$0xff] %v1747
  %1756 = vst [vmem:[#allocation2 + $0x550] sm:$0xff] %v1748
  %1757 = vst [vmem:[#allocation2 + $0x558] sm:$0xff] %v1749
  %1758 = vst [vmem:[#allocation2 + $0x560] sm:$0xff] %v1750
  %1759 = vst [vmem:[#allocation2 + $0x568] sm:$0xff] %v1751
  %1760 = vst [vmem:[#allocation2 + $0x570] sm:$0xff] %v1752
  %1761 = vst [vmem:[#allocation2 + $0x578] sm:$0xff] %v1753
  %1762 = vrot.lane.b32.xlu0 %v926, 112
  %v1763 = vpop.permute.xlu0 %1762
  %1764 = vrot.lane.b32.xlu0 %v931, 112
  %v1765 = vpop.permute.xlu0 %1764
  %1766 = vrot.lane.b32.xlu0 %v936, 112
  %v1767 = vpop.permute.xlu0 %1766
  %1768 = vrot.lane.b32.xlu0 %v941, 112
  %v1769 = vpop.permute.xlu0 %1768
  %1770 = vrot.lane.b32.xlu0 %v946, 112
  %v1771 = vpop.permute.xlu0 %1770
  %1772 = vrot.lane.b32.xlu0 %v951, 112
  %v1773 = vpop.permute.xlu0 %1772
  %1774 = vrot.lane.b32.xlu0 %v956, 112
  %v1775 = vpop.permute.xlu0 %1774
  %1776 = vrot.lane.b32.xlu0 %v961, 112
  %v1777 = vpop.permute.xlu0 %1776
  %v1778 = vld [vmem:[%s4 + $0x16] sm:$0x1]
  %v1779 = vlaneseq
  %v1780 = vshrl.u32 %v1779, 7
  %v1781 = vsub.s32 0, %v1780
  %v1782 = vrot.slane %v1778, %v1781
  %v1783 = vmul.f32 %v1763, %v1782
  %v1784 = vmul.f32 %v1765, %v1782
  %v1785 = vmul.f32 %v1767, %v1782
  %v1786 = vmul.f32 %v1769, %v1782
  %v1787 = vmul.f32 %v1771, %v1782
  %v1788 = vmul.f32 %v1773, %v1782
  %v1789 = vmul.f32 %v1775, %v1782
  %v1790 = vmul.f32 %v1777, %v1782
  %1791 = vst [vmem:[#allocation2 + $0x580] sm:$0xff] %v1783
  %1792 = vst [vmem:[#allocation2 + $0x588] sm:$0xff] %v1784
  %1793 = vst [vmem:[#allocation2 + $0x590] sm:$0xff] %v1785
  %1794 = vst [vmem:[#allocation2 + $0x598] sm:$0xff] %v1786
  %1795 = vst [vmem:[#allocation2 + $0x5a0] sm:$0xff] %v1787
  %1796 = vst [vmem:[#allocation2 + $0x5a8] sm:$0xff] %v1788
  %1797 = vst [vmem:[#allocation2 + $0x5b0] sm:$0xff] %v1789
  %1798 = vst [vmem:[#allocation2 + $0x5b8] sm:$0xff] %v1790
  %1799 = vrot.lane.b32.xlu0 %v926, 111
  %v1800 = vpop.permute.xlu0 %1799
  %1801 = vrot.lane.b32.xlu0 %v931, 111
  %v1802 = vpop.permute.xlu0 %1801
  %1803 = vrot.lane.b32.xlu0 %v936, 111
  %v1804 = vpop.permute.xlu0 %1803
  %1805 = vrot.lane.b32.xlu0 %v941, 111
  %v1806 = vpop.permute.xlu0 %1805
  %1807 = vrot.lane.b32.xlu0 %v946, 111
  %v1808 = vpop.permute.xlu0 %1807
  %1809 = vrot.lane.b32.xlu0 %v951, 111
  %v1810 = vpop.permute.xlu0 %1809
  %1811 = vrot.lane.b32.xlu0 %v956, 111
  %v1812 = vpop.permute.xlu0 %1811
  %1813 = vrot.lane.b32.xlu0 %v961, 111
  %v1814 = vpop.permute.xlu0 %1813
  %v1815 = vld [vmem:[%s4 + $0x17] sm:$0x1]
  %v1816 = vlaneseq
  %v1817 = vshrl.u32 %v1816, 7
  %v1818 = vsub.s32 0, %v1817
  %v1819 = vrot.slane %v1815, %v1818
  %v1820 = vmul.f32 %v1800, %v1819
  %v1821 = vmul.f32 %v1802, %v1819
  %v1822 = vmul.f32 %v1804, %v1819
  %v1823 = vmul.f32 %v1806, %v1819
  %v1824 = vmul.f32 %v1808, %v1819
  %v1825 = vmul.f32 %v1810, %v1819
  %v1826 = vmul.f32 %v1812, %v1819
  %v1827 = vmul.f32 %v1814, %v1819
  %1828 = vst [vmem:[#allocation2 + $0x5c0] sm:$0xff] %v1820
  %1829 = vst [vmem:[#allocation2 + $0x5c8] sm:$0xff] %v1821
  %1830 = vst [vmem:[#allocation2 + $0x5d0] sm:$0xff] %v1822
  %1831 = vst [vmem:[#allocation2 + $0x5d8] sm:$0xff] %v1823
  %1832 = vst [vmem:[#allocation2 + $0x5e0] sm:$0xff] %v1824
  %1833 = vst [vmem:[#allocation2 + $0x5e8] sm:$0xff] %v1825
  %1834 = vst [vmem:[#allocation2 + $0x5f0] sm:$0xff] %v1826
  %1835 = vst [vmem:[#allocation2 + $0x5f8] sm:$0xff] %v1827
  %1836 = vrot.lane.b32.xlu0 %v926, 110
  %v1837 = vpop.permute.xlu0 %1836
  %1838 = vrot.lane.b32.xlu0 %v931, 110
  %v1839 = vpop.permute.xlu0 %1838
  %1840 = vrot.lane.b32.xlu0 %v936, 110
  %v1841 = vpop.permute.xlu0 %1840
  %1842 = vrot.lane.b32.xlu0 %v941, 110
  %v1843 = vpop.permute.xlu0 %1842
  %1844 = vrot.lane.b32.xlu0 %v946, 110
  %v1845 = vpop.permute.xlu0 %1844
  %1846 = vrot.lane.b32.xlu0 %v951, 110
  %v1847 = vpop.permute.xlu0 %1846
  %1848 = vrot.lane.b32.xlu0 %v956, 110
  %v1849 = vpop.permute.xlu0 %1848
  %1850 = vrot.lane.b32.xlu0 %v961, 110
  %v1851 = vpop.permute.xlu0 %1850
  %v1852 = vld [vmem:[%s4 + $0x18] sm:$0x1]
  %v1853 = vlaneseq
  %v1854 = vshrl.u32 %v1853, 7
  %v1855 = vsub.s32 0, %v1854
  %v1856 = vrot.slane %v1852, %v1855
  %v1857 = vmul.f32 %v1837, %v1856
  %v1858 = vmul.f32 %v1839, %v1856
  %v1859 = vmul.f32 %v1841, %v1856
  %v1860 = vmul.f32 %v1843, %v1856
  %v1861 = vmul.f32 %v1845, %v1856
  %v1862 = vmul.f32 %v1847, %v1856
  %v1863 = vmul.f32 %v1849, %v1856
  %v1864 = vmul.f32 %v1851, %v1856
  %1865 = vst [vmem:[#allocation2 + $0x600] sm:$0xff] %v1857
  %1866 = vst [vmem:[#allocation2 + $0x608] sm:$0xff] %v1858
  %1867 = vst [vmem:[#allocation2 + $0x610] sm:$0xff] %v1859
  %1868 = vst [vmem:[#allocation2 + $0x618] sm:$0xff] %v1860
  %1869 = vst [vmem:[#allocation2 + $0x620] sm:$0xff] %v1861
  %1870 = vst [vmem:[#allocation2 + $0x628] sm:$0xff] %v1862
  %1871 = vst [vmem:[#allocation2 + $0x630] sm:$0xff] %v1863
  %1872 = vst [vmem:[#allocation2 + $0x638] sm:$0xff] %v1864
  %v1873 = vld [vmem:[%s5] sm:$0xff]
  %v1874 = vld [vmem:[%s5 + $0x8] sm:$0xff]
  %v1875 = vld [vmem:[%s5 + $0x10] sm:$0xff]
  %v1876 = vld [vmem:[%s5 + $0x18] sm:$0xff]
  %v1877 = vld [vmem:[%s5 + $0x20] sm:$0xff]
  %v1878 = vld [vmem:[%s5 + $0x28] sm:$0xff]
  %v1879 = vld [vmem:[%s5 + $0x30] sm:$0xff]
  %v1880 = vld [vmem:[%s5 + $0x38] sm:$0xff]
  %v1881 = vld [vmem:[%s5 + $0x40] sm:$0xff]
  %v1882 = vld [vmem:[%s5 + $0x48] sm:$0xff]
  %v1883 = vld [vmem:[%s5 + $0x50] sm:$0xff]
  %v1884 = vld [vmem:[%s5 + $0x58] sm:$0xff]
  %v1885 = vld [vmem:[%s5 + $0x60] sm:$0xff]
  %v1886 = vld [vmem:[%s5 + $0x68] sm:$0xff]
  %v1887 = vld [vmem:[%s5 + $0x70] sm:$0xff]
  %v1888 = vld [vmem:[%s5 + $0x78] sm:$0xff]
  %v1889 = vld [vmem:[%s5 + $0x80] sm:$0xff]
  %v1890 = vld [vmem:[%s5 + $0x88] sm:$0xff]
  %v1891 = vld [vmem:[%s5 + $0x90] sm:$0xff]
  %v1892 = vld [vmem:[%s5 + $0x98] sm:$0xff]
  %v1893 = vld [vmem:[%s5 + $0xa0] sm:$0xff]
  %v1894 = vld [vmem:[%s5 + $0xa8] sm:$0xff]
  %v1895 = vld [vmem:[%s5 + $0xb0] sm:$0xff]
  %v1896 = vld [vmem:[%s5 + $0xb8] sm:$0xff]
  %v1897 = vld [vmem:[%s5 + $0xc0] sm:$0xff]
  %v1898 = vld [vmem:[%s5 + $0xc8] sm:$0xff]
  %v1899 = vld [vmem:[%s5 + $0xd0] sm:$0xff]
  %v1900 = vld [vmem:[%s5 + $0xd8] sm:$0xff]
  %v1901 = vld [vmem:[%s5 + $0xe0] sm:$0xff]
  %v1902 = vld [vmem:[%s5 + $0xe8] sm:$0xff]
  %v1903 = vld [vmem:[%s5 + $0xf0] sm:$0xff]
  %v1904 = vld [vmem:[%s5 + $0xf8] sm:$0xff]
  %v1905 = vld [vmem:[%s5 + $0x100] sm:$0xff]
  %v1906 = vld [vmem:[%s5 + $0x108] sm:$0xff]
  %v1907 = vld [vmem:[%s5 + $0x110] sm:$0xff]
  %v1908 = vld [vmem:[%s5 + $0x118] sm:$0xff]
  %v1909 = vld [vmem:[%s5 + $0x120] sm:$0xff]
  %v1910 = vld [vmem:[%s5 + $0x128] sm:$0xff]
  %v1911 = vld [vmem:[%s5 + $0x130] sm:$0xff]
  %v1912 = vld [vmem:[%s5 + $0x138] sm:$0xff]
  %v1913 = vld [vmem:[%s5 + $0x140] sm:$0xff]
  %v1914 = vld [vmem:[%s5 + $0x148] sm:$0xff]
  %v1915 = vld [vmem:[%s5 + $0x150] sm:$0xff]
  %v1916 = vld [vmem:[%s5 + $0x158] sm:$0xff]
  %v1917 = vld [vmem:[%s5 + $0x160] sm:$0xff]
  %v1918 = vld [vmem:[%s5 + $0x168] sm:$0xff]
  %v1919 = vld [vmem:[%s5 + $0x170] sm:$0xff]
  %v1920 = vld [vmem:[%s5 + $0x178] sm:$0xff]
  %v1921 = vld [vmem:[%s5 + $0x180] sm:$0xff]
  %v1922 = vld [vmem:[%s5 + $0x188] sm:$0xff]
  %v1923 = vld [vmem:[%s5 + $0x190] sm:$0xff]
  %v1924 = vld [vmem:[%s5 + $0x198] sm:$0xff]
  %v1925 = vld [vmem:[%s5 + $0x1a0] sm:$0xff]
  %v1926 = vld [vmem:[%s5 + $0x1a8] sm:$0xff]
  %v1927 = vld [vmem:[%s5 + $0x1b0] sm:$0xff]
  %v1928 = vld [vmem:[%s5 + $0x1b8] sm:$0xff]
  %v1929 = vld [vmem:[%s5 + $0x1c0] sm:$0xff]
  %v1930 = vld [vmem:[%s5 + $0x1c8] sm:$0xff]
  %v1931 = vld [vmem:[%s5 + $0x1d0] sm:$0xff]
  %v1932 = vld [vmem:[%s5 + $0x1d8] sm:$0xff]
  %v1933 = vld [vmem:[%s5 + $0x1e0] sm:$0xff]
  %v1934 = vld [vmem:[%s5 + $0x1e8] sm:$0xff]
  %v1935 = vld [vmem:[%s5 + $0x1f0] sm:$0xff]
  %v1936 = vld [vmem:[%s5 + $0x1f8] sm:$0xff]
  %v1937 = vld [vmem:[%s5 + $0x200] sm:$0xff]
  %v1938 = vld [vmem:[%s5 + $0x208] sm:$0xff]
  %v1939 = vld [vmem:[%s5 + $0x210] sm:$0xff]
  %v1940 = vld [vmem:[%s5 + $0x218] sm:$0xff]
  %v1941 = vld [vmem:[%s5 + $0x220] sm:$0xff]
  %v1942 = vld [vmem:[%s5 + $0x228] sm:$0xff]
  %v1943 = vld [vmem:[%s5 + $0x230] sm:$0xff]
  %v1944 = vld [vmem:[%s5 + $0x238] sm:$0xff]
  %v1945 = vld [vmem:[%s5 + $0x240] sm:$0xff]
  %v1946 = vld [vmem:[%s5 + $0x248] sm:$0xff]
  %v1947 = vld [vmem:[%s5 + $0x250] sm:$0xff]
  %v1948 = vld [vmem:[%s5 + $0x258] sm:$0xff]
  %v1949 = vld [vmem:[%s5 + $0x260] sm:$0xff]
  %v1950 = vld [vmem:[%s5 + $0x268] sm:$0xff]
  %v1951 = vld [vmem:[%s5 + $0x270] sm:$0xff]
  %v1952 = vld [vmem:[%s5 + $0x278] sm:$0xff]
  %v1953 = vld [vmem:[%s5 + $0x280] sm:$0xff]
  %v1954 = vld [vmem:[%s5 + $0x288] sm:$0xff]
  %v1955 = vld [vmem:[%s5 + $0x290] sm:$0xff]
  %v1956 = vld [vmem:[%s5 + $0x298] sm:$0xff]
  %v1957 = vld [vmem:[%s5 + $0x2a0] sm:$0xff]
  %v1958 = vld [vmem:[%s5 + $0x2a8] sm:$0xff]
  %v1959 = vld [vmem:[%s5 + $0x2b0] sm:$0xff]
  %v1960 = vld [vmem:[%s5 + $0x2b8] sm:$0xff]
  %v1961 = vld [vmem:[%s5 + $0x2c0] sm:$0xff]
  %v1962 = vld [vmem:[%s5 + $0x2c8] sm:$0xff]
  %v1963 = vld [vmem:[%s5 + $0x2d0] sm:$0xff]
  %v1964 = vld [vmem:[%s5 + $0x2d8] sm:$0xff]
  %v1965 = vld [vmem:[%s5 + $0x2e0] sm:$0xff]
  %v1966 = vld [vmem:[%s5 + $0x2e8] sm:$0xff]
  %v1967 = vld [vmem:[%s5 + $0x2f0] sm:$0xff]
  %v1968 = vld [vmem:[%s5 + $0x2f8] sm:$0xff]
  %v1969 = vld [vmem:[%s5 + $0x300] sm:$0xff]
  %v1970 = vld [vmem:[%s5 + $0x308] sm:$0xff]
  %v1971 = vld [vmem:[%s5 + $0x310] sm:$0xff]
  %v1972 = vld [vmem:[%s5 + $0x318] sm:$0xff]
  %v1973 = vld [vmem:[%s5 + $0x320] sm:$0xff]
  %v1974 = vld [vmem:[%s5 + $0x328] sm:$0xff]
  %v1975 = vld [vmem:[%s5 + $0x330] sm:$0xff]
  %v1976 = vld [vmem:[%s5 + $0x338] sm:$0xff]
  %v1977 = vld [vmem:[%s5 + $0x340] sm:$0xff]
  %v1978 = vld [vmem:[%s5 + $0x348] sm:$0xff]
  %v1979 = vld [vmem:[%s5 + $0x350] sm:$0xff]
  %v1980 = vld [vmem:[%s5 + $0x358] sm:$0xff]
  %v1981 = vld [vmem:[%s5 + $0x360] sm:$0xff]
  %v1982 = vld [vmem:[%s5 + $0x368] sm:$0xff]
  %v1983 = vld [vmem:[%s5 + $0x370] sm:$0xff]
  %v1984 = vld [vmem:[%s5 + $0x378] sm:$0xff]
  %v1985 = vld [vmem:[%s5 + $0x380] sm:$0xff]
  %v1986 = vld [vmem:[%s5 + $0x388] sm:$0xff]
  %v1987 = vld [vmem:[%s5 + $0x390] sm:$0xff]
  %v1988 = vld [vmem:[%s5 + $0x398] sm:$0xff]
  %v1989 = vld [vmem:[%s5 + $0x3a0] sm:$0xff]
  %v1990 = vld [vmem:[%s5 + $0x3a8] sm:$0xff]
  %v1991 = vld [vmem:[%s5 + $0x3b0] sm:$0xff]
  %v1992 = vld [vmem:[%s5 + $0x3b8] sm:$0xff]
  %v1993 = vld [vmem:[%s5 + $0x3c0] sm:$0xff]
  %v1994 = vld [vmem:[%s5 + $0x3c8] sm:$0xff]
  %v1995 = vld [vmem:[%s5 + $0x3d0] sm:$0xff]
  %v1996 = vld [vmem:[%s5 + $0x3d8] sm:$0xff]
  %v1997 = vld [vmem:[%s5 + $0x3e0] sm:$0xff]
  %v1998 = vld [vmem:[%s5 + $0x3e8] sm:$0xff]
  %v1999 = vld [vmem:[%s5 + $0x3f0] sm:$0xff]
  %v2000 = vld [vmem:[%s5 + $0x3f8] sm:$0xff]
  %v2001 = vld [vmem:[%s5 + $0x400] sm:$0xff]
  %v2002 = vld [vmem:[%s5 + $0x408] sm:$0xff]
  %v2003 = vld [vmem:[%s5 + $0x410] sm:$0xff]
  %v2004 = vld [vmem:[%s5 + $0x418] sm:$0xff]
  %v2005 = vld [vmem:[%s5 + $0x420] sm:$0xff]
  %v2006 = vld [vmem:[%s5 + $0x428] sm:$0xff]
  %v2007 = vld [vmem:[%s5 + $0x430] sm:$0xff]
  %v2008 = vld [vmem:[%s5 + $0x438] sm:$0xff]
  %v2009 = vld [vmem:[%s5 + $0x440] sm:$0xff]
  %v2010 = vld [vmem:[%s5 + $0x448] sm:$0xff]
  %v2011 = vld [vmem:[%s5 + $0x450] sm:$0xff]
  %v2012 = vld [vmem:[%s5 + $0x458] sm:$0xff]
  %v2013 = vld [vmem:[%s5 + $0x460] sm:$0xff]
  %v2014 = vld [vmem:[%s5 + $0x468] sm:$0xff]
  %v2015 = vld [vmem:[%s5 + $0x470] sm:$0xff]
  %v2016 = vld [vmem:[%s5 + $0x478] sm:$0xff]
  %v2017 = vld [vmem:[%s5 + $0x480] sm:$0xff]
  %v2018 = vld [vmem:[%s5 + $0x488] sm:$0xff]
  %v2019 = vld [vmem:[%s5 + $0x490] sm:$0xff]
  %v2020 = vld [vmem:[%s5 + $0x498] sm:$0xff]
  %v2021 = vld [vmem:[%s5 + $0x4a0] sm:$0xff]
  %v2022 = vld [vmem:[%s5 + $0x4a8] sm:$0xff]
  %v2023 = vld [vmem:[%s5 + $0x4b0] sm:$0xff]
  %v2024 = vld [vmem:[%s5 + $0x4b8] sm:$0xff]
  %v2025 = vld [vmem:[%s5 + $0x4c0] sm:$0xff]
  %v2026 = vld [vmem:[%s5 + $0x4c8] sm:$0xff]
  %v2027 = vld [vmem:[%s5 + $0x4d0] sm:$0xff]
  %v2028 = vld [vmem:[%s5 + $0x4d8] sm:$0xff]
  %v2029 = vld [vmem:[%s5 + $0x4e0] sm:$0xff]
  %v2030 = vld [vmem:[%s5 + $0x4e8] sm:$0xff]
  %v2031 = vld [vmem:[%s5 + $0x4f0] sm:$0xff]
  %v2032 = vld [vmem:[%s5 + $0x4f8] sm:$0xff]
  %v2033 = vld [vmem:[%s5 + $0x500] sm:$0xff]
  %v2034 = vld [vmem:[%s5 + $0x508] sm:$0xff]
  %v2035 = vld [vmem:[%s5 + $0x510] sm:$0xff]
  %v2036 = vld [vmem:[%s5 + $0x518] sm:$0xff]
  %v2037 = vld [vmem:[%s5 + $0x520] sm:$0xff]
  %v2038 = vld [vmem:[%s5 + $0x528] sm:$0xff]
  %v2039 = vld [vmem:[%s5 + $0x530] sm:$0xff]
  %v2040 = vld [vmem:[%s5 + $0x538] sm:$0xff]
  %v2041 = vld [vmem:[%s5 + $0x540] sm:$0xff]
  %v2042 = vld [vmem:[%s5 + $0x548] sm:$0xff]
  %v2043 = vld [vmem:[%s5 + $0x550] sm:$0xff]
  %v2044 = vld [vmem:[%s5 + $0x558] sm:$0xff]
  %v2045 = vld [vmem:[%s5 + $0x560] sm:$0xff]
  %v2046 = vld [vmem:[%s5 + $0x568] sm:$0xff]
  %v2047 = vld [vmem:[%s5 + $0x570] sm:$0xff]
  %v2048 = vld [vmem:[%s5 + $0x578] sm:$0xff]
  %v2049 = vld [vmem:[%s5 + $0x580] sm:$0xff]
  %v2050 = vld [vmem:[%s5 + $0x588] sm:$0xff]
  %v2051 = vld [vmem:[%s5 + $0x590] sm:$0xff]
  %v2052 = vld [vmem:[%s5 + $0x598] sm:$0xff]
  %v2053 = vld [vmem:[%s5 + $0x5a0] sm:$0xff]
  %v2054 = vld [vmem:[%s5 + $0x5a8] sm:$0xff]
  %v2055 = vld [vmem:[%s5 + $0x5b0] sm:$0xff]
  %v2056 = vld [vmem:[%s5 + $0x5b8] sm:$0xff]
  %v2057 = vld [vmem:[%s5 + $0x5c0] sm:$0xff]
  %v2058 = vld [vmem:[%s5 + $0x5c8] sm:$0xff]
  %v2059 = vld [vmem:[%s5 + $0x5d0] sm:$0xff]
  %v2060 = vld [vmem:[%s5 + $0x5d8] sm:$0xff]
  %v2061 = vld [vmem:[%s5 + $0x5e0] sm:$0xff]
  %v2062 = vld [vmem:[%s5 + $0x5e8] sm:$0xff]
  %v2063 = vld [vmem:[%s5 + $0x5f0] sm:$0xff]
  %v2064 = vld [vmem:[%s5 + $0x5f8] sm:$0xff]
  %v2065 = vld [vmem:[%s5 + $0x600] sm:$0xff]
  %v2066 = vld [vmem:[%s5 + $0x608] sm:$0xff]
  %v2067 = vld [vmem:[%s5 + $0x610] sm:$0xff]
  %v2068 = vld [vmem:[%s5 + $0x618] sm:$0xff]
  %v2069 = vld [vmem:[%s5 + $0x620] sm:$0xff]
  %v2070 = vld [vmem:[%s5 + $0x628] sm:$0xff]
  %v2071 = vld [vmem:[%s5 + $0x630] sm:$0xff]
  %v2072 = vld [vmem:[%s5 + $0x638] sm:$0xff]
  %v2073 = vld [vmem:[%s5 + $0x640] sm:$0xff]
  %v2074 = vld [vmem:[%s5 + $0x648] sm:$0xff]
  %v2075 = vld [vmem:[%s5 + $0x650] sm:$0xff]
  %v2076 = vld [vmem:[%s5 + $0x658] sm:$0xff]
  %v2077 = vld [vmem:[%s5 + $0x660] sm:$0xff]
  %v2078 = vld [vmem:[%s5 + $0x668] sm:$0xff]
  %v2079 = vld [vmem:[%s5 + $0x670] sm:$0xff]
  %v2080 = vld [vmem:[%s5 + $0x678] sm:$0xff]
  %v2081 = vld [vmem:[#allocation2] sm:$0xff]
  %v2082 = vld [vmem:[#allocation2 + $0x8] sm:$0xff]
  %v2083 = vld [vmem:[#allocation2 + $0x10] sm:$0xff]
  %v2084 = vld [vmem:[#allocation2 + $0x18] sm:$0xff]
  %v2085 = vld [vmem:[#allocation2 + $0x20] sm:$0xff]
  %v2086 = vld [vmem:[#allocation2 + $0x28] sm:$0xff]
  %v2087 = vld [vmem:[#allocation2 + $0x30] sm:$0xff]
  %v2088 = vld [vmem:[#allocation2 + $0x38] sm:$0xff]
  %v2089 = vld [vmem:[#allocation2 + $0x40] sm:$0xff]
  %v2090 = vld [vmem:[#allocation2 + $0x48] sm:$0xff]
  %v2091 = vld [vmem:[#allocation2 + $0x50] sm:$0xff]
  %v2092 = vld [vmem:[#allocation2 + $0x58] sm:$0xff]
  %v2093 = vld [vmem:[#allocation2 + $0x60] sm:$0xff]
  %v2094 = vld [vmem:[#allocation2 + $0x68] sm:$0xff]
  %v2095 = vld [vmem:[#allocation2 + $0x70] sm:$0xff]
  %v2096 = vld [vmem:[#allocation2 + $0x78] sm:$0xff]
  %v2097 = vld [vmem:[#allocation2 + $0x80] sm:$0xff]
  %v2098 = vld [vmem:[#allocation2 + $0x88] sm:$0xff]
  %v2099 = vld [vmem:[#allocation2 + $0x90] sm:$0xff]
  %v2100 = vld [vmem:[#allocation2 + $0x98] sm:$0xff]
  %v2101 = vld [vmem:[#allocation2 + $0xa0] sm:$0xff]
  %v2102 = vld [vmem:[#allocation2 + $0xa8] sm:$0xff]
  %v2103 = vld [vmem:[#allocation2 + $0xb0] sm:$0xff]
  %v2104 = vld [vmem:[#allocation2 + $0xb8] sm:$0xff]
  %v2105 = vld [vmem:[#allocation2 + $0xc0] sm:$0xff]
  %v2106 = vld [vmem:[#allocation2 + $0xc8] sm:$0xff]
  %v2107 = vld [vmem:[#allocation2 + $0xd0] sm:$0xff]
  %v2108 = vld [vmem:[#allocation2 + $0xd8] sm:$0xff]
  %v2109 = vld [vmem:[#allocation2 + $0xe0] sm:$0xff]
  %v2110 = vld [vmem:[#allocation2 + $0xe8] sm:$0xff]
  %v2111 = vld [vmem:[#allocation2 + $0xf0] sm:$0xff]
  %v2112 = vld [vmem:[#allocation2 + $0xf8] sm:$0xff]
  %v2113 = vld [vmem:[#allocation2 + $0x100] sm:$0xff]
  %v2114 = vld [vmem:[#allocation2 + $0x108] sm:$0xff]
  %v2115 = vld [vmem:[#allocation2 + $0x110] sm:$0xff]
  %v2116 = vld [vmem:[#allocation2 + $0x118] sm:$0xff]
  %v2117 = vld [vmem:[#allocation2 + $0x120] sm:$0xff]
  %v2118 = vld [vmem:[#allocation2 + $0x128] sm:$0xff]
  %v2119 = vld [vmem:[#allocation2 + $0x130] sm:$0xff]
  %v2120 = vld [vmem:[#allocation2 + $0x138] sm:$0xff]
  %v2121 = vld [vmem:[#allocation2 + $0x140] sm:$0xff]
  %v2122 = vld [vmem:[#allocation2 + $0x148] sm:$0xff]
  %v2123 = vld [vmem:[#allocation2 + $0x150] sm:$0xff]
  %v2124 = vld [vmem:[#allocation2 + $0x158] sm:$0xff]
  %v2125 = vld [vmem:[#allocation2 + $0x160] sm:$0xff]
  %v2126 = vld [vmem:[#allocation2 + $0x168] sm:$0xff]
  %v2127 = vld [vmem:[#allocation2 + $0x170] sm:$0xff]
  %v2128 = vld [vmem:[#allocation2 + $0x178] sm:$0xff]
  %v2129 = vld [vmem:[#allocation2 + $0x180] sm:$0xff]
  %v2130 = vld [vmem:[#allocation2 + $0x188] sm:$0xff]
  %v2131 = vld [vmem:[#allocation2 + $0x190] sm:$0xff]
  %v2132 = vld [vmem:[#allocation2 + $0x198] sm:$0xff]
  %v2133 = vld [vmem:[#allocation2 + $0x1a0] sm:$0xff]
  %v2134 = vld [vmem:[#allocation2 + $0x1a8] sm:$0xff]
  %v2135 = vld [vmem:[#allocation2 + $0x1b0] sm:$0xff]
  %v2136 = vld [vmem:[#allocation2 + $0x1b8] sm:$0xff]
  %v2137 = vld [vmem:[#allocation2 + $0x1c0] sm:$0xff]
  %v2138 = vld [vmem:[#allocation2 + $0x1c8] sm:$0xff]
  %v2139 = vld [vmem:[#allocation2 + $0x1d0] sm:$0xff]
  %v2140 = vld [vmem:[#allocation2 + $0x1d8] sm:$0xff]
  %v2141 = vld [vmem:[#allocation2 + $0x1e0] sm:$0xff]
  %v2142 = vld [vmem:[#allocation2 + $0x1e8] sm:$0xff]
  %v2143 = vld [vmem:[#allocation2 + $0x1f0] sm:$0xff]
  %v2144 = vld [vmem:[#allocation2 + $0x1f8] sm:$0xff]
  %v2145 = vld [vmem:[#allocation2 + $0x200] sm:$0xff]
  %v2146 = vld [vmem:[#allocation2 + $0x208] sm:$0xff]
  %v2147 = vld [vmem:[#allocation2 + $0x210] sm:$0xff]
  %v2148 = vld [vmem:[#allocation2 + $0x218] sm:$0xff]
  %v2149 = vld [vmem:[#allocation2 + $0x220] sm:$0xff]
  %v2150 = vld [vmem:[#allocation2 + $0x228] sm:$0xff]
  %v2151 = vld [vmem:[#allocation2 + $0x230] sm:$0xff]
  %v2152 = vld [vmem:[#allocation2 + $0x238] sm:$0xff]
  %v2153 = vld [vmem:[#allocation2 + $0x240] sm:$0xff]
  %v2154 = vld [vmem:[#allocation2 + $0x248] sm:$0xff]
  %v2155 = vld [vmem:[#allocation2 + $0x250] sm:$0xff]
  %v2156 = vld [vmem:[#allocation2 + $0x258] sm:$0xff]
  %v2157 = vld [vmem:[#allocation2 + $0x260] sm:$0xff]
  %v2158 = vld [vmem:[#allocation2 + $0x268] sm:$0xff]
  %v2159 = vld [vmem:[#allocation2 + $0x270] sm:$0xff]
  %v2160 = vld [vmem:[#allocation2 + $0x278] sm:$0xff]
  %v2161 = vld [vmem:[#allocation2 + $0x280] sm:$0xff]
  %v2162 = vld [vmem:[#allocation2 + $0x288] sm:$0xff]
  %v2163 = vld [vmem:[#allocation2 + $0x290] sm:$0xff]
  %v2164 = vld [vmem:[#allocation2 + $0x298] sm:$0xff]
  %v2165 = vld [vmem:[#allocation2 + $0x2a0] sm:$0xff]
  %v2166 = vld [vmem:[#allocation2 + $0x2a8] sm:$0xff]
  %v2167 = vld [vmem:[#allocation2 + $0x2b0] sm:$0xff]
  %v2168 = vld [vmem:[#allocation2 + $0x2b8] sm:$0xff]
  %v2169 = vld [vmem:[#allocation2 + $0x2c0] sm:$0xff]
  %v2170 = vld [vmem:[#allocation2 + $0x2c8] sm:$0xff]
  %v2171 = vld [vmem:[#allocation2 + $0x2d0] sm:$0xff]
  %v2172 = vld [vmem:[#allocation2 + $0x2d8] sm:$0xff]
  %v2173 = vld [vmem:[#allocation2 + $0x2e0] sm:$0xff]
  %v2174 = vld [vmem:[#allocation2 + $0x2e8] sm:$0xff]
  %v2175 = vld [vmem:[#allocation2 + $0x2f0] sm:$0xff]
  %v2176 = vld [vmem:[#allocation2 + $0x2f8] sm:$0xff]
  %v2177 = vld [vmem:[#allocation2 + $0x300] sm:$0xff]
  %v2178 = vld [vmem:[#allocation2 + $0x308] sm:$0xff]
  %v2179 = vld [vmem:[#allocation2 + $0x310] sm:$0xff]
  %v2180 = vld [vmem:[#allocation2 + $0x318] sm:$0xff]
  %v2181 = vld [vmem:[#allocation2 + $0x320] sm:$0xff]
  %v2182 = vld [vmem:[#allocation2 + $0x328] sm:$0xff]
  %v2183 = vld [vmem:[#allocation2 + $0x330] sm:$0xff]
  %v2184 = vld [vmem:[#allocation2 + $0x338] sm:$0xff]
  %v2185 = vld [vmem:[#allocation2 + $0x340] sm:$0xff]
  %v2186 = vld [vmem:[#allocation2 + $0x348] sm:$0xff]
  %v2187 = vld [vmem:[#allocation2 + $0x350] sm:$0xff]
  %v2188 = vld [vmem:[#allocation2 + $0x358] sm:$0xff]
  %v2189 = vld [vmem:[#allocation2 + $0x360] sm:$0xff]
  %v2190 = vld [vmem:[#allocation2 + $0x368] sm:$0xff]
  %v2191 = vld [vmem:[#allocation2 + $0x370] sm:$0xff]
  %v2192 = vld [vmem:[#allocation2 + $0x378] sm:$0xff]
  %v2193 = vld [vmem:[#allocation2 + $0x380] sm:$0xff]
  %v2194 = vld [vmem:[#allocation2 + $0x388] sm:$0xff]
  %v2195 = vld [vmem:[#allocation2 + $0x390] sm:$0xff]
  %v2196 = vld [vmem:[#allocation2 + $0x398] sm:$0xff]
  %v2197 = vld [vmem:[#allocation2 + $0x3a0] sm:$0xff]
  %v2198 = vld [vmem:[#allocation2 + $0x3a8] sm:$0xff]
  %v2199 = vld [vmem:[#allocation2 + $0x3b0] sm:$0xff]
  %v2200 = vld [vmem:[#allocation2 + $0x3b8] sm:$0xff]
  %v2201 = vld [vmem:[#allocation2 + $0x3c0] sm:$0xff]
  %v2202 = vld [vmem:[#allocation2 + $0x3c8] sm:$0xff]
  %v2203 = vld [vmem:[#allocation2 + $0x3d0] sm:$0xff]
  %v2204 = vld [vmem:[#allocation2 + $0x3d8] sm:$0xff]
  %v2205 = vld [vmem:[#allocation2 + $0x3e0] sm:$0xff]
  %v2206 = vld [vmem:[#allocation2 + $0x3e8] sm:$0xff]
  %v2207 = vld [vmem:[#allocation2 + $0x3f0] sm:$0xff]
  %v2208 = vld [vmem:[#allocation2 + $0x3f8] sm:$0xff]
  %v2209 = vld [vmem:[#allocation2 + $0x400] sm:$0xff]
  %v2210 = vld [vmem:[#allocation2 + $0x408] sm:$0xff]
  %v2211 = vld [vmem:[#allocation2 + $0x410] sm:$0xff]
  %v2212 = vld [vmem:[#allocation2 + $0x418] sm:$0xff]
  %v2213 = vld [vmem:[#allocation2 + $0x420] sm:$0xff]
  %v2214 = vld [vmem:[#allocation2 + $0x428] sm:$0xff]
  %v2215 = vld [vmem:[#allocation2 + $0x430] sm:$0xff]
  %v2216 = vld [vmem:[#allocation2 + $0x438] sm:$0xff]
  %v2217 = vld [vmem:[#allocation2 + $0x440] sm:$0xff]
  %v2218 = vld [vmem:[#allocation2 + $0x448] sm:$0xff]
  %v2219 = vld [vmem:[#allocation2 + $0x450] sm:$0xff]
  %v2220 = vld [vmem:[#allocation2 + $0x458] sm:$0xff]
  %v2221 = vld [vmem:[#allocation2 + $0x460] sm:$0xff]
  %v2222 = vld [vmem:[#allocation2 + $0x468] sm:$0xff]
  %v2223 = vld [vmem:[#allocation2 + $0x470] sm:$0xff]
  %v2224 = vld [vmem:[#allocation2 + $0x478] sm:$0xff]
  %v2225 = vld [vmem:[#allocation2 + $0x480] sm:$0xff]
  %v2226 = vld [vmem:[#allocation2 + $0x488] sm:$0xff]
  %v2227 = vld [vmem:[#allocation2 + $0x490] sm:$0xff]
  %v2228 = vld [vmem:[#allocation2 + $0x498] sm:$0xff]
  %v2229 = vld [vmem:[#allocation2 + $0x4a0] sm:$0xff]
  %v2230 = vld [vmem:[#allocation2 + $0x4a8] sm:$0xff]
  %v2231 = vld [vmem:[#allocation2 + $0x4b0] sm:$0xff]
  %v2232 = vld [vmem:[#allocation2 + $0x4b8] sm:$0xff]
  %v2233 = vld [vmem:[#allocation2 + $0x4c0] sm:$0xff]
  %v2234 = vld [vmem:[#allocation2 + $0x4c8] sm:$0xff]
  %v2235 = vld [vmem:[#allocation2 + $0x4d0] sm:$0xff]
  %v2236 = vld [vmem:[#allocation2 + $0x4d8] sm:$0xff]
  %v2237 = vld [vmem:[#allocation2 + $0x4e0] sm:$0xff]
  %v2238 = vld [vmem:[#allocation2 + $0x4e8] sm:$0xff]
  %v2239 = vld [vmem:[#allocation2 + $0x4f0] sm:$0xff]
  %v2240 = vld [vmem:[#allocation2 + $0x4f8] sm:$0xff]
  %v2241 = vld [vmem:[#allocation2 + $0x500] sm:$0xff]
  %v2242 = vld [vmem:[#allocation2 + $0x508] sm:$0xff]
  %v2243 = vld [vmem:[#allocation2 + $0x510] sm:$0xff]
  %v2244 = vld [vmem:[#allocation2 + $0x518] sm:$0xff]
  %v2245 = vld [vmem:[#allocation2 + $0x520] sm:$0xff]
  %v2246 = vld [vmem:[#allocation2 + $0x528] sm:$0xff]
  %v2247 = vld [vmem:[#allocation2 + $0x530] sm:$0xff]
  %v2248 = vld [vmem:[#allocation2 + $0x538] sm:$0xff]
  %v2249 = vld [vmem:[#allocation2 + $0x540] sm:$0xff]
  %v2250 = vld [vmem:[#allocation2 + $0x548] sm:$0xff]
  %v2251 = vld [vmem:[#allocation2 + $0x550] sm:$0xff]
  %v2252 = vld [vmem:[#allocation2 + $0x558] sm:$0xff]
  %v2253 = vld [vmem:[#allocation2 + $0x560] sm:$0xff]
  %v2254 = vld [vmem:[#allocation2 + $0x568] sm:$0xff]
  %v2255 = vld [vmem:[#allocation2 + $0x570] sm:$0xff]
  %v2256 = vld [vmem:[#allocation2 + $0x578] sm:$0xff]
  %v2257 = vld [vmem:[#allocation2 + $0x580] sm:$0xff]
  %v2258 = vld [vmem:[#allocation2 + $0x588] sm:$0xff]
  %v2259 = vld [vmem:[#allocation2 + $0x590] sm:$0xff]
  %v2260 = vld [vmem:[#allocation2 + $0x598] sm:$0xff]
  %v2261 = vld [vmem:[#allocation2 + $0x5a0] sm:$0xff]
  %v2262 = vld [vmem:[#allocation2 + $0x5a8] sm:$0xff]
  %v2263 = vld [vmem:[#allocation2 + $0x5b0] sm:$0xff]
  %v2264 = vld [vmem:[#allocation2 + $0x5b8] sm:$0xff]
  %v2265 = vld [vmem:[#allocation2 + $0x5c0] sm:$0xff]
  %v2266 = vld [vmem:[#allocation2 + $0x5c8] sm:$0xff]
  %v2267 = vld [vmem:[#allocation2 + $0x5d0] sm:$0xff]
  %v2268 = vld [vmem:[#allocation2 + $0x5d8] sm:$0xff]
  %v2269 = vld [vmem:[#allocation2 + $0x5e0] sm:$0xff]
  %v2270 = vld [vmem:[#allocation2 + $0x5e8] sm:$0xff]
  %v2271 = vld [vmem:[#allocation2 + $0x5f0] sm:$0xff]
  %v2272 = vld [vmem:[#allocation2 + $0x5f8] sm:$0xff]
  %v2273 = vld [vmem:[#allocation2 + $0x600] sm:$0xff]
  %v2274 = vld [vmem:[#allocation2 + $0x608] sm:$0xff]
  %v2275 = vld [vmem:[#allocation2 + $0x610] sm:$0xff]
  %v2276 = vld [vmem:[#allocation2 + $0x618] sm:$0xff]
  %v2277 = vld [vmem:[#allocation2 + $0x620] sm:$0xff]
  %v2278 = vld [vmem:[#allocation2 + $0x628] sm:$0xff]
  %v2279 = vld [vmem:[#allocation2 + $0x630] sm:$0xff]
  %v2280 = vld [vmem:[#allocation2 + $0x638] sm:$0xff]
  %v2281 = vld [vmem:[%s6] sm:$0xff]
  %v2282 = vld [vmem:[%s6 + $0x8] sm:$0xff]
  %v2283 = vld [vmem:[%s6 + $0x10] sm:$0xff]
  %v2284 = vld [vmem:[%s6 + $0x18] sm:$0xff]
  %v2285 = vld [vmem:[%s6 + $0x20] sm:$0xff]
  %v2286 = vld [vmem:[%s6 + $0x28] sm:$0xff]
  %v2287 = vld [vmem:[%s6 + $0x30] sm:$0xff]
  %v2288 = vld [vmem:[%s6 + $0x38] sm:$0xff]
  %v2289 = vld [vmem:[%s6 + $0x40] sm:$0xff]
  %v2290 = vld [vmem:[%s6 + $0x48] sm:$0xff]
  %v2291 = vld [vmem:[%s6 + $0x50] sm:$0xff]
  %v2292 = vld [vmem:[%s6 + $0x58] sm:$0xff]
  %v2293 = vld [vmem:[%s6 + $0x60] sm:$0xff]
  %v2294 = vld [vmem:[%s6 + $0x68] sm:$0xff]
  %v2295 = vld [vmem:[%s6 + $0x70] sm:$0xff]
  %v2296 = vld [vmem:[%s6 + $0x78] sm:$0xff]
  %2298 = vset.pattern.permute.xlu0 0
  %2299 = vperm.xlu0 %2298, %v2281
  %v2300 = vpop.permute.xlu0 %2299
  %2303 = vset.pattern.permute.xlu0 0
  %2304 = vperm.xlu0 %2303, %v2282
  %v2305 = vpop.permute.xlu0 %2304
  %2308 = vset.pattern.permute.xlu0 0
  %2309 = vperm.xlu0 %2308, %v2283
  %v2310 = vpop.permute.xlu0 %2309
  %2313 = vset.pattern.permute.xlu0 0
  %2314 = vperm.xlu0 %2313, %v2284
  %v2315 = vpop.permute.xlu0 %2314
  %2318 = vset.pattern.permute.xlu0 0
  %2319 = vperm.xlu0 %2318, %v2285
  %v2320 = vpop.permute.xlu0 %2319
  %2323 = vset.pattern.permute.xlu0 0
  %2324 = vperm.xlu0 %2323, %v2286
  %v2325 = vpop.permute.xlu0 %2324
  %2328 = vset.pattern.permute.xlu0 0
  %2329 = vperm.xlu0 %2328, %v2287
  %v2330 = vpop.permute.xlu0 %2329
  %2333 = vset.pattern.permute.xlu0 0
  %2334 = vperm.xlu0 %2333, %v2288
  %v2335 = vpop.permute.xlu0 %2334
  %2338 = vset.pattern.permute.xlu0 0
  %2339 = vperm.xlu0 %2338, %v2289
  %v2340 = vpop.permute.xlu0 %2339
  %2343 = vset.pattern.permute.xlu0 0
  %2344 = vperm.xlu0 %2343, %v2290
  %v2345 = vpop.permute.xlu0 %2344
  %2348 = vset.pattern.permute.xlu0 0
  %2349 = vperm.xlu0 %2348, %v2291
  %v2350 = vpop.permute.xlu0 %2349
  %2353 = vset.pattern.permute.xlu0 0
  %2354 = vperm.xlu0 %2353, %v2292
  %v2355 = vpop.permute.xlu0 %2354
  %2358 = vset.pattern.permute.xlu0 0
  %2359 = vperm.xlu0 %2358, %v2293
  %v2360 = vpop.permute.xlu0 %2359
  %2363 = vset.pattern.permute.xlu0 0
  %2364 = vperm.xlu0 %2363, %v2294
  %v2365 = vpop.permute.xlu0 %2364
  %2368 = vset.pattern.permute.xlu0 0
  %2369 = vperm.xlu0 %2368, %v2295
  %v2370 = vpop.permute.xlu0 %2369
  %2373 = vset.pattern.permute.xlu0 0
  %2374 = vperm.xlu0 %2373, %v2296
  %v2375 = vpop.permute.xlu0 %2374
  %vm2377 = vcmask 523264
  %v2379 = vsel %vm2377, %v1885, 0
  %v2382 = vsel %vm2377, %v1898, 0
  %v2385 = vsel %vm2377, %v1911, 0
  %v2388 = vsel %vm2377, %v1924, 0
  %v2391 = vsel %vm2377, %v1937, 0
  %v2394 = vsel %vm2377, %v1950, 0
  %v2397 = vsel %vm2377, %v1963, 0
  %v2400 = vsel %vm2377, %v1976, 0
  %v2403 = vsel %vm2377, %v1989, 0
  %v2406 = vsel %vm2377, %v2002, 0
  %v2409 = vsel %vm2377, %v2015, 0
  %v2412 = vsel %vm2377, %v2028, 0
  %v2415 = vsel %vm2377, %v2041, 0
  %v2418 = vsel %vm2377, %v2054, 0
  %v2421 = vsel %vm2377, %v2067, 0
  %v2424 = vsel %vm2377, %v2080, 0
  %2426 = vmatprep.subr.mxu0 0.0
  %2427 = vmatpush1.msra.mxu0 %v2081
  %2428 = vmatprep.subr.mxu0 0.0
  %2429 = vmatpush1.msra.mxu0 %v2082
  %2430 = vmatprep.subr.mxu0 0.0
  %2431 = vmatpush1.msra.mxu0 %v2083
  %2432 = vmatprep.subr.mxu0 0.0
  %2433 = vmatpush1.msra.mxu0 %v2084
  %2434 = vmatprep.subr.mxu0 0.0
  %2435 = vmatpush1.msra.mxu0 %v2085
  %2436 = vmatprep.subr.mxu0 0.0
  %2437 = vmatpush1.msra.mxu0 %v2086
  %2438 = vmatprep.subr.mxu0 0.0
  %2439 = vmatpush1.msra.mxu0 %v2087
  %2440 = vmatprep.subr.mxu0 0.0
  %2441 = vmatpush1.msra.mxu0 %v2088
  %2442 = vmatprep.subr.mxu0 0.0
  %2443 = vmatpush1.msra.mxu0 %v2089
  %2444 = vmatprep.subr.mxu0 0.0
  %2445 = vmatpush1.msra.mxu0 %v2090
  %2446 = vmatprep.subr.mxu0 0.0
  %2447 = vmatpush1.msra.mxu0 %v2091
  %2448 = vmatprep.subr.mxu0 0.0
  %2449 = vmatpush1.msra.mxu0 %v2092
  %2450 = vmatprep.subr.mxu0 0.0
  %2451 = vmatpush1.msra.mxu0 %v2093
  %2452 = vmatprep.subr.mxu0 0.0
  %2453 = vmatpush1.msra.mxu0 %v2094
  %2454 = vmatprep.subr.mxu0 0.0
  %2455 = vmatpush1.msra.mxu0 %v2095
  %2456 = vmatprep.subr.mxu0 0.0
  %2457 = vmatpush1.msra.mxu0 %v2096
  %2458 = vmatprep.subr.mxu0 0.0
  %2459 = vmatpush1.msra.mxu0 %v2097
  %2460 = vmatprep.subr.mxu0 0.0
  %2461 = vmatpush1.msra.mxu0 %v2098
  %2462 = vmatprep.subr.mxu0 0.0
  %2463 = vmatpush1.msra.mxu0 %v2099
  %2464 = vmatprep.subr.mxu0 0.0
  %2465 = vmatpush1.msra.mxu0 %v2100
  %2466 = vmatprep.subr.mxu0 0.0
  %2467 = vmatpush1.msra.mxu0 %v2101
  %2468 = vmatprep.subr.mxu0 0.0
  %2469 = vmatpush1.msra.mxu0 %v2102
  %2470 = vmatprep.subr.mxu0 0.0
  %2471 = vmatpush1.msra.mxu0 %v2103
  %2472 = vmatprep.subr.mxu0 0.0
  %2473 = vmatpush1.msra.mxu0 %v2104
  %2474 = vmatprep.subr.mxu0 0.0
  %2475 = vmatpush1.msra.mxu0 %v2105
  %2476 = vmatprep.subr.mxu0 0.0
  %2477 = vmatpush1.msra.mxu0 %v2106
  %2478 = vmatprep.subr.mxu0 0.0
  %2479 = vmatpush1.msra.mxu0 %v2107
  %2480 = vmatprep.subr.mxu0 0.0
  %2481 = vmatpush1.msra.mxu0 %v2108
  %2482 = vmatprep.subr.mxu0 0.0
  %2483 = vmatpush1.msra.mxu0 %v2109
  %2484 = vmatprep.subr.mxu0 0.0
  %2485 = vmatpush1.msra.mxu0 %v2110
  %2486 = vmatprep.subr.mxu0 0.0
  %2487 = vmatpush1.msra.mxu0 %v2111
  %2488 = vmatprep.subr.mxu0 0.0
  %2489 = vmatpush1.msra.mxu0 %v2112
  %2490 = vmatprep.mubr.f32.mxu0 %v1874
  %2491 = vmatmul.mubr.f32.gmra.mrb[0].mxu0 %v1873
  %v2492 = vpop.f32.mrb[0].mxu0
  %v2493 = vadd.f32 %v2300, %v2492
  %v2494 = vpop.f32.mrb[0].mxu0
  %2495 = vmatprep.mubr.f32.mxu0 %v1887
  %2496 = vmatmul.mubr.f32.gmra.mrb[0].mxu0 %v1886
  %v2497 = vpop.f32.mrb[0].mxu0
  %v2498 = vadd.f32 %v2305, %v2497
  %v2499 = vpop.f32.mrb[0].mxu0
  %2500 = vmatprep.mubr.f32.mxu0 %v1900
  %2501 = vmatmul.mubr.f32.gmra.mrb[0].mxu0 %v1899
  %v2502 = vpop.f32.mrb[0].mxu0
  %v2503 = vadd.f32 %v2310, %v2502
  %v2504 = vpop.f32.mrb[0].mxu0
  %2505 = vmatprep.mubr.f32.mxu0 %v1913
  %2506 = vmatmul.mubr.f32.gmra.mrb[0].mxu0 %v1912
  %v2507 = vpop.f32.mrb[0].mxu0
  %v2508 = vadd.f32 %v2315, %v2507
  %v2509 = vpop.f32.mrb[0].mxu0
  %2510 = vmatprep.mubr.f32.mxu0 %v1926
  %2511 = vmatmul.mubr.f32.gmra.mrb[0].mxu0 %v1925
  %v2512 = vpop.f32.mrb[0].mxu0
  %v2513 = vadd.f32 %v2320, %v2512
  %v2514 = vpop.f32.mrb[0].mxu0
  %2515 = vmatprep.mubr.f32.mxu0 %v1939
  %2516 = vmatmul.mubr.f32.gmra.mrb[0].mxu0 %v1938
  %v2517 = vpop.f32.mrb[0].mxu0
  %v2518 = vadd.f32 %v2325, %v2517
  %v2519 = vpop.f32.mrb[0].mxu0
  %2520 = vmatprep.mubr.f32.mxu0 %v1952
  %2521 = vmatmul.mubr.f32.gmra.mrb[0].mxu0 %v1951
  %v2522 = vpop.f32.mrb[0].mxu0
  %v2523 = vadd.f32 %v2330, %v2522
  %v2524 = vpop.f32.mrb[0].mxu0
  %2525 = vmatprep.mubr.f32.mxu0 %v1965
  %2526 = vmatmul.mubr.f32.gmra.mrb[0].mxu0 %v1964
  %v2527 = vpop.f32.mrb[0].mxu0
  %v2528 = vadd.f32 %v2335, %v2527
  %v2529 = vpop.f32.mrb[0].mxu0
  %2530 = vmatprep.mubr.f32.mxu0 %v1978
  %2531 = vmatmul.mubr.f32.gmra.mrb[0].mxu0 %v1977
  %v2532 = vpop.f32.mrb[0].mxu0
  %v2533 = vadd.f32 %v2340, %v2532
  %v2534 = vpop.f32.mrb[0].mxu0
  %2535 = vmatprep.mubr.f32.mxu0 %v1991
  %2536 = vmatmul.mubr.f32.gmra.mrb[0].mxu0 %v1990
  %v2537 = vpop.f32.mrb[0].mxu0
  %v2538 = vadd.f32 %v2345, %v2537
  %v2539 = vpop.f32.mrb[0].mxu0
  %2540 = vmatprep.mubr.f32.mxu0 %v2004
  %2541 = vmatmul.mubr.f32.gmra.mrb[0].mxu0 %v2003
  %v2542 = vpop.f32.mrb[0].mxu0
  %v2543 = vadd.f32 %v2350, %v2542
  %v2544 = vpop.f32.mrb[0].mxu0
  %2545 = vmatprep.mubr.f32.mxu0 %v2017
  %2546 = vmatmul.mubr.f32.gmra.mrb[0].mxu0 %v2016
  %v2547 = vpop.f32.mrb[0].mxu0
  %v2548 = vadd.f32 %v2355, %v2547
  %v2549 = vpop.f32.mrb[0].mxu0
  %2550 = vmatprep.mubr.f32.mxu0 %v2030
  %2551 = vmatmul.mubr.f32.gmra.mrb[0].mxu0 %v2029
  %v2552 = vpop.f32.mrb[0].mxu0
  %v2553 = vadd.f32 %v2360, %v2552
  %v2554 = vpop.f32.mrb[0].mxu0
  %2555 = vmatprep.mubr.f32.mxu0 %v2043
  %2556 = vmatmul.mubr.f32.gmra.mrb[0].mxu0 %v2042
  %v2557 = vpop.f32.mrb[0].mxu0
  %v2558 = vadd.f32 %v2365, %v2557
  %v2559 = vpop.f32.mrb[0].mxu0
  %2560 = vmatprep.mubr.f32.mxu0 %v2056
  %2561 = vmatmul.mubr.f32.gmra.mrb[0].mxu0 %v2055
  %v2562 = vpop.f32.mrb[0].mxu0
  %v2563 = vadd.f32 %v2370, %v2562
  %v2564 = vpop.f32.mrb[0].mxu0
  %2565 = vmatprep.mubr.f32.mxu0 %v2069
  %2566 = vmatmul.mubr.f32.gmra.mrb[0].mxu0 %v2068
  %v2567 = vpop.f32.mrb[0].mxu0
  %v2568 = vadd.f32 %v2375, %v2567
  %v2569 = vpop.f32.mrb[0].mxu0
  %2570 = vdwg.mxu0
  %2571 = vmatprep.subr.mxu0 0.0
  %2572 = vmatpush1.msra.mxu0 %v2113
  %2573 = vmatprep.subr.mxu0 0.0
  %2574 = vmatpush1.msra.mxu0 %v2114
  %2575 = vmatprep.subr.mxu0 0.0
  %2576 = vmatpush1.msra.mxu0 %v2115
  %2577 = vmatprep.subr.mxu0 0.0
  %2578 = vmatpush1.msra.mxu0 %v2116
  %2579 = vmatprep.subr.mxu0 0.0
  %2580 = vmatpush1.msra.mxu0 %v2117
  %2581 = vmatprep.subr.mxu0 0.0
  %2582 = vmatpush1.msra.mxu0 %v2118
  %2583 = vmatprep.subr.mxu0 0.0
  %2584 = vmatpush1.msra.mxu0 %v2119
  %2585 = vmatprep.subr.mxu0 0.0
  %2586 = vmatpush1.msra.mxu0 %v2120
  %2587 = vmatprep.subr.mxu0 0.0
  %2588 = vmatpush1.msra.mxu0 %v2121
  %2589 = vmatprep.subr.mxu0 0.0
  %2590 = vmatpush1.msra.mxu0 %v2122
  %2591 = vmatprep.subr.mxu0 0.0
  %2592 = vmatpush1.msra.mxu0 %v2123
  %2593 = vmatprep.subr.mxu0 0.0
  %2594 = vmatpush1.msra.mxu0 %v2124
  %2595 = vmatprep.subr.mxu0 0.0
  %2596 = vmatpush1.msra.mxu0 %v2125
  %2597 = vmatprep.subr.mxu0 0.0
  %2598 = vmatpush1.msra.mxu0 %v2126
  %2599 = vmatprep.subr.mxu0 0.0
  %2600 = vmatpush1.msra.mxu0 %v2127
  %2601 = vmatprep.subr.mxu0 0.0
  %2602 = vmatpush1.msra.mxu0 %v2128
  %2603 = vmatprep.subr.mxu0 0.0
  %2604 = vmatpush1.msra.mxu0 %v2129
  %2605 = vmatprep.subr.mxu0 0.0
  %2606 = vmatpush1.msra.mxu0 %v2130
  %2607 = vmatprep.subr.mxu0 0.0
  %2608 = vmatpush1.msra.mxu0 %v2131
  %2609 = vmatprep.subr.mxu0 0.0
  %2610 = vmatpush1.msra.mxu0 %v2132
  %2611 = vmatprep.subr.mxu0 0.0
  %2612 = vmatpush1.msra.mxu0 %v2133
  %2613 = vmatprep.subr.mxu0 0.0
  %2614 = vmatpush1.msra.mxu0 %v2134
  %2615 = vmatprep.subr.mxu0 0.0
  %2616 = vmatpush1.msra.mxu0 %v2135
  %2617 = vmatprep.subr.mxu0 0.0
  %2618 = vmatpush1.msra.mxu0 %v2136
  %2619 = vmatprep.subr.mxu0 0.0
  %2620 = vmatpush1.msra.mxu0 %v2137
  %2621 = vmatprep.subr.mxu0 0.0
  %2622 = vmatpush1.msra.mxu0 %v2138
  %2623 = vmatprep.subr.mxu0 0.0
  %2624 = vmatpush1.msra.mxu0 %v2139
  %2625 = vmatprep.subr.mxu0 0.0
  %2626 = vmatpush1.msra.mxu0 %v2140
  %2627 = vmatprep.subr.mxu0 0.0
  %2628 = vmatpush1.msra.mxu0 %v2141
  %2629 = vmatprep.subr.mxu0 0.0
  %2630 = vmatpush1.msra.mxu0 %v2142
  %2631 = vmatprep.subr.mxu0 0.0
  %2632 = vmatpush1.msra.mxu0 %v2143
  %2633 = vmatprep.subr.mxu0 0.0
  %2634 = vmatpush1.msra.mxu0 %v2144
  %2635 = vmatprep.mubr.f32.mxu0 %v1876
  %2636 = vmatmul.mubr.f32.gmra.mrb[0].mxu0 %v1875
  %v2637 = vpop.f32.mrb[0].mxu0
  %v2638 = vadd.f32 %v2493, %v2637
  %v2639 = vpop.f32.mrb[0].mxu0
  %2640 = vmatprep.mubr.f32.mxu0 %v1889
  %2641 = vmatmul.mubr.f32.gmra.mrb[0].mxu0 %v1888
  %v2642 = vpop.f32.mrb[0].mxu0
  %v2643 = vadd.f32 %v2498, %v2642
  %v2644 = vpop.f32.mrb[0].mxu0
  %2645 = vmatprep.mubr.f32.mxu0 %v1902
  %2646 = vmatmul.mubr.f32.gmra.mrb[0].mxu0 %v1901
  %v2647 = vpop.f32.mrb[0].mxu0
  %v2648 = vadd.f32 %v2503, %v2647
  %v2649 = vpop.f32.mrb[0].mxu0
  %2650 = vmatprep.mubr.f32.mxu0 %v1915
  %2651 = vmatmul.mubr.f32.gmra.mrb[0].mxu0 %v1914
  %v2652 = vpop.f32.mrb[0].mxu0
  %v2653 = vadd.f32 %v2508, %v2652
  %v2654 = vpop.f32.mrb[0].mxu0
  %2655 = vmatprep.mubr.f32.mxu0 %v1928
  %2656 = vmatmul.mubr.f32.gmra.mrb[0].mxu0 %v1927
  %v2657 = vpop.f32.mrb[0].mxu0
  %v2658 = vadd.f32 %v2513, %v2657
  %v2659 = vpop.f32.mrb[0].mxu0
  %2660 = vmatprep.mubr.f32.mxu0 %v1941
  %2661 = vmatmul.mubr.f32.gmra.mrb[0].mxu0 %v1940
  %v2662 = vpop.f32.mrb[0].mxu0
  %v2663 = vadd.f32 %v2518, %v2662
  %v2664 = vpop.f32.mrb[0].mxu0
  %2665 = vmatprep.mubr.f32.mxu0 %v1954
  %2666 = vmatmul.mubr.f32.gmra.mrb[0].mxu0 %v1953
  %v2667 = vpop.f32.mrb[0].mxu0
  %v2668 = vadd.f32 %v2523, %v2667
  %v2669 = vpop.f32.mrb[0].mxu0
  %2670 = vmatprep.mubr.f32.mxu0 %v1967
  %2671 = vmatmul.mubr.f32.gmra.mrb[0].mxu0 %v1966
  %v2672 = vpop.f32.mrb[0].mxu0
  %v2673 = vadd.f32 %v2528, %v2672
  %v2674 = vpop.f32.mrb[0].mxu0
  %2675 = vmatprep.mubr.f32.mxu0 %v1980
  %2676 = vmatmul.mubr.f32.gmra.mrb[0].mxu0 %v1979
  %v2677 = vpop.f32.mrb[0].mxu0
  %v2678 = vadd.f32 %v2533, %v2677
  %v2679 = vpop.f32.mrb[0].mxu0
  %2680 = vmatprep.mubr.f32.mxu0 %v1993
  %2681 = vmatmul.mubr.f32.gmra.mrb[0].mxu0 %v1992
  %v2682 = vpop.f32.mrb[0].mxu0
  %v2683 = vadd.f32 %v2538, %v2682
  %v2684 = vpop.f32.mrb[0].mxu0
  %2685 = vmatprep.mubr.f32.mxu0 %v2006
  %2686 = vmatmul.mubr.f32.gmra.mrb[0].mxu0 %v2005
  %v2687 = vpop.f32.mrb[0].mxu0
  %v2688 = vadd.f32 %v2543, %v2687
  %v2689 = vpop.f32.mrb[0].mxu0
  %2690 = vmatprep.mubr.f32.mxu0 %v2019
  %2691 = vmatmul.mubr.f32.gmra.mrb[0].mxu0 %v2018
  %v2692 = vpop.f32.mrb[0].mxu0
  %v2693 = vadd.f32 %v2548, %v2692
  %v2694 = vpop.f32.mrb[0].mxu0
  %2695 = vmatprep.mubr.f32.mxu0 %v2032
  %2696 = vmatmul.mubr.f32.gmra.mrb[0].mxu0 %v2031
  %v2697 = vpop.f32.mrb[0].mxu0
  %v2698 = vadd.f32 %v2553, %v2697
  %v2699 = vpop.f32.mrb[0].mxu0
  %2700 = vmatprep.mubr.f32.mxu0 %v2045
  %2701 = vmatmul.mubr.f32.gmra.mrb[0].mxu0 %v2044
  %v2702 = vpop.f32.mrb[0].mxu0
  %v2703 = vadd.f32 %v2558, %v2702
  %v2704 = vpop.f32.mrb[0].mxu0
  %2705 = vmatprep.mubr.f32.mxu0 %v2058
  %2706 = vmatmul.mubr.f32.gmra.mrb[0].mxu0 %v2057
  %v2707 = vpop.f32.mrb[0].mxu0
  %v2708 = vadd.f32 %v2563, %v2707
  %v2709 = vpop.f32.mrb[0].mxu0
  %2710 = vmatprep.mubr.f32.mxu0 %v2071
  %2711 = vmatmul.mubr.f32.gmra.mrb[0].mxu0 %v2070
  %v2712 = vpop.f32.mrb[0].mxu0
  %v2713 = vadd.f32 %v2568, %v2712
  %v2714 = vpop.f32.mrb[0].mxu0
  %2715 = vdwg.mxu0
  %2716 = vmatprep.subr.mxu0 0.0
  %2717 = vmatpush1.msra.mxu0 %v2145
  %2718 = vmatprep.subr.mxu0 0.0
  %2719 = vmatpush1.msra.mxu0 %v2146
  %2720 = vmatprep.subr.mxu0 0.0
  %2721 = vmatpush1.msra.mxu0 %v2147
  %2722 = vmatprep.subr.mxu0 0.0
  %2723 = vmatpush1.msra.mxu0 %v2148
  %2724 = vmatprep.subr.mxu0 0.0
  %2725 = vmatpush1.msra.mxu0 %v2149
  %2726 = vmatprep.subr.mxu0 0.0
  %2727 = vmatpush1.msra.mxu0 %v2150
  %2728 = vmatprep.subr.mxu0 0.0
  %2729 = vmatpush1.msra.mxu0 %v2151
  %2730 = vmatprep.subr.mxu0 0.0
  %2731 = vmatpush1.msra.mxu0 %v2152
  %2732 = vmatprep.subr.mxu0 0.0
  %2733 = vmatpush1.msra.mxu0 %v2153
  %2734 = vmatprep.subr.mxu0 0.0
  %2735 = vmatpush1.msra.mxu0 %v2154
  %2736 = vmatprep.subr.mxu0 0.0
  %2737 = vmatpush1.msra.mxu0 %v2155
  %2738 = vmatprep.subr.mxu0 0.0
  %2739 = vmatpush1.msra.mxu0 %v2156
  %2740 = vmatprep.subr.mxu0 0.0
  %2741 = vmatpush1.msra.mxu0 %v2157
  %2742 = vmatprep.subr.mxu0 0.0
  %2743 = vmatpush1.msra.mxu0 %v2158
  %2744 = vmatprep.subr.mxu0 0.0
  %2745 = vmatpush1.msra.mxu0 %v2159
  %2746 = vmatprep.subr.mxu0 0.0
  %2747 = vmatpush1.msra.mxu0 %v2160
  %2748 = vmatprep.subr.mxu0 0.0
  %2749 = vmatpush1.msra.mxu0 %v2161
  %2750 = vmatprep.subr.mxu0 0.0
  %2751 = vmatpush1.msra.mxu0 %v2162
  %2752 = vmatprep.subr.mxu0 0.0
  %2753 = vmatpush1.msra.mxu0 %v2163
  %2754 = vmatprep.subr.mxu0 0.0
  %2755 = vmatpush1.msra.mxu0 %v2164
  %2756 = vmatprep.subr.mxu0 0.0
  %2757 = vmatpush1.msra.mxu0 %v2165
  %2758 = vmatprep.subr.mxu0 0.0
  %2759 = vmatpush1.msra.mxu0 %v2166
  %2760 = vmatprep.subr.mxu0 0.0
  %2761 = vmatpush1.msra.mxu0 %v2167
  %2762 = vmatprep.subr.mxu0 0.0
  %2763 = vmatpush1.msra.mxu0 %v2168
  %2764 = vmatprep.subr.mxu0 0.0
  %2765 = vmatpush1.msra.mxu0 %v2169
  %2766 = vmatprep.subr.mxu0 0.0
  %2767 = vmatpush1.msra.mxu0 %v2170
  %2768 = vmatprep.subr.mxu0 0.0
  %2769 = vmatpush1.msra.mxu0 %v2171
  %2770 = vmatprep.subr.mxu0 0.0
  %2771 = vmatpush1.msra.mxu0 %v2172
  %2772 = vmatprep.subr.mxu0 0.0
  %2773 = vmatpush1.msra.mxu0 %v2173
  %2774 = vmatprep.subr.mxu0 0.0
  %2775 = vmatpush1.msra.mxu0 %v2174
  %2776 = vmatprep.subr.mxu0 0.0
  %2777 = vmatpush1.msra.mxu0 %v2175
  %2778 = vmatprep.subr.mxu0 0.0
  %2779 = vmatpush1.msra.mxu0 %v2176
  %2780 = vmatprep.mubr.f32.mxu0 %v1878
  %2781 = vmatmul.mubr.f32.gmra.mrb[0].mxu0 %v1877
  %v2782 = vpop.f32.mrb[0].mxu0
  %v2783 = vadd.f32 %v2638, %v2782
  %v2784 = vpop.f32.mrb[0].mxu0
  %2785 = vmatprep.mubr.f32.mxu0 %v1891
  %2786 = vmatmul.mubr.f32.gmra.mrb[0].mxu0 %v1890
  %v2787 = vpop.f32.mrb[0].mxu0
  %v2788 = vadd.f32 %v2643, %v2787
  %v2789 = vpop.f32.mrb[0].mxu0
  %2790 = vmatprep.mubr.f32.mxu0 %v1904
  %2791 = vmatmul.mubr.f32.gmra.mrb[0].mxu0 %v1903
  %v2792 = vpop.f32.mrb[0].mxu0
  %v2793 = vadd.f32 %v2648, %v2792
  %v2794 = vpop.f32.mrb[0].mxu0
  %2795 = vmatprep.mubr.f32.mxu0 %v1917
  %2796 = vmatmul.mubr.f32.gmra.mrb[0].mxu0 %v1916
  %v2797 = vpop.f32.mrb[0].mxu0
  %v2798 = vadd.f32 %v2653, %v2797
  %v2799 = vpop.f32.mrb[0].mxu0
  %2800 = vmatprep.mubr.f32.mxu0 %v1930
  %2801 = vmatmul.mubr.f32.gmra.mrb[0].mxu0 %v1929
  %v2802 = vpop.f32.mrb[0].mxu0
  %v2803 = vadd.f32 %v2658, %v2802
  %v2804 = vpop.f32.mrb[0].mxu0
  %2805 = vmatprep.mubr.f32.mxu0 %v1943
  %2806 = vmatmul.mubr.f32.gmra.mrb[0].mxu0 %v1942
  %v2807 = vpop.f32.mrb[0].mxu0
  %v2808 = vadd.f32 %v2663, %v2807
  %v2809 = vpop.f32.mrb[0].mxu0
  %2810 = vmatprep.mubr.f32.mxu0 %v1956
  %2811 = vmatmul.mubr.f32.gmra.mrb[0].mxu0 %v1955
  %v2812 = vpop.f32.mrb[0].mxu0
  %v2813 = vadd.f32 %v2668, %v2812
  %v2814 = vpop.f32.mrb[0].mxu0
  %2815 = vmatprep.mubr.f32.mxu0 %v1969
  %2816 = vmatmul.mubr.f32.gmra.mrb[0].mxu0 %v1968
  %v2817 = vpop.f32.mrb[0].mxu0
  %v2818 = vadd.f32 %v2673, %v2817
  %v2819 = vpop.f32.mrb[0].mxu0
  %2820 = vmatprep.mubr.f32.mxu0 %v1982
  %2821 = vmatmul.mubr.f32.gmra.mrb[0].mxu0 %v1981
  %v2822 = vpop.f32.mrb[0].mxu0
  %v2823 = vadd.f32 %v2678, %v2822
  %v2824 = vpop.f32.mrb[0].mxu0
  %2825 = vmatprep.mubr.f32.mxu0 %v1995
  %2826 = vmatmul.mubr.f32.gmra.mrb[0].mxu0 %v1994
  %v2827 = vpop.f32.mrb[0].mxu0
  %v2828 = vadd.f32 %v2683, %v2827
  %v2829 = vpop.f32.mrb[0].mxu0
  %2830 = vmatprep.mubr.f32.mxu0 %v2008
  %2831 = vmatmul.mubr.f32.gmra.mrb[0].mxu0 %v2007
  %v2832 = vpop.f32.mrb[0].mxu0
  %v2833 = vadd.f32 %v2688, %v2832
  %v2834 = vpop.f32.mrb[0].mxu0
  %2835 = vmatprep.mubr.f32.mxu0 %v2021
  %2836 = vmatmul.mubr.f32.gmra.mrb[0].mxu0 %v2020
  %v2837 = vpop.f32.mrb[0].mxu0
  %v2838 = vadd.f32 %v2693, %v2837
  %v2839 = vpop.f32.mrb[0].mxu0
  %2840 = vmatprep.mubr.f32.mxu0 %v2034
  %2841 = vmatmul.mubr.f32.gmra.mrb[0].mxu0 %v2033
  %v2842 = vpop.f32.mrb[0].mxu0
  %v2843 = vadd.f32 %v2698, %v2842
  %v2844 = vpop.f32.mrb[0].mxu0
  %2845 = vmatprep.mubr.f32.mxu0 %v2047
  %2846 = vmatmul.mubr.f32.gmra.mrb[0].mxu0 %v2046
  %v2847 = vpop.f32.mrb[0].mxu0
  %v2848 = vadd.f32 %v2703, %v2847
  %v2849 = vpop.f32.mrb[0].mxu0
  %2850 = vmatprep.mubr.f32.mxu0 %v2060
  %2851 = vmatmul.mubr.f32.gmra.mrb[0].mxu0 %v2059
  %v2852 = vpop.f32.mrb[0].mxu0
  %v2853 = vadd.f32 %v2708, %v2852
  %v2854 = vpop.f32.mrb[0].mxu0
  %2855 = vmatprep.mubr.f32.mxu0 %v2073
  %2856 = vmatmul.mubr.f32.gmra.mrb[0].mxu0 %v2072
  %v2857 = vpop.f32.mrb[0].mxu0
  %v2858 = vadd.f32 %v2713, %v2857
  %v2859 = vpop.f32.mrb[0].mxu0
  %2860 = vdwg.mxu0
  %2861 = vmatprep.subr.mxu0 0.0
  %2862 = vmatpush1.msra.mxu0 %v2177
  %2863 = vmatprep.subr.mxu0 0.0
  %2864 = vmatpush1.msra.mxu0 %v2178
  %2865 = vmatprep.subr.mxu0 0.0
  %2866 = vmatpush1.msra.mxu0 %v2179
  %2867 = vmatprep.subr.mxu0 0.0
  %2868 = vmatpush1.msra.mxu0 %v2180
  %2869 = vmatprep.subr.mxu0 0.0
  %2870 = vmatpush1.msra.mxu0 %v2181
  %2871 = vmatprep.subr.mxu0 0.0
  %2872 = vmatpush1.msra.mxu0 %v2182
  %2873 = vmatprep.subr.mxu0 0.0
  %2874 = vmatpush1.msra.mxu0 %v2183
  %2875 = vmatprep.subr.mxu0 0.0
  %2876 = vmatpush1.msra.mxu0 %v2184
  %2877 = vmatprep.subr.mxu0 0.0
  %2878 = vmatpush1.msra.mxu0 %v2185
  %2879 = vmatprep.subr.mxu0 0.0
  %2880 = vmatpush1.msra.mxu0 %v2186
  %2881 = vmatprep.subr.mxu0 0.0
  %2882 = vmatpush1.msra.mxu0 %v2187
  %2883 = vmatprep.subr.mxu0 0.0
  %2884 = vmatpush1.msra.mxu0 %v2188
  %2885 = vmatprep.subr.mxu0 0.0
  %2886 = vmatpush1.msra.mxu0 %v2189
  %2887 = vmatprep.subr.mxu0 0.0
  %2888 = vmatpush1.msra.mxu0 %v2190
  %2889 = vmatprep.subr.mxu0 0.0
  %2890 = vmatpush1.msra.mxu0 %v2191
  %2891 = vmatprep.subr.mxu0 0.0
  %2892 = vmatpush1.msra.mxu0 %v2192
  %2893 = vmatprep.subr.mxu0 0.0
  %2894 = vmatpush1.msra.mxu0 %v2193
  %2895 = vmatprep.subr.mxu0 0.0
  %2896 = vmatpush1.msra.mxu0 %v2194
  %2897 = vmatprep.subr.mxu0 0.0
  %2898 = vmatpush1.msra.mxu0 %v2195
  %2899 = vmatprep.subr.mxu0 0.0
  %2900 = vmatpush1.msra.mxu0 %v2196
  %2901 = vmatprep.subr.mxu0 0.0
  %2902 = vmatpush1.msra.mxu0 %v2197
  %2903 = vmatprep.subr.mxu0 0.0
  %2904 = vmatpush1.msra.mxu0 %v2198
  %2905 = vmatprep.subr.mxu0 0.0
  %2906 = vmatpush1.msra.mxu0 %v2199
  %2907 = vmatprep.subr.mxu0 0.0
  %2908 = vmatpush1.msra.mxu0 %v2200
  %2909 = vmatprep.subr.mxu0 0.0
  %2910 = vmatpush1.msra.mxu0 %v2201
  %2911 = vmatprep.subr.mxu0 0.0
  %2912 = vmatpush1.msra.mxu0 %v2202
  %2913 = vmatprep.subr.mxu0 0.0
  %2914 = vmatpush1.msra.mxu0 %v2203
  %2915 = vmatprep.subr.mxu0 0.0
  %2916 = vmatpush1.msra.mxu0 %v2204
  %2917 = vmatprep.subr.mxu0 0.0
  %2918 = vmatpush1.msra.mxu0 %v2205
  %2919 = vmatprep.subr.mxu0 0.0
  %2920 = vmatpush1.msra.mxu0 %v2206
  %2921 = vmatprep.subr.mxu0 0.0
  %2922 = vmatpush1.msra.mxu0 %v2207
  %2923 = vmatprep.subr.mxu0 0.0
  %2924 = vmatpush1.msra.mxu0 %v2208
  %2925 = vmatprep.mubr.f32.mxu0 %v1880
  %2926 = vmatmul.mubr.f32.gmra.mrb[0].mxu0 %v1879
  %v2927 = vpop.f32.mrb[0].mxu0
  %v2928 = vadd.f32 %v2783, %v2927
  %v2929 = vpop.f32.mrb[0].mxu0
  %2930 = vmatprep.mubr.f32.mxu0 %v1893
  %2931 = vmatmul.mubr.f32.gmra.mrb[0].mxu0 %v1892
  %v2932 = vpop.f32.mrb[0].mxu0
  %v2933 = vadd.f32 %v2788, %v2932
  %v2934 = vpop.f32.mrb[0].mxu0
  %2935 = vmatprep.mubr.f32.mxu0 %v1906
  %2936 = vmatmul.mubr.f32.gmra.mrb[0].mxu0 %v1905
  %v2937 = vpop.f32.mrb[0].mxu0
  %v2938 = vadd.f32 %v2793, %v2937
  %v2939 = vpop.f32.mrb[0].mxu0
  %2940 = vmatprep.mubr.f32.mxu0 %v1919
  %2941 = vmatmul.mubr.f32.gmra.mrb[0].mxu0 %v1918
  %v2942 = vpop.f32.mrb[0].mxu0
  %v2943 = vadd.f32 %v2798, %v2942
  %v2944 = vpop.f32.mrb[0].mxu0
  %2945 = vmatprep.mubr.f32.mxu0 %v1932
  %2946 = vmatmul.mubr.f32.gmra.mrb[0].mxu0 %v1931
  %v2947 = vpop.f32.mrb[0].mxu0
  %v2948 = vadd.f32 %v2803, %v2947
  %v2949 = vpop.f32.mrb[0].mxu0
  %2950 = vmatprep.mubr.f32.mxu0 %v1945
  %2951 = vmatmul.mubr.f32.gmra.mrb[0].mxu0 %v1944
  %v2952 = vpop.f32.mrb[0].mxu0
  %v2953 = vadd.f32 %v2808, %v2952
  %v2954 = vpop.f32.mrb[0].mxu0
  %2955 = vmatprep.mubr.f32.mxu0 %v1958
  %2956 = vmatmul.mubr.f32.gmra.mrb[0].mxu0 %v1957
  %v2957 = vpop.f32.mrb[0].mxu0
  %v2958 = vadd.f32 %v2813, %v2957
  %v2959 = vpop.f32.mrb[0].mxu0
  %2960 = vmatprep.mubr.f32.mxu0 %v1971
  %2961 = vmatmul.mubr.f32.gmra.mrb[0].mxu0 %v1970
  %v2962 = vpop.f32.mrb[0].mxu0
  %v2963 = vadd.f32 %v2818, %v2962
  %v2964 = vpop.f32.mrb[0].mxu0
  %2965 = vmatprep.mubr.f32.mxu0 %v1984
  %2966 = vmatmul.mubr.f32.gmra.mrb[0].mxu0 %v1983
  %v2967 = vpop.f32.mrb[0].mxu0
  %v2968 = vadd.f32 %v2823, %v2967
  %v2969 = vpop.f32.mrb[0].mxu0
  %2970 = vmatprep.mubr.f32.mxu0 %v1997
  %2971 = vmatmul.mubr.f32.gmra.mrb[0].mxu0 %v1996
  %v2972 = vpop.f32.mrb[0].mxu0
  %v2973 = vadd.f32 %v2828, %v2972
  %v2974 = vpop.f32.mrb[0].mxu0
  %2975 = vmatprep.mubr.f32.mxu0 %v2010
  %2976 = vmatmul.mubr.f32.gmra.mrb[0].mxu0 %v2009
  %v2977 = vpop.f32.mrb[0].mxu0
  %v2978 = vadd.f32 %v2833, %v2977
  %v2979 = vpop.f32.mrb[0].mxu0
  %2980 = vmatprep.mubr.f32.mxu0 %v2023
  %2981 = vmatmul.mubr.f32.gmra.mrb[0].mxu0 %v2022
  %v2982 = vpop.f32.mrb[0].mxu0
  %v2983 = vadd.f32 %v2838, %v2982
  %v2984 = vpop.f32.mrb[0].mxu0
  %2985 = vmatprep.mubr.f32.mxu0 %v2036
  %2986 = vmatmul.mubr.f32.gmra.mrb[0].mxu0 %v2035
  %v2987 = vpop.f32.mrb[0].mxu0
  %v2988 = vadd.f32 %v2843, %v2987
  %v2989 = vpop.f32.mrb[0].mxu0
  %2990 = vmatprep.mubr.f32.mxu0 %v2049
  %2991 = vmatmul.mubr.f32.gmra.mrb[0].mxu0 %v2048
  %v2992 = vpop.f32.mrb[0].mxu0
  %v2993 = vadd.f32 %v2848, %v2992
  %v2994 = vpop.f32.mrb[0].mxu0
  %2995 = vmatprep.mubr.f32.mxu0 %v2062
  %2996 = vmatmul.mubr.f32.gmra.mrb[0].mxu0 %v2061
  %v2997 = vpop.f32.mrb[0].mxu0
  %v2998 = vadd.f32 %v2853, %v2997
  %v2999 = vpop.f32.mrb[0].mxu0
  %3000 = vmatprep.mubr.f32.mxu0 %v2075
  %3001 = vmatmul.mubr.f32.gmra.mrb[0].mxu0 %v2074
  %v3002 = vpop.f32.mrb[0].mxu0
  %v3003 = vadd.f32 %v2858, %v3002
  %v3004 = vpop.f32.mrb[0].mxu0
  %3005 = vdwg.mxu0
  %3006 = vmatprep.subr.mxu0 0.0
  %3007 = vmatpush1.msra.mxu0 %v2209
  %3008 = vmatprep.subr.mxu0 0.0
  %3009 = vmatpush1.msra.mxu0 %v2210
  %3010 = vmatprep.subr.mxu0 0.0
  %3011 = vmatpush1.msra.mxu0 %v2211
  %3012 = vmatprep.subr.mxu0 0.0
  %3013 = vmatpush1.msra.mxu0 %v2212
  %3014 = vmatprep.subr.mxu0 0.0
  %3015 = vmatpush1.msra.mxu0 %v2213
  %3016 = vmatprep.subr.mxu0 0.0
  %3017 = vmatpush1.msra.mxu0 %v2214
  %3018 = vmatprep.subr.mxu0 0.0
  %3019 = vmatpush1.msra.mxu0 %v2215
  %3020 = vmatprep.subr.mxu0 0.0
  %3021 = vmatpush1.msra.mxu0 %v2216
  %3022 = vmatprep.subr.mxu0 0.0
  %3023 = vmatpush1.msra.mxu0 %v2217
  %3024 = vmatprep.subr.mxu0 0.0
  %3025 = vmatpush1.msra.mxu0 %v2218
  %3026 = vmatprep.subr.mxu0 0.0
  %3027 = vmatpush1.msra.mxu0 %v2219
  %3028 = vmatprep.subr.mxu0 0.0
  %3029 = vmatpush1.msra.mxu0 %v2220
  %3030 = vmatprep.subr.mxu0 0.0
  %3031 = vmatpush1.msra.mxu0 %v2221
  %3032 = vmatprep.subr.mxu0 0.0
  %3033 = vmatpush1.msra.mxu0 %v2222
  %3034 = vmatprep.subr.mxu0 0.0
  %3035 = vmatpush1.msra.mxu0 %v2223
  %3036 = vmatprep.subr.mxu0 0.0
  %3037 = vmatpush1.msra.mxu0 %v2224
  %3038 = vmatprep.subr.mxu0 0.0
  %3039 = vmatpush1.msra.mxu0 %v2225
  %3040 = vmatprep.subr.mxu0 0.0
  %3041 = vmatpush1.msra.mxu0 %v2226
  %3042 = vmatprep.subr.mxu0 0.0
  %3043 = vmatpush1.msra.mxu0 %v2227
  %3044 = vmatprep.subr.mxu0 0.0
  %3045 = vmatpush1.msra.mxu0 %v2228
  %3046 = vmatprep.subr.mxu0 0.0
  %3047 = vmatpush1.msra.mxu0 %v2229
  %3048 = vmatprep.subr.mxu0 0.0
  %3049 = vmatpush1.msra.mxu0 %v2230
  %3050 = vmatprep.subr.mxu0 0.0
  %3051 = vmatpush1.msra.mxu0 %v2231
  %3052 = vmatprep.subr.mxu0 0.0
  %3053 = vmatpush1.msra.mxu0 %v2232
  %3054 = vmatprep.subr.mxu0 0.0
  %3055 = vmatpush1.msra.mxu0 %v2233
  %3056 = vmatprep.subr.mxu0 0.0
  %3057 = vmatpush1.msra.mxu0 %v2234
  %3058 = vmatprep.subr.mxu0 0.0
  %3059 = vmatpush1.msra.mxu0 %v2235
  %3060 = vmatprep.subr.mxu0 0.0
  %3061 = vmatpush1.msra.mxu0 %v2236
  %3062 = vmatprep.subr.mxu0 0.0
  %3063 = vmatpush1.msra.mxu0 %v2237
  %3064 = vmatprep.subr.mxu0 0.0
  %3065 = vmatpush1.msra.mxu0 %v2238
  %3066 = vmatprep.subr.mxu0 0.0
  %3067 = vmatpush1.msra.mxu0 %v2239
  %3068 = vmatprep.subr.mxu0 0.0
  %3069 = vmatpush1.msra.mxu0 %v2240
  %3070 = vmatprep.mubr.f32.mxu0 %v1882
  %3071 = vmatmul.mubr.f32.gmra.mrb[0].mxu0 %v1881
  %v3072 = vpop.f32.mrb[0].mxu0
  %v3073 = vadd.f32 %v2928, %v3072
  %v3074 = vpop.f32.mrb[0].mxu0
  %3075 = vmatprep.mubr.f32.mxu0 %v1895
  %3076 = vmatmul.mubr.f32.gmra.mrb[0].mxu0 %v1894
  %v3077 = vpop.f32.mrb[0].mxu0
  %v3078 = vadd.f32 %v2933, %v3077
  %v3079 = vpop.f32.mrb[0].mxu0
  %3080 = vmatprep.mubr.f32.mxu0 %v1908
  %3081 = vmatmul.mubr.f32.gmra.mrb[0].mxu0 %v1907
  %v3082 = vpop.f32.mrb[0].mxu0
  %v3083 = vadd.f32 %v2938, %v3082
  %v3084 = vpop.f32.mrb[0].mxu0
  %3085 = vmatprep.mubr.f32.mxu0 %v1921
  %3086 = vmatmul.mubr.f32.gmra.mrb[0].mxu0 %v1920
  %v3087 = vpop.f32.mrb[0].mxu0
  %v3088 = vadd.f32 %v2943, %v3087
  %v3089 = vpop.f32.mrb[0].mxu0
  %3090 = vmatprep.mubr.f32.mxu0 %v1934
  %3091 = vmatmul.mubr.f32.gmra.mrb[0].mxu0 %v1933
  %v3092 = vpop.f32.mrb[0].mxu0
  %v3093 = vadd.f32 %v2948, %v3092
  %v3094 = vpop.f32.mrb[0].mxu0
  %3095 = vmatprep.mubr.f32.mxu0 %v1947
  %3096 = vmatmul.mubr.f32.gmra.mrb[0].mxu0 %v1946
  %v3097 = vpop.f32.mrb[0].mxu0
  %v3098 = vadd.f32 %v2953, %v3097
  %v3099 = vpop.f32.mrb[0].mxu0
  %3100 = vmatprep.mubr.f32.mxu0 %v1960
  %3101 = vmatmul.mubr.f32.gmra.mrb[0].mxu0 %v1959
  %v3102 = vpop.f32.mrb[0].mxu0
  %v3103 = vadd.f32 %v2958, %v3102
  %v3104 = vpop.f32.mrb[0].mxu0
  %3105 = vmatprep.mubr.f32.mxu0 %v1973
  %3106 = vmatmul.mubr.f32.gmra.mrb[0].mxu0 %v1972
  %v3107 = vpop.f32.mrb[0].mxu0
  %v3108 = vadd.f32 %v2963, %v3107
  %v3109 = vpop.f32.mrb[0].mxu0
  %3110 = vmatprep.mubr.f32.mxu0 %v1986
  %3111 = vmatmul.mubr.f32.gmra.mrb[0].mxu0 %v1985
  %v3112 = vpop.f32.mrb[0].mxu0
  %v3113 = vadd.f32 %v2968, %v3112
  %v3114 = vpop.f32.mrb[0].mxu0
  %3115 = vmatprep.mubr.f32.mxu0 %v1999
  %3116 = vmatmul.mubr.f32.gmra.mrb[0].mxu0 %v1998
  %v3117 = vpop.f32.mrb[0].mxu0
  %v3118 = vadd.f32 %v2973, %v3117
  %v3119 = vpop.f32.mrb[0].mxu0
  %3120 = vmatprep.mubr.f32.mxu0 %v2012
  %3121 = vmatmul.mubr.f32.gmra.mrb[0].mxu0 %v2011
  %v3122 = vpop.f32.mrb[0].mxu0
  %v3123 = vadd.f32 %v2978, %v3122
  %v3124 = vpop.f32.mrb[0].mxu0
  %3125 = vmatprep.mubr.f32.mxu0 %v2025
  %3126 = vmatmul.mubr.f32.gmra.mrb[0].mxu0 %v2024
  %v3127 = vpop.f32.mrb[0].mxu0
  %v3128 = vadd.f32 %v2983, %v3127
  %v3129 = vpop.f32.mrb[0].mxu0
  %3130 = vmatprep.mubr.f32.mxu0 %v2038
  %3131 = vmatmul.mubr.f32.gmra.mrb[0].mxu0 %v2037
  %v3132 = vpop.f32.mrb[0].mxu0
  %v3133 = vadd.f32 %v2988, %v3132
  %v3134 = vpop.f32.mrb[0].mxu0
  %3135 = vmatprep.mubr.f32.mxu0 %v2051
  %3136 = vmatmul.mubr.f32.gmra.mrb[0].mxu0 %v2050
  %v3137 = vpop.f32.mrb[0].mxu0
  %v3138 = vadd.f32 %v2993, %v3137
  %v3139 = vpop.f32.mrb[0].mxu0
  %3140 = vmatprep.mubr.f32.mxu0 %v2064
  %3141 = vmatmul.mubr.f32.gmra.mrb[0].mxu0 %v2063
  %v3142 = vpop.f32.mrb[0].mxu0
  %v3143 = vadd.f32 %v2998, %v3142
  %v3144 = vpop.f32.mrb[0].mxu0
  %3145 = vmatprep.mubr.f32.mxu0 %v2077
  %3146 = vmatmul.mubr.f32.gmra.mrb[0].mxu0 %v2076
  %v3147 = vpop.f32.mrb[0].mxu0
  %v3148 = vadd.f32 %v3003, %v3147
  %v3149 = vpop.f32.mrb[0].mxu0
  %3150 = vdwg.mxu0
  %3151 = vmatprep.subr.mxu0 0.0
  %3152 = vmatpush1.msra.mxu0 %v2241
  %3153 = vmatprep.subr.mxu0 0.0
  %3154 = vmatpush1.msra.mxu0 %v2242
  %3155 = vmatprep.subr.mxu0 0.0
  %3156 = vmatpush1.msra.mxu0 %v2243
  %3157 = vmatprep.subr.mxu0 0.0
  %3158 = vmatpush1.msra.mxu0 %v2244
  %3159 = vmatprep.subr.mxu0 0.0
  %3160 = vmatpush1.msra.mxu0 %v2245
  %3161 = vmatprep.subr.mxu0 0.0
  %3162 = vmatpush1.msra.mxu0 %v2246
  %3163 = vmatprep.subr.mxu0 0.0
  %3164 = vmatpush1.msra.mxu0 %v2247
  %3165 = vmatprep.subr.mxu0 0.0
  %3166 = vmatpush1.msra.mxu0 %v2248
  %3167 = vmatprep.subr.mxu0 0.0
  %3168 = vmatpush1.msra.mxu0 %v2249
  %3169 = vmatprep.subr.mxu0 0.0
  %3170 = vmatpush1.msra.mxu0 %v2250
  %3171 = vmatprep.subr.mxu0 0.0
  %3172 = vmatpush1.msra.mxu0 %v2251
  %3173 = vmatprep.subr.mxu0 0.0
  %3174 = vmatpush1.msra.mxu0 %v2252
  %3175 = vmatprep.subr.mxu0 0.0
  %3176 = vmatpush1.msra.mxu0 %v2253
  %3177 = vmatprep.subr.mxu0 0.0
  %3178 = vmatpush1.msra.mxu0 %v2254
  %3179 = vmatprep.subr.mxu0 0.0
  %3180 = vmatpush1.msra.mxu0 %v2255
  %3181 = vmatprep.subr.mxu0 0.0
  %3182 = vmatpush1.msra.mxu0 %v2256
  %3183 = vmatprep.subr.mxu0 0.0
  %3184 = vmatpush1.msra.mxu0 %v2257
  %3185 = vmatprep.subr.mxu0 0.0
  %3186 = vmatpush1.msra.mxu0 %v2258
  %3187 = vmatprep.subr.mxu0 0.0
  %3188 = vmatpush1.msra.mxu0 %v2259
  %3189 = vmatprep.subr.mxu0 0.0
  %3190 = vmatpush1.msra.mxu0 %v2260
  %3191 = vmatprep.subr.mxu0 0.0
  %3192 = vmatpush1.msra.mxu0 %v2261
  %3193 = vmatprep.subr.mxu0 0.0
  %3194 = vmatpush1.msra.mxu0 %v2262
  %3195 = vmatprep.subr.mxu0 0.0
  %3196 = vmatpush1.msra.mxu0 %v2263
  %3197 = vmatprep.subr.mxu0 0.0
  %3198 = vmatpush1.msra.mxu0 %v2264
  %3199 = vmatprep.subr.mxu0 0.0
  %3200 = vmatpush1.msra.mxu0 %v2265
  %3201 = vmatprep.subr.mxu0 0.0
  %3202 = vmatpush1.msra.mxu0 %v2266
  %3203 = vmatprep.subr.mxu0 0.0
  %3204 = vmatpush1.msra.mxu0 %v2267
  %3205 = vmatprep.subr.mxu0 0.0
  %3206 = vmatpush1.msra.mxu0 %v2268
  %3207 = vmatprep.subr.mxu0 0.0
  %3208 = vmatpush1.msra.mxu0 %v2269
  %3209 = vmatprep.subr.mxu0 0.0
  %3210 = vmatpush1.msra.mxu0 %v2270
  %3211 = vmatprep.subr.mxu0 0.0
  %3212 = vmatpush1.msra.mxu0 %v2271
  %3213 = vmatprep.subr.mxu0 0.0
  %3214 = vmatpush1.msra.mxu0 %v2272
  %3215 = vmatprep.mubr.f32.mxu0 %v1884
  %3216 = vmatmul.mubr.f32.gmra.mrb[0].mxu0 %v1883
  %v3217 = vpop.f32.mrb[0].mxu0
  %v3218 = vadd.f32 %v3073, %v3217
  %v3219 = vpop.f32.mrb[0].mxu0
  %3220 = vmatprep.mubr.f32.mxu0 %v1897
  %3221 = vmatmul.mubr.f32.gmra.mrb[0].mxu0 %v1896
  %v3222 = vpop.f32.mrb[0].mxu0
  %v3223 = vadd.f32 %v3078, %v3222
  %v3224 = vpop.f32.mrb[0].mxu0
  %3225 = vmatprep.mubr.f32.mxu0 %v1910
  %3226 = vmatmul.mubr.f32.gmra.mrb[0].mxu0 %v1909
  %v3227 = vpop.f32.mrb[0].mxu0
  %v3228 = vadd.f32 %v3083, %v3227
  %v3229 = vpop.f32.mrb[0].mxu0
  %3230 = vmatprep.mubr.f32.mxu0 %v1923
  %3231 = vmatmul.mubr.f32.gmra.mrb[0].mxu0 %v1922
  %v3232 = vpop.f32.mrb[0].mxu0
  %v3233 = vadd.f32 %v3088, %v3232
  %v3234 = vpop.f32.mrb[0].mxu0
  %3235 = vmatprep.mubr.f32.mxu0 %v1936
  %3236 = vmatmul.mubr.f32.gmra.mrb[0].mxu0 %v1935
  %v3237 = vpop.f32.mrb[0].mxu0
  %v3238 = vadd.f32 %v3093, %v3237
  %v3239 = vpop.f32.mrb[0].mxu0
  %3240 = vmatprep.mubr.f32.mxu0 %v1949
  %3241 = vmatmul.mubr.f32.gmra.mrb[0].mxu0 %v1948
  %v3242 = vpop.f32.mrb[0].mxu0
  %v3243 = vadd.f32 %v3098, %v3242
  %v3244 = vpop.f32.mrb[0].mxu0
  %3245 = vmatprep.mubr.f32.mxu0 %v1962
  %3246 = vmatmul.mubr.f32.gmra.mrb[0].mxu0 %v1961
  %v3247 = vpop.f32.mrb[0].mxu0
  %v3248 = vadd.f32 %v3103, %v3247
  %v3249 = vpop.f32.mrb[0].mxu0
  %3250 = vmatprep.mubr.f32.mxu0 %v1975
  %3251 = vmatmul.mubr.f32.gmra.mrb[0].mxu0 %v1974
  %v3252 = vpop.f32.mrb[0].mxu0
  %v3253 = vadd.f32 %v3108, %v3252
  %v3254 = vpop.f32.mrb[0].mxu0
  %3255 = vmatprep.mubr.f32.mxu0 %v1988
  %3256 = vmatmul.mubr.f32.gmra.mrb[0].mxu0 %v1987
  %v3257 = vpop.f32.mrb[0].mxu0
  %v3258 = vadd.f32 %v3113, %v3257
  %v3259 = vpop.f32.mrb[0].mxu0
  %3260 = vmatprep.mubr.f32.mxu0 %v2001
  %3261 = vmatmul.mubr.f32.gmra.mrb[0].mxu0 %v2000
  %v3262 = vpop.f32.mrb[0].mxu0
  %v3263 = vadd.f32 %v3118, %v3262
  %v3264 = vpop.f32.mrb[0].mxu0
  %3265 = vmatprep.mubr.f32.mxu0 %v2014
  %3266 = vmatmul.mubr.f32.gmra.mrb[0].mxu0 %v2013
  %v3267 = vpop.f32.mrb[0].mxu0
  %v3268 = vadd.f32 %v3123, %v3267
  %v3269 = vpop.f32.mrb[0].mxu0
  %3270 = vmatprep.mubr.f32.mxu0 %v2027
  %3271 = vmatmul.mubr.f32.gmra.mrb[0].mxu0 %v2026
  %v3272 = vpop.f32.mrb[0].mxu0
  %v3273 = vadd.f32 %v3128, %v3272
  %v3274 = vpop.f32.mrb[0].mxu0
  %3275 = vmatprep.mubr.f32.mxu0 %v2040
  %3276 = vmatmul.mubr.f32.gmra.mrb[0].mxu0 %v2039
  %v3277 = vpop.f32.mrb[0].mxu0
  %v3278 = vadd.f32 %v3133, %v3277
  %v3279 = vpop.f32.mrb[0].mxu0
  %3280 = vmatprep.mubr.f32.mxu0 %v2053
  %3281 = vmatmul.mubr.f32.gmra.mrb[0].mxu0 %v2052
  %v3282 = vpop.f32.mrb[0].mxu0
  %v3283 = vadd.f32 %v3138, %v3282
  %v3284 = vpop.f32.mrb[0].mxu0
  %3285 = vmatprep.mubr.f32.mxu0 %v2066
  %3286 = vmatmul.mubr.f32.gmra.mrb[0].mxu0 %v2065
  %v3287 = vpop.f32.mrb[0].mxu0
  %v3288 = vadd.f32 %v3143, %v3287
  %v3289 = vpop.f32.mrb[0].mxu0
  %3290 = vmatprep.mubr.f32.mxu0 %v2079
  %3291 = vmatmul.mubr.f32.gmra.mrb[0].mxu0 %v2078
  %v3292 = vpop.f32.mrb[0].mxu0
  %v3293 = vadd.f32 %v3148, %v3292
  %v3294 = vpop.f32.mrb[0].mxu0
  %3295 = vdwg.mxu0
  %3296 = vmatprep.subr.mxu0 0.0
  %3297 = vmatpush1.msra.mxu0 %v2273
  %3298 = vmatprep.subr.mxu0 0.0
  %3299 = vmatpush1.msra.mxu0 %v2274
  %3300 = vmatprep.subr.mxu0 0.0
  %3301 = vmatpush1.msra.mxu0 %v2275
  %3302 = vmatprep.subr.mxu0 0.0
  %3303 = vmatpush1.msra.mxu0 %v2276
  %3304 = vmatprep.subr.mxu0 0.0
  %3305 = vmatpush1.msra.mxu0 %v2277
  %3306 = vmatprep.subr.mxu0 0.0
  %3307 = vmatpush1.msra.mxu0 %v2278
  %3308 = vmatprep.subr.mxu0 0.0
  %3309 = vmatpush1.msra.mxu0 %v2279
  %3310 = vmatprep.subr.mxu0 0.0
  %3311 = vmatpush1.msra.mxu0 %v2280
  %3312 = vmatprep.subr.mxu0 0.0
  %3313 = vmatpush1.msra.mxu0 0.0
  %3314 = vmatprep.subr.mxu0 0.0
  %3315 = vmatpush1.msra.mxu0 0.0
  %3316 = vmatprep.subr.mxu0 0.0
  %3317 = vmatpush1.msra.mxu0 0.0
  %3318 = vmatprep.subr.mxu0 0.0
  %3319 = vmatpush1.msra.mxu0 0.0
  %3320 = vmatprep.subr.mxu0 0.0
  %3321 = vmatpush1.msra.mxu0 0.0
  %3322 = vmatprep.subr.mxu0 0.0
  %3323 = vmatpush1.msra.mxu0 0.0
  %3324 = vmatprep.subr.mxu0 0.0
  %3325 = vmatpush1.msra.mxu0 0.0
  %3326 = vmatprep.subr.mxu0 0.0
  %3327 = vmatpush1.msra.mxu0 0.0
  %3328 = vmatprep.subr.mxu0 0.0
  %3329 = vmatpush1.msra.mxu0 0.0
  %3330 = vmatprep.subr.mxu0 0.0
  %3331 = vmatpush1.msra.mxu0 0.0
  %3332 = vmatprep.subr.mxu0 0.0
  %3333 = vmatpush1.msra.mxu0 0.0
  %3334 = vmatprep.subr.mxu0 0.0
  %3335 = vmatpush1.msra.mxu0 0.0
  %3336 = vmatprep.subr.mxu0 0.0
  %3337 = vmatpush1.msra.mxu0 0.0
  %3338 = vmatprep.subr.mxu0 0.0
  %3339 = vmatpush1.msra.mxu0 0.0
  %3340 = vmatprep.subr.mxu0 0.0
  %3341 = vmatpush1.msra.mxu0 0.0
  %3342 = vmatprep.subr.mxu0 0.0
  %3343 = vmatpush1.msra.mxu0 0.0
  %3344 = vmatprep.subr.mxu0 0.0
  %3345 = vmatpush1.msra.mxu0 0.0
  %3346 = vmatprep.subr.mxu0 0.0
  %3347 = vmatpush1.msra.mxu0 0.0
  %3348 = vmatprep.subr.mxu0 0.0
  %3349 = vmatpush1.msra.mxu0 0.0
  %3350 = vmatprep.subr.mxu0 0.0
  %3351 = vmatpush1.msra.mxu0 0.0
  %3352 = vmatprep.subr.mxu0 0.0
  %3353 = vmatpush1.msra.mxu0 0.0
  %3354 = vmatprep.subr.mxu0 0.0
  %3355 = vmatpush1.msra.mxu0 0.0
  %3356 = vmatprep.subr.mxu0 0.0
  %3357 = vmatpush1.msra.mxu0 0.0
  %3358 = vmatprep.subr.mxu0 0.0
  %3359 = vmatpush1.msra.mxu0 0.0
  %3360 = vmatprep.mubr.f32.mxu0 0.0
  %3361 = vmatmul.mubr.f32.gmra.mrb[0].mxu0 %v2379
  %v3362 = vpop.f32.mrb[0].mxu0
  %v3363 = vadd.f32 %v3218, %v3362
  %v3364 = vpop.f32.mrb[0].mxu0
  %3365 = vmatprep.mubr.f32.mxu0 0.0
  %3366 = vmatmul.mubr.f32.gmra.mrb[0].mxu0 %v2382
  %v3367 = vpop.f32.mrb[0].mxu0
  %v3368 = vadd.f32 %v3223, %v3367
  %v3369 = vpop.f32.mrb[0].mxu0
  %3370 = vmatprep.mubr.f32.mxu0 0.0
  %3371 = vmatmul.mubr.f32.gmra.mrb[0].mxu0 %v2385
  %v3372 = vpop.f32.mrb[0].mxu0
  %v3373 = vadd.f32 %v3228, %v3372
  %v3374 = vpop.f32.mrb[0].mxu0
  %3375 = vmatprep.mubr.f32.mxu0 0.0
  %3376 = vmatmul.mubr.f32.gmra.mrb[0].mxu0 %v2388
  %v3377 = vpop.f32.mrb[0].mxu0
  %v3378 = vadd.f32 %v3233, %v3377
  %v3379 = vpop.f32.mrb[0].mxu0
  %3380 = vmatprep.mubr.f32.mxu0 0.0
  %3381 = vmatmul.mubr.f32.gmra.mrb[0].mxu0 %v2391
  %v3382 = vpop.f32.mrb[0].mxu0
  %v3383 = vadd.f32 %v3238, %v3382
  %v3384 = vpop.f32.mrb[0].mxu0
  %3385 = vmatprep.mubr.f32.mxu0 0.0
  %3386 = vmatmul.mubr.f32.gmra.mrb[0].mxu0 %v2394
  %v3387 = vpop.f32.mrb[0].mxu0
  %v3388 = vadd.f32 %v3243, %v3387
  %v3389 = vpop.f32.mrb[0].mxu0
  %3390 = vmatprep.mubr.f32.mxu0 0.0
  %3391 = vmatmul.mubr.f32.gmra.mrb[0].mxu0 %v2397
  %v3392 = vpop.f32.mrb[0].mxu0
  %v3393 = vadd.f32 %v3248, %v3392
  %v3394 = vpop.f32.mrb[0].mxu0
  %3395 = vmatprep.mubr.f32.mxu0 0.0
  %3396 = vmatmul.mubr.f32.gmra.mrb[0].mxu0 %v2400
  %v3397 = vpop.f32.mrb[0].mxu0
  %v3398 = vadd.f32 %v3253, %v3397
  %v3399 = vpop.f32.mrb[0].mxu0
  %3400 = vmatprep.mubr.f32.mxu0 0.0
  %3401 = vmatmul.mubr.f32.gmra.mrb[0].mxu0 %v2403
  %v3402 = vpop.f32.mrb[0].mxu0
  %v3403 = vadd.f32 %v3258, %v3402
  %v3404 = vpop.f32.mrb[0].mxu0
  %3405 = vmatprep.mubr.f32.mxu0 0.0
  %3406 = vmatmul.mubr.f32.gmra.mrb[0].mxu0 %v2406
  %v3407 = vpop.f32.mrb[0].mxu0
  %v3408 = vadd.f32 %v3263, %v3407
  %v3409 = vpop.f32.mrb[0].mxu0
  %3410 = vmatprep.mubr.f32.mxu0 0.0
  %3411 = vmatmul.mubr.f32.gmra.mrb[0].mxu0 %v2409
  %v3412 = vpop.f32.mrb[0].mxu0
  %v3413 = vadd.f32 %v3268, %v3412
  %v3414 = vpop.f32.mrb[0].mxu0
  %3415 = vmatprep.mubr.f32.mxu0 0.0
  %3416 = vmatmul.mubr.f32.gmra.mrb[0].mxu0 %v2412
  %v3417 = vpop.f32.mrb[0].mxu0
  %v3418 = vadd.f32 %v3273, %v3417
  %v3419 = vpop.f32.mrb[0].mxu0
  %3420 = vmatprep.mubr.f32.mxu0 0.0
  %3421 = vmatmul.mubr.f32.gmra.mrb[0].mxu0 %v2415
  %v3422 = vpop.f32.mrb[0].mxu0
  %v3423 = vadd.f32 %v3278, %v3422
  %v3424 = vpop.f32.mrb[0].mxu0
  %3425 = vmatprep.mubr.f32.mxu0 0.0
  %3426 = vmatmul.mubr.f32.gmra.mrb[0].mxu0 %v2418
  %v3427 = vpop.f32.mrb[0].mxu0
  %v3428 = vadd.f32 %v3283, %v3427
  %v3429 = vpop.f32.mrb[0].mxu0
  %3430 = vmatprep.mubr.f32.mxu0 0.0
  %3431 = vmatmul.mubr.f32.gmra.mrb[0].mxu0 %v2421
  %v3432 = vpop.f32.mrb[0].mxu0
  %v3433 = vadd.f32 %v3288, %v3432
  %v3434 = vpop.f32.mrb[0].mxu0
  %3435 = vmatprep.mubr.f32.mxu0 0.0
  %3436 = vmatmul.mubr.f32.gmra.mrb[0].mxu0 %v2424
  %v3437 = vpop.f32.mrb[0].mxu0
  %v3438 = vadd.f32 %v3293, %v3437
  %v3439 = vpop.f32.mrb[0].mxu0
  %3440 = vdwg.mxu0
  %v3441 = vmax.f32 %v3363, 0.0
  %v3442 = vmax.f32 %v3368, 0.0
  %v3443 = vmax.f32 %v3373, 0.0
  %v3444 = vmax.f32 %v3378, 0.0
  %v3445 = vmax.f32 %v3383, 0.0
  %v3446 = vmax.f32 %v3388, 0.0
  %v3447 = vmax.f32 %v3393, 0.0
  %v3448 = vmax.f32 %v3398, 0.0
  %v3449 = vmax.f32 %v3403, 0.0
  %v3450 = vmax.f32 %v3408, 0.0
  %v3451 = vmax.f32 %v3413, 0.0
  %v3452 = vmax.f32 %v3418, 0.0
  %v3453 = vmax.f32 %v3423, 0.0
  %v3454 = vmax.f32 %v3428, 0.0
  %v3455 = vmax.f32 %v3433, 0.0
  %v3456 = vmax.f32 %v3438, 0.0
  %3457 = vst [vmem:[%s7] sm:$0xff] %v3441
  %3458 = vst [vmem:[%s7 + $0x8] sm:$0xff] %v3442
  %3459 = vst [vmem:[%s7 + $0x10] sm:$0xff] %v3443
  %3460 = vst [vmem:[%s7 + $0x18] sm:$0xff] %v3444
  %3461 = vst [vmem:[%s7 + $0x20] sm:$0xff] %v3445
  %3462 = vst [vmem:[%s7 + $0x28] sm:$0xff] %v3446
  %3463 = vst [vmem:[%s7 + $0x30] sm:$0xff] %v3447
  %3464 = vst [vmem:[%s7 + $0x38] sm:$0xff] %v3448
  %3465 = vst [vmem:[%s7 + $0x40] sm:$0xff] %v3449
  %3466 = vst [vmem:[%s7 + $0x48] sm:$0xff] %v3450
  %3467 = vst [vmem:[%s7 + $0x50] sm:$0xff] %v3451
  %3468 = vst [vmem:[%s7 + $0x58] sm:$0xff] %v3452
  %3469 = vst [vmem:[%s7 + $0x60] sm:$0xff] %v3453
  %3470 = vst [vmem:[%s7 + $0x68] sm:$0xff] %v3454
  %3471 = vst [vmem:[%s7 + $0x70] sm:$0xff] %v3455
  %3472 = vst [vmem:[%s7 + $0x78] sm:$0xff] %v3456
  // Predicated region
  $region30: #{cifar10_cnn_forward.1} parent=0 // pred_check
    _
  $region31: #{cifar10_cnn_forward.1} parent=0 // pred_check_branch
    %3474 = sbr.rel (0) target = $region33
  $region32: #{cifar10_cnn_forward.1} parent=0 // pred_region
    _
  $region33: #{cifar10_cnn_forward.1} parent=0 // pred_fallthru
    _
  // Predicated region
  $region34: #{cifar10_cnn_forward.1} parent=0 // pred_check
    _
  $region35: #{cifar10_cnn_forward.1} parent=0 // pred_check_branch
    %3476 = sbr.rel (0) target = $region37
  $region36: #{cifar10_cnn_forward.1} parent=0 // pred_region
    _
  $region37: #{cifar10_cnn_forward.1} parent=0 // pred_fallthru
    _

</llo_original>
